<compile_context>
chip_gen: v6e
topology: v6e:2x2x1
jax: 0.10.0
libtpu: 0.0.40
codegen_flags: <defaults>
</compile_context>

<pallas_src>
import functools

import jax
import jax.numpy as jnp
from jax.experimental import pallas as pl
from jax.experimental.pallas import tpu as pltpu

LANE = 128
SUBLANE = 8


def _round_up(n, m):
    return ((n + m - 1) // m) * m


# ----------------------------------------------------------------------------
# Kernel
# ----------------------------------------------------------------------------
def tabnet_kernel(x_ref,
                  i1wa_ref, i1wg_ref, i1ba_ref, i1bg_ref,
                  i2wa_ref, i2wg_ref, i2ba_ref, i2bg_ref,
                  aw_ref, ab_ref, gam_ref, bet_ref,
                  t1wa_ref, t1wg_ref, t1ba_ref, t1bg_ref,
                  t2wa_ref, t2wg_ref, t2ba_ref, t2bg_ref,
                  fw_ref, fb_ref,
                  out_ref,
                  xt_scr, prior_scr, agg_scr,
                  *, b_real, d_real, bn_eps, approx_recip):
    step = pl.program_id(0)
    last = pl.num_programs(0) - 1

    def glu(h_f32, wa, wg, ba, bg):
        # Split-GLU: two lane-dense (B, H_pad) dots, no mid-vreg lane slice.
        h = h_f32.astype(jnp.bfloat16)
        va = jnp.dot(h, wa, preferred_element_type=jnp.float32) + ba
        vg = jnp.dot(h, wg, preferred_element_type=jnp.float32) + bg
        return va * jax.nn.sigmoid(vg)

    # ---- step 0: initial FeatureTransformer + state init ----
    @pl.when(step == 0)
    def _init():
        x_raw = x_ref[...]
        h = glu(x_raw, i1wa_ref[...], i1wg_ref[...],
                i1ba_ref[...], i1bg_ref[...])
        xt_scr[...] = glu(h, i2wa_ref[...], i2wg_ref[...],
                          i2ba_ref[...], i2bg_ref[...])
        prior_scr[...] = jnp.full_like(prior_scr, 1.0)
        agg_scr[...] = jnp.zeros_like(agg_scr)

    # ---- AttentiveTransformer: Linear -> BatchNorm1d -> softmax(x * prior) --
    a = jnp.dot(xt_scr[...].astype(jnp.bfloat16), aw_ref[0],
                preferred_element_type=jnp.float32) + ab_ref[0]   # (Bp, Dp) f32
    b_pad, d_pad = a.shape

    # BatchNorm over the REAL batch rows only (padded rows masked out).
    row = jax.lax.broadcasted_iota(jnp.int32, (b_pad, 1), 0)
    rmask = (row < b_real).astype(jnp.float32)
    inv_n = 1.0 / float(b_real)
    mean = jnp.sum(a * rmask, axis=0, keepdims=True) * inv_n
    cen = (a - mean) * rmask
    var = jnp.sum(cen * cen, axis=0, keepdims=True) * inv_n          # biased
    a_bn = (a - mean) * jax.lax.rsqrt(var + bn_eps) * gam_ref[0] + bet_ref[0]

    # Softmax over the REAL feature lanes only (padded lanes -> -1e30).
    col = jax.lax.broadcasted_iota(jnp.int32, (1, d_pad), 1)
    feat_ok = col < d_real
    z = jnp.where(feat_ok, a_bn * prior_scr[...], -1e30)
    z = z - jnp.max(z, axis=-1, keepdims=True)
    ez = jnp.exp(z)
    denom = jnp.sum(ez, axis=-1, keepdims=True)
    if approx_recip:
        mask = ez * pl.reciprocal(denom, approx=True)   # EUP slot, ~free
    else:
        mask = ez / denom

    # ---- step FeatureTransformer on masked raw input ----
    x_masked = x_ref[...] * mask
    h1 = glu(x_masked, t1wa_ref[0], t1wg_ref[0], t1ba_ref[0], t1bg_ref[0])
    step_out = glu(h1, t2wa_ref[0], t2wg_ref[0], t2ba_ref[0], t2bg_ref[0])

    agg_scr[...] = agg_scr[...] + step_out
    prior_scr[...] = prior_scr[...] * (1.0 - mask)

    # ---- final classifier + log_softmax (padded class lanes carry -1e9 bias)
    @pl.when(step == last)
    def _final():
        logits = jnp.dot(agg_scr[...].astype(jnp.bfloat16), fw_ref[...],
                         preferred_element_type=jnp.float32) + fb_ref[...]
        m = jnp.max(logits, axis=-1, keepdims=True)
        lse = m + jnp.log(jnp.sum(jnp.exp(logits - m), axis=-1, keepdims=True))
        out_ref[...] = (logits - lse).astype(out_ref.dtype)


# ----------------------------------------------------------------------------
# Wrapper: pad/split/cast params, build BlockSpecs, call pallas_call
# ----------------------------------------------------------------------------
def _prepare_inputs(x, p, *, input_dim, hidden_dim, num_classes):
    D, H, C = input_dim, hidden_dim, num_classes
    Dp = _round_up(D, LANE)
    Hp = _round_up(H, LANE)
    Cp = _round_up(C, LANE)
    B = x.shape[0]
    Bp = _round_up(B, SUBLANE)

    wdt = jnp.bfloat16   # MXU-native input dtype; accumulation stays f32

    def pad_w(w, rp, cp):                       # (r, c) -> (rp, cp) bf16
        return jnp.pad(w, ((0, rp - w.shape[0]), (0, cp - w.shape[1]))).astype(wdt)

    def pad_b(b, cp, fill=0.0):                 # (c,) -> (1, cp) f32
        return jnp.pad(b.reshape(1, -1), ((0, 0), (0, cp - b.shape[0])),
                       constant_values=fill).astype(jnp.float32)

    def pad_sw(w, rp, cp):                      # (S, r, c) -> (S, rp, cp) bf16
        return jnp.pad(w, ((0, 0), (0, rp - w.shape[1]),
                           (0, cp - w.shape[2]))).astype(wdt)

    def pad_sb(b, cp, fill=0.0):                # (S, c) -> (S, 1, cp) f32
        return jnp.pad(b[:, None, :], ((0, 0), (0, 0), (0, cp - b.shape[1])),
                       constant_values=fill).astype(jnp.float32)

    xp = jnp.pad(x.astype(jnp.float32), ((0, Bp - B), (0, Dp - D)))

    a = {}
    # initial FeatureTransformer (GLU split: cols [:H] = value, [H:] = gate)
    a["i1wa"] = pad_w(p["i1w"][:, :H], Dp, Hp)
    a["i1wg"] = pad_w(p["i1w"][:, H:], Dp, Hp)
    a["i1ba"] = pad_b(p["i1b"][:H], Hp)
    a["i1bg"] = pad_b(p["i1b"][H:], Hp)
    a["i2wa"] = pad_w(p["i2w"][:, :H], Hp, Hp)
    a["i2wg"] = pad_w(p["i2w"][:, H:], Hp, Hp)
    a["i2ba"] = pad_b(p["i2b"][:H], Hp)
    a["i2bg"] = pad_b(p["i2b"][H:], Hp)
    # per-step weights (stacked on leading n_steps axis, streamed by the grid)
    a["aw"] = pad_sw(p["aw"], Hp, Dp)
    a["ab"] = pad_sb(p["ab"], Dp)
    a["gam"] = pad_sb(p["gam"], Dp, fill=1.0)
    a["bet"] = pad_sb(p["bet"], Dp)
    a["t1wa"] = pad_sw(p["t1w"][:, :, :H], Dp, Hp)
    a["t1wg"] = pad_sw(p["t1w"][:, :, H:], Dp, Hp)
    a["t1ba"] = pad_sb(p["t1b"][:, :H], Hp)
    a["t1bg"] = pad_sb(p["t1b"][:, H:], Hp)
    a["t2wa"] = pad_sw(p["t2w"][:, :, :H], Hp, Hp)
    a["t2wg"] = pad_sw(p["t2w"][:, :, H:], Hp, Hp)
    a["t2ba"] = pad_sb(p["t2b"][:, :H], Hp)
    a["t2bg"] = pad_sb(p["t2b"][:, H:], Hp)
    # final classifier; padded class lanes get a huge negative bias so they
    # never contribute to the in-kernel log-softmax.
    a["fw"] = pad_w(p["fw"], Hp, Cp)
    a["fb"] = pad_b(p["fb"], Cp, fill=-1e9)
    return xp, a, (B, Bp, D, Dp, H, Hp, C, Cp)


def _resident_spec(arr):
    zeros = (0,) * arr.ndim
    return pl.BlockSpec(arr.shape, lambda s: zeros)


def _per_step_spec(arr):
    tail = arr.shape[1:]
    zeros = (0,) * len(tail)
    return pl.BlockSpec((1,) + tail, lambda s: (s,) + zeros)


_ARG_ORDER = ("i1wa", "i1wg", "i1ba", "i1bg",
              "i2wa", "i2wg", "i2ba", "i2bg",
              "aw", "ab", "gam", "bet",
              "t1wa", "t1wg", "t1ba", "t1bg",
              "t2wa", "t2wg", "t2ba", "t2bg",
              "fw", "fb")


def tabnet_forward(x, params, *, input_dim, hidden_dim, num_classes, n_steps,
                   bn_eps=1e-5, approx_recip=True):
    xp, a, (B, Bp, D, Dp, H, Hp, C, Cp) = _prepare_inputs(
        x, params, input_dim=input_dim, hidden_dim=hidden_dim,
        num_classes=num_classes)

    args = (xp,) + tuple(a[k] for k in _ARG_ORDER)
    in_specs = [_resident_spec(xp)]
    for k in _ARG_ORDER:
        arr = a[k]
        in_specs.append(_per_step_spec(arr) if arr.ndim == 3
                        else _resident_spec(arr))

    kernel = functools.partial(tabnet_kernel,
                               b_real=B, d_real=D,
                               bn_eps=bn_eps, approx_recip=approx_recip)

    grid_spec = pltpu.PrefetchScalarGridSpec(
        num_scalar_prefetch=0,
        grid=(n_steps,),
        in_specs=in_specs,
        out_specs=pl.BlockSpec((Bp, Cp), lambda s: (0, 0)),
        scratch_shapes=[pltpu.VMEM((Bp, Hp), jnp.float32),   # x_transformed
                        pltpu.VMEM((Bp, Dp), jnp.float32),   # prior
                        pltpu.VMEM((Bp, Hp), jnp.float32)])  # out_agg

    out_padded = pl.pallas_call(
        kernel,
        out_shape=jax.ShapeDtypeStruct((Bp, Cp), jnp.float32),
        grid_spec=grid_spec,
        compiler_params=pltpu.CompilerParams(
            dimension_semantics=("arbitrary",),
            vmem_limit_bytes=32 * 1024 * 1024),
    )(*args)

    return out_padded[:B, :C]


# ----------------------------------------------------------------------------
# Parameter init (PyTorch nn.Linear style) and pure-JAX reference
# ----------------------------------------------------------------------------
def init_params(key, input_dim, hidden_dim, num_classes, n_steps):
    """U(-1/sqrt(fan_in), 1/sqrt(fan_in)) for Linear; BN gamma=1, beta=0."""
    keys = iter(jax.random.split(key, 6 + 6 * n_steps))

    def lin(fan_in, fan_out):
        k = 1.0 / jnp.sqrt(jnp.float32(fan_in))
        w = jax.random.uniform(next(keys), (fan_in, fan_out), jnp.float32, -k, k)
        b = jax.random.uniform(next(keys), (fan_out,), jnp.float32, -k, k)
        return w, b

    p = {}
    p["i1w"], p["i1b"] = lin(input_dim, 2 * hidden_dim)
    p["i2w"], p["i2b"] = lin(hidden_dim, 2 * hidden_dim)

    aw, ab, t1w, t1b, t2w, t2b = [], [], [], [], [], []
    for _ in range(n_steps):
        w, b = lin(hidden_dim, input_dim); aw.append(w); ab.append(b)
        w, b = lin(input_dim, 2 * hidden_dim); t1w.append(w); t1b.append(b)
        w, b = lin(hidden_dim, 2 * hidden_dim); t2w.append(w); t2b.append(b)
    p["aw"] = jnp.stack(aw); p["ab"] = jnp.stack(ab)
    p["gam"] = jnp.ones((n_steps, input_dim), jnp.float32)
    p["bet"] = jnp.zeros((n_steps, input_dim), jnp.float32)
    p["t1w"] = jnp.stack(t1w); p["t1b"] = jnp.stack(t1b)
    p["t2w"] = jnp.stack(t2w); p["t2b"] = jnp.stack(t2b)

    p["fw"], p["fb"] = lin(hidden_dim, num_classes)
    return p


def tabnet_reference(x, p, *, hidden_dim, n_steps, matmul_dtype=jnp.float32):
    """Pure-JAX reference of the PyTorch forward pass.

    matmul_dtype=bfloat16 mirrors the kernel's precision policy (bf16 matmul
    inputs, f32 accumulation / elementwise math) for tight validation.
    """
    def mm(h, w):
        return jnp.dot(h.astype(matmul_dtype), w.astype(matmul_dtype),
                       preferred_element_type=jnp.float32)

    def glu(h, w, b):
        pr = mm(h, w) + b
        return pr[:, :hidden_dim] * jax.nn.sigmoid(pr[:, hidden_dim:])

    x_raw = x.astype(jnp.float32)
    x_t = glu(glu(x_raw, p["i1w"], p["i1b"]), p["i2w"], p["i2b"])
    prior = jnp.ones_like(x_raw)
    out_agg = jnp.zeros((x.shape[0], hidden_dim), jnp.float32)
    for s in range(n_steps):
        a = mm(x_t, p["aw"][s]) + p["ab"][s]
        mean = a.mean(axis=0)
        var = ((a - mean) ** 2).mean(axis=0)
        a_bn = (a - mean) / jnp.sqrt(var + 1e-5) * p["gam"][s] + p["bet"][s]
        mask = jax.nn.softmax(a_bn * prior, axis=-1)
        x_masked = x_raw * mask
        step_out = glu(glu(x_masked, p["t1w"][s], p["t1b"][s]),
                       p["t2w"][s], p["t2b"][s])
        out_agg = out_agg + step_out
        prior = prior * (1.0 - mask)
    logits = mm(out_agg, p["fw"]) + p["fb"]
    return jax.nn.log_softmax(logits, axis=-1)


# ----------------------------------------------------------------------------
if __name__ == "__main__":
    # Batch of 128 rows fills the MXU sublane dimension (perf feedback);
    # feature dims stay small and are lane-padded to 128 inside the wrapper.
    batch = 128
    input_dim = 16
    hidden_dim = 32
    num_classes = 4
    n_steps = 3

    root = jax.random.PRNGKey(0)
    kx, kp = jax.random.split(root)
    x = jax.random.normal(kx, (batch, input_dim), jnp.float32)
    params = init_params(kp, input_dim, hidden_dim, num_classes, n_steps)

    out = tabnet_forward(x, params, input_dim=input_dim, hidden_dim=hidden_dim,
                         num_classes=num_classes, n_steps=n_steps)
    out = jax.block_until_ready(out)
    assert out.shape == (batch, num_classes)
    assert bool(jnp.all(jnp.isfinite(out)))

    # Precision-matched reference (same bf16 matmul-input policy as the kernel).
    ref_bf16 = tabnet_reference(x, params, hidden_dim=hidden_dim,
                                n_steps=n_steps, matmul_dtype=jnp.bfloat16)
    # Pure-f32 reference of the original PyTorch module (semantic sanity check).
    ref_f32 = tabnet_reference(x, params, hidden_dim=hidden_dim,
                               n_steps=n_steps, matmul_dtype=jnp.float32)

    err_bf16 = float(jnp.max(jnp.abs(out - ref_bf16)))
    err_f32 = float(jnp.max(jnp.abs(out - ref_f32)))
    assert jnp.allclose(out, ref_bf16, atol=3e-2, rtol=3e-2), err_bf16
    assert jnp.allclose(out, ref_f32, atol=2.5e-1, rtol=0.0), err_f32

    print("KERNEL_OK")
</pallas_src>

<mosaic_0001>
module attributes {stable_mosaic.version = 11 : i64} {
  func.func @tabnet_kernel(%arg0: i32, %arg1: memref<128x128xf32, #tpu.memory_space<vmem>>, %arg2: memref<128x128xbf16, #tpu.memory_space<vmem>>, %arg3: memref<128x128xbf16, #tpu.memory_space<vmem>>, %arg4: memref<1x128xf32, #tpu.memory_space<vmem>>, %arg5: memref<1x128xf32, #tpu.memory_space<vmem>>, %arg6: memref<128x128xbf16, #tpu.memory_space<vmem>>, %arg7: memref<128x128xbf16, #tpu.memory_space<vmem>>, %arg8: memref<1x128xf32, #tpu.memory_space<vmem>>, %arg9: memref<1x128xf32, #tpu.memory_space<vmem>>, %arg10: memref<1x128x128xbf16, #tpu.memory_space<vmem>>, %arg11: memref<1x1x128xf32, #tpu.memory_space<vmem>>, %arg12: memref<1x1x128xf32, #tpu.memory_space<vmem>>, %arg13: memref<1x1x128xf32, #tpu.memory_space<vmem>>, %arg14: memref<1x128x128xbf16, #tpu.memory_space<vmem>>, %arg15: memref<1x128x128xbf16, #tpu.memory_space<vmem>>, %arg16: memref<1x1x128xf32, #tpu.memory_space<vmem>>, %arg17: memref<1x1x128xf32, #tpu.memory_space<vmem>>, %arg18: memref<1x128x128xbf16, #tpu.memory_space<vmem>>, %arg19: memref<1x128x128xbf16, #tpu.memory_space<vmem>>, %arg20: memref<1x1x128xf32, #tpu.memory_space<vmem>>, %arg21: memref<1x1x128xf32, #tpu.memory_space<vmem>>, %arg22: memref<128x128xbf16, #tpu.memory_space<vmem>>, %arg23: memref<1x128xf32, #tpu.memory_space<vmem>>, %arg24: memref<128x128xf32, #tpu.memory_space<vmem>>, %arg25: memref<128x128xf32, #tpu.memory_space<vmem>>, %arg26: memref<128x128xf32, #tpu.memory_space<vmem>>, %arg27: memref<128x128xf32, #tpu.memory_space<vmem>>) attributes {dimension_semantics = [#tpu.dimension_semantics<arbitrary>], iteration_bounds = array<i64: 3>, scalar_prefetch = 0 : i64, scratch_operands = 3 : i64, tpu.core_type = #tpu.core_type<tc>, window_params = [{pipeline_mode = #tpu.pipeline_mode<synchronous>, transform_indices = @transform_0, window_bounds = array<i64: 128, 128>}, {pipeline_mode = #tpu.pipeline_mode<synchronous>, transform_indices = @transform_1, window_bounds = array<i64: 128, 128>}, {pipeline_mode = #tpu.pipeline_mode<synchronous>, transform_indices = @transform_2, window_bounds = array<i64: 128, 128>}, {pipeline_mode = #tpu.pipeline_mode<synchronous>, transform_indices = @transform_3, window_bounds = array<i64: 1, 128>}, {pipeline_mode = #tpu.pipeline_mode<synchronous>, transform_indices = @transform_4, window_bounds = array<i64: 1, 128>}, {pipeline_mode = #tpu.pipeline_mode<synchronous>, transform_indices = @transform_5, window_bounds = array<i64: 128, 128>}, {pipeline_mode = #tpu.pipeline_mode<synchronous>, transform_indices = @transform_6, window_bounds = array<i64: 128, 128>}, {pipeline_mode = #tpu.pipeline_mode<synchronous>, transform_indices = @transform_7, window_bounds = array<i64: 1, 128>}, {pipeline_mode = #tpu.pipeline_mode<synchronous>, transform_indices = @transform_8, window_bounds = array<i64: 1, 128>}, {transform_indices = @transform_9, window_bounds = array<i64: 1, 128, 128>}, {transform_indices = @transform_10, window_bounds = array<i64: 1, 1, 128>}, {transform_indices = @transform_11, window_bounds = array<i64: 1, 1, 128>}, {transform_indices = @transform_12, window_bounds = array<i64: 1, 1, 128>}, {transform_indices = @transform_13, window_bounds = array<i64: 1, 128, 128>}, {transform_indices = @transform_14, window_bounds = array<i64: 1, 128, 128>}, {transform_indices = @transform_15, window_bounds = array<i64: 1, 1, 128>}, {transform_indices = @transform_16, window_bounds = array<i64: 1, 1, 128>}, {transform_indices = @transform_17, window_bounds = array<i64: 1, 128, 128>}, {transform_indices = @transform_18, window_bounds = array<i64: 1, 128, 128>}, {transform_indices = @transform_19, window_bounds = array<i64: 1, 1, 128>}, {transform_indices = @transform_20, window_bounds = array<i64: 1, 1, 128>}, {pipeline_mode = #tpu.pipeline_mode<synchronous>, transform_indices = @transform_21, window_bounds = array<i64: 128, 128>}, {pipeline_mode = #tpu.pipeline_mode<synchronous>, transform_indices = @transform_22, window_bounds = array<i64: 1, 128>}, {pipeline_mode = #tpu.pipeline_mode<synchronous>, transform_indices = @transform_23, window_bounds = array<i64: 128, 128>}]} {
    %c0_i32 = arith.constant 0 : i32
    %0 = arith.cmpi eq, %arg0, %c0_i32 : i32
    %1 = arith.extui %0 : i1 to i32
    %c0_i32_0 = arith.constant 0 : i32
    %2 = arith.cmpi ne, %1, %c0_i32_0 : i32
    scf.if %2 {
      %c0_66 = arith.constant 0 : index
      %c0_67 = arith.constant 0 : index
      %121 = vector.load %arg1[%c0_66, %c0_67] : memref<128x128xf32, #tpu.memory_space<vmem>>, vector<128x128xf32>
      %c0_68 = arith.constant 0 : index
      %c0_69 = arith.constant 0 : index
      %122 = vector.load %arg2[%c0_68, %c0_69] : memref<128x128xbf16, #tpu.memory_space<vmem>>, vector<128x128xbf16>
      %c0_70 = arith.constant 0 : index
      %c0_71 = arith.constant 0 : index
      %123 = vector.load %arg3[%c0_70, %c0_71] : memref<128x128xbf16, #tpu.memory_space<vmem>>, vector<128x128xbf16>
      %c0_72 = arith.constant 0 : index
      %c0_73 = arith.constant 0 : index
      %124 = vector.load %arg4[%c0_72, %c0_73] : memref<1x128xf32, #tpu.memory_space<vmem>>, vector<1x128xf32>
      %c0_74 = arith.constant 0 : index
      %c0_75 = arith.constant 0 : index
      %125 = vector.load %arg5[%c0_74, %c0_75] : memref<1x128xf32, #tpu.memory_space<vmem>>, vector<1x128xf32>
      %126 = arith.truncf %121 : vector<128x128xf32> to vector<128x128xbf16>
      %cst_76 = arith.constant dense<0.000000e+00> : vector<128x128xf32>
      %127 = tpu.matmul %126, %122, %cst_76 {dimension_numbers = #tpu.dot_dimension_numbers<[1], [0], [0], [1], [0, 0, 1, 1], [], []>} : vector<128x128xbf16>, vector<128x128xbf16>, vector<128x128xf32> -> vector<128x128xf32>
      %128 = vector.broadcast %124 : vector<1x128xf32> to vector<128x128xf32>
      %129 = arith.addf %127, %128 : vector<128x128xf32>
      %cst_77 = arith.constant dense<0.000000e+00> : vector<128x128xf32>
      %130 = tpu.matmul %126, %123, %cst_77 {dimension_numbers = #tpu.dot_dimension_numbers<[1], [0], [0], [1], [0, 0, 1, 1], [], []>} : vector<128x128xbf16>, vector<128x128xbf16>, vector<128x128xf32> -> vector<128x128xf32>
      %131 = vector.broadcast %125 : vector<1x128xf32> to vector<128x128xf32>
      %132 = arith.addf %130, %131 : vector<128x128xf32>
      %133 = arith.negf %132 : vector<128x128xf32>
      %134 = math.exp %133 : vector<128x128xf32>
      %cst_78 = arith.constant 1.000000e+00 : f32
      %135 = vector.broadcast %cst_78 : f32 to vector<128x128xf32>
      %136 = arith.addf %135, %134 : vector<128x128xf32>
      %137 = arith.divf %135, %136 : vector<128x128xf32>
      %138 = arith.mulf %129, %137 : vector<128x128xf32>
      %c0_79 = arith.constant 0 : index
      %c0_80 = arith.constant 0 : index
      %139 = vector.load %arg6[%c0_79, %c0_80] : memref<128x128xbf16, #tpu.memory_space<vmem>>, vector<128x128xbf16>
      %c0_81 = arith.constant 0 : index
      %c0_82 = arith.constant 0 : index
      %140 = vector.load %arg7[%c0_81, %c0_82] : memref<128x128xbf16, #tpu.memory_space<vmem>>, vector<128x128xbf16>
      %c0_83 = arith.constant 0 : index
      %c0_84 = arith.constant 0 : index
      %141 = vector.load %arg8[%c0_83, %c0_84] : memref<1x128xf32, #tpu.memory_space<vmem>>, vector<1x128xf32>
      %c0_85 = arith.constant 0 : index
      %c0_86 = arith.constant 0 : index
      %142 = vector.load %arg9[%c0_85, %c0_86] : memref<1x128xf32, #tpu.memory_space<vmem>>, vector<1x128xf32>
      %143 = arith.truncf %138 : vector<128x128xf32> to vector<128x128xbf16>
      %cst_87 = arith.constant dense<0.000000e+00> : vector<128x128xf32>
      %144 = tpu.matmul %143, %139, %cst_87 {dimension_numbers = #tpu.dot_dimension_numbers<[1], [0], [0], [1], [0, 0, 1, 1], [], []>} : vector<128x128xbf16>, vector<128x128xbf16>, vector<128x128xf32> -> vector<128x128xf32>
      %145 = vector.broadcast %141 : vector<1x128xf32> to vector<128x128xf32>
      %146 = arith.addf %144, %145 : vector<128x128xf32>
      %cst_88 = arith.constant dense<0.000000e+00> : vector<128x128xf32>
      %147 = tpu.matmul %143, %140, %cst_88 {dimension_numbers = #tpu.dot_dimension_numbers<[1], [0], [0], [1], [0, 0, 1, 1], [], []>} : vector<128x128xbf16>, vector<128x128xbf16>, vector<128x128xf32> -> vector<128x128xf32>
      %148 = vector.broadcast %142 : vector<1x128xf32> to vector<128x128xf32>
      %149 = arith.addf %147, %148 : vector<128x128xf32>
      %150 = arith.negf %149 : vector<128x128xf32>
      %151 = math.exp %150 : vector<128x128xf32>
      %cst_89 = arith.constant 1.000000e+00 : f32
      %152 = vector.broadcast %cst_89 : f32 to vector<128x128xf32>
      %153 = arith.addf %152, %151 : vector<128x128xf32>
      %154 = arith.divf %152, %153 : vector<128x128xf32>
      %155 = arith.mulf %146, %154 : vector<128x128xf32>
      %c0_90 = arith.constant 0 : index
      %c0_91 = arith.constant 0 : index
      %156 = vector.load %arg25[%c0_90, %c0_91] : memref<128x128xf32, #tpu.memory_space<vmem>>, vector<128x128xf32>
      tpu.vector_store %arg25[%c0_90, %c0_91], %155 {strides = array<i32>} : memref<128x128xf32, #tpu.memory_space<vmem>>, vector<128x128xf32>,
      %cst_92 = arith.constant 1.000000e+00 : f32
      %157 = vector.broadcast %cst_92 : f32 to vector<128x128xf32>
      %c0_93 = arith.constant 0 : index
      %c0_94 = arith.constant 0 : index
      %158 = vector.load %arg26[%c0_93, %c0_94] : memref<128x128xf32, #tpu.memory_space<vmem>>, vector<128x128xf32>
      tpu.vector_store %arg26[%c0_93, %c0_94], %157 {strides = array<i32>} : memref<128x128xf32, #tpu.memory_space<vmem>>, vector<128x128xf32>,
      %cst_95 = arith.constant 0.000000e+00 : f32
      %159 = vector.broadcast %cst_95 : f32 to vector<128x128xf32>
      %c0_96 = arith.constant 0 : index
      %c0_97 = arith.constant 0 : index
      %160 = vector.load %arg27[%c0_96, %c0_97] : memref<128x128xf32, #tpu.memory_space<vmem>>, vector<128x128xf32>
      tpu.vector_store %arg27[%c0_96, %c0_97], %159 {strides = array<i32>} : memref<128x128xf32, #tpu.memory_space<vmem>>, vector<128x128xf32>,
    } else {
    }
    %c0 = arith.constant 0 : index
    %c0_1 = arith.constant 0 : index
    %3 = vector.load %arg25[%c0, %c0_1] : memref<128x128xf32, #tpu.memory_space<vmem>>, vector<128x128xf32>
    %4 = arith.truncf %3 : vector<128x128xf32> to vector<128x128xbf16>
    %c0_2 = arith.constant 0 : index
    %c0_3 = arith.constant 0 : index
    %c0_4 = arith.constant 0 : index
    %5 = vector.load %arg10[%c0_2, %c0_3, %c0_4] : memref<1x128x128xbf16, #tpu.memory_space<vmem>>, vector<1x128x128xbf16>
    %6 = vector.shape_cast %5 : vector<1x128x128xbf16> to vector<128x128xbf16>
    %cst = arith.constant dense<0.000000e+00> : vector<128x128xf32>
    %7 = tpu.matmul %4, %6, %cst {dimension_numbers = #tpu.dot_dimension_numbers<[1], [0], [0], [1], [0, 0, 1, 1], [], []>} : vector<128x128xbf16>, vector<128x128xbf16>, vector<128x128xf32> -> vector<128x128xf32>
    %c0_5 = arith.constant 0 : index
    %c0_6 = arith.constant 0 : index
    %c0_7 = arith.constant 0 : index
    %8 = vector.load %arg11[%c0_5, %c0_6, %c0_7] : memref<1x1x128xf32, #tpu.memory_space<vmem>>, vector<1x1x128xf32>
    %9 = vector.shape_cast %8 : vector<1x1x128xf32> to vector<1x128xf32>
    %10 = vector.broadcast %9 : vector<1x128xf32> to vector<128x128xf32>
    %11 = arith.addf %7, %10 : vector<128x128xf32>
    %12 = tpu.iota {dimensions = array<i32: 0>} : vector<128x1xi32>
    %c128_i32 = arith.constant 128 : i32
    %13 = vector.broadcast %c128_i32 : i32 to vector<128x1xi32>
    %14 = arith.cmpi slt, %12, %13 : vector<128x1xi32>
    %15 = arith.extui %14 : vector<128x1xi1> to vector<128x1xi32>
    %16 = arith.sitofp %15 : vector<128x1xi32> to vector<128x1xf32>
    %17 = vector.broadcast %16 : vector<128x1xf32> to vector<128x128xf32>
    %18 = arith.mulf %11, %17 : vector<128x128xf32>
    %cst_8 = arith.constant dense<0.000000e+00> : vector<128xf32>
    %19 = vector.multi_reduction <add>, %18, %cst_8 [0] : vector<128x128xf32> to vector<128xf32>
    %20 = vector.shape_cast %19 : vector<128xf32> to vector<1x128xf32>
    %cst_9 = arith.constant 7.812500e-03 : f32
    %21 = vector.broadcast %cst_9 : f32 to vector<1x128xf32>
    %22 = arith.mulf %20, %21 : vector<1x128xf32>
    %23 = vector.broadcast %22 : vector<1x128xf32> to vector<128x128xf32>
    %24 = arith.subf %11, %23 : vector<128x128xf32>
    %25 = vector.broadcast %16 : vector<128x1xf32> to vector<128x128xf32>
    %26 = arith.mulf %24, %25 : vector<128x128xf32>
    %27 = arith.mulf %26, %26 : vector<128x128xf32>
    %cst_10 = arith.constant dense<0.000000e+00> : vector<128xf32>
    %28 = vector.multi_reduction <add>, %27, %cst_10 [0] : vector<128x128xf32> to vector<128xf32>
    %29 = vector.shape_cast %28 : vector<128xf32> to vector<1x128xf32>
    %cst_11 = arith.constant 7.812500e-03 : f32
    %30 = vector.broadcast %cst_11 : f32 to vector<1x128xf32>
    %31 = arith.mulf %29, %30 : vector<1x128xf32>
    %32 = vector.broadcast %22 : vector<1x128xf32> to vector<128x128xf32>
    %33 = arith.subf %11, %32 : vector<128x128xf32>
    %cst_12 = arith.constant 9.99999974E-6 : f32
    %34 = vector.broadcast %cst_12 : f32 to vector<1x128xf32>
    %35 = arith.addf %31, %34 : vector<1x128xf32>
    %36 = math.rsqrt %35 : vector<1x128xf32>
    %37 = vector.broadcast %36 : vector<1x128xf32> to vector<128x128xf32>
    %38 = arith.mulf %33, %37 : vector<128x128xf32>
    %c0_13 = arith.constant 0 : index
    %c0_14 = arith.constant 0 : index
    %c0_15 = arith.constant 0 : index
    %39 = vector.load %arg12[%c0_13, %c0_14, %c0_15] : memref<1x1x128xf32, #tpu.memory_space<vmem>>, vector<1x1x128xf32>
    %40 = vector.shape_cast %39 : vector<1x1x128xf32> to vector<1x128xf32>
    %41 = vector.broadcast %40 : vector<1x128xf32> to vector<128x128xf32>
    %42 = arith.mulf %38, %41 : vector<128x128xf32>
    %c0_16 = arith.constant 0 : index
    %c0_17 = arith.constant 0 : index
    %c0_18 = arith.constant 0 : index
    %43 = vector.load %arg13[%c0_16, %c0_17, %c0_18] : memref<1x1x128xf32, #tpu.memory_space<vmem>>, vector<1x1x128xf32>
    %44 = vector.shape_cast %43 : vector<1x1x128xf32> to vector<1x128xf32>
    %45 = vector.broadcast %44 : vector<1x128xf32> to vector<128x128xf32>
    %46 = arith.addf %42, %45 : vector<128x128xf32>
    %47 = tpu.iota {dimensions = array<i32: 1>} : vector<1x128xi32>
    %c16_i32 = arith.constant 16 : i32
    %48 = vector.broadcast %c16_i32 : i32 to vector<1x128xi32>
    %49 = arith.cmpi slt, %47, %48 : vector<1x128xi32>
    %c0_19 = arith.constant 0 : index
    %c0_20 = arith.constant 0 : index
    %50 = vector.load %arg26[%c0_19, %c0_20] : memref<128x128xf32, #tpu.memory_space<vmem>>, vector<128x128xf32>
    %51 = arith.mulf %46, %50 : vector<128x128xf32>
    %cst_21 = arith.constant -1.000000e+30 : f32
    %52 = vector.shape_cast %49 : vector<1x128xi1> to vector<1x128xi1>
    %53 = vector.broadcast %52 : vector<1x128xi1> to vector<128x128xi1>
    %54 = vector.broadcast %cst_21 : f32 to vector<128x128xf32>
    %55 = arith.select %53, %51, %54 : vector<128x128xi1>, vector<128x128xf32>
    %cst_22 = arith.constant dense<0xFF800000> : vector<128xf32>
    %56 = vector.multi_reduction <maximumf>, %55, %cst_22 [1] : vector<128x128xf32> to vector<128xf32>
    %57 = vector.shape_cast %56 : vector<128xf32> to vector<128x1xf32>
    %58 = vector.broadcast %57 : vector<128x1xf32> to vector<128x128xf32>
    %59 = arith.subf %55, %58 : vector<128x128xf32>
    %60 = math.exp %59 : vector<128x128xf32>
    %cst_23 = arith.constant dense<0.000000e+00> : vector<128xf32>
    %61 = vector.multi_reduction <add>, %60, %cst_23 [1] : vector<128x128xf32> to vector<128xf32>
    %62 = vector.shape_cast %61 : vector<128xf32> to vector<128x1xf32>
    %63 = tpu.reciprocal %62 {approx = true} : vector<128x1xf32> -> vector<128x1xf32>
    %64 = vector.broadcast %63 : vector<128x1xf32> to vector<128x128xf32>
    %65 = arith.mulf %60, %64 : vector<128x128xf32>
    %c0_24 = arith.constant 0 : index
    %c0_25 = arith.constant 0 : index
    %66 = vector.load %arg1[%c0_24, %c0_25] : memref<128x128xf32, #tpu.memory_space<vmem>>, vector<128x128xf32>
    %67 = arith.mulf %66, %65 : vector<128x128xf32>
    %c0_26 = arith.constant 0 : index
    %c0_27 = arith.constant 0 : index
    %c0_28 = arith.constant 0 : index
    %68 = vector.load %arg14[%c0_26, %c0_27, %c0_28] : memref<1x128x128xbf16, #tpu.memory_space<vmem>>, vector<1x128x128xbf16>
    %69 = vector.shape_cast %68 : vector<1x128x128xbf16> to vector<128x128xbf16>
    %c0_29 = arith.constant 0 : index
    %c0_30 = arith.constant 0 : index
    %c0_31 = arith.constant 0 : index
    %70 = vector.load %arg15[%c0_29, %c0_30, %c0_31] : memref<1x128x128xbf16, #tpu.memory_space<vmem>>, vector<1x128x128xbf16>
    %71 = vector.shape_cast %70 : vector<1x128x128xbf16> to vector<128x128xbf16>
    %c0_32 = arith.constant 0 : index
    %c0_33 = arith.constant 0 : index
    %c0_34 = arith.constant 0 : index
    %72 = vector.load %arg16[%c0_32, %c0_33, %c0_34] : memref<1x1x128xf32, #tpu.memory_space<vmem>>, vector<1x1x128xf32>
    %73 = vector.shape_cast %72 : vector<1x1x128xf32> to vector<1x128xf32>
    %c0_35 = arith.constant 0 : index
    %c0_36 = arith.constant 0 : index
    %c0_37 = arith.constant 0 : index
    %74 = vector.load %arg17[%c0_35, %c0_36, %c0_37] : memref<1x1x128xf32, #tpu.memory_space<vmem>>, vector<1x1x128xf32>
    %75 = vector.shape_cast %74 : vector<1x1x128xf32> to vector<1x128xf32>
    %76 = arith.truncf %67 : vector<128x128xf32> to vector<128x128xbf16>
    %cst_38 = arith.constant dense<0.000000e+00> : vector<128x128xf32>
    %77 = tpu.matmul %76, %69, %cst_38 {dimension_numbers = #tpu.dot_dimension_numbers<[1], [0], [0], [1], [0, 0, 1, 1], [], []>} : vector<128x128xbf16>, vector<128x128xbf16>, vector<128x128xf32> -> vector<128x128xf32>
    %78 = vector.broadcast %73 : vector<1x128xf32> to vector<128x128xf32>
    %79 = arith.addf %77, %78 : vector<128x128xf32>
    %cst_39 = arith.constant dense<0.000000e+00> : vector<128x128xf32>
    %80 = tpu.matmul %76, %71, %cst_39 {dimension_numbers = #tpu.dot_dimension_numbers<[1], [0], [0], [1], [0, 0, 1, 1], [], []>} : vector<128x128xbf16>, vector<128x128xbf16>, vector<128x128xf32> -> vector<128x128xf32>
    %81 = vector.broadcast %75 : vector<1x128xf32> to vector<128x128xf32>
    %82 = arith.addf %80, %81 : vector<128x128xf32>
    %83 = arith.negf %82 : vector<128x128xf32>
    %84 = math.exp %83 : vector<128x128xf32>
    %cst_40 = arith.constant 1.000000e+00 : f32
    %85 = vector.broadcast %cst_40 : f32 to vector<128x128xf32>
    %86 = arith.addf %85, %84 : vector<128x128xf32>
    %87 = arith.divf %85, %86 : vector<128x128xf32>
    %88 = arith.mulf %79, %87 : vector<128x128xf32>
    %c0_41 = arith.constant 0 : index
    %c0_42 = arith.constant 0 : index
    %c0_43 = arith.constant 0 : index
    %89 = vector.load %arg18[%c0_41, %c0_42, %c0_43] : memref<1x128x128xbf16, #tpu.memory_space<vmem>>, vector<1x128x128xbf16>
    %90 = vector.shape_cast %89 : vector<1x128x128xbf16> to vector<128x128xbf16>
    %c0_44 = arith.constant 0 : index
    %c0_45 = arith.constant 0 : index
    %c0_46 = arith.constant 0 : index
    %91 = vector.load %arg19[%c0_44, %c0_45, %c0_46] : memref<1x128x128xbf16, #tpu.memory_space<vmem>>, vector<1x128x128xbf16>
    %92 = vector.shape_cast %91 : vector<1x128x128xbf16> to vector<128x128xbf16>
    %c0_47 = arith.constant 0 : index
    %c0_48 = arith.constant 0 : index
    %c0_49 = arith.constant 0 : index
    %93 = vector.load %arg20[%c0_47, %c0_48, %c0_49] : memref<1x1x128xf32, #tpu.memory_space<vmem>>, vector<1x1x128xf32>
    %94 = vector.shape_cast %93 : vector<1x1x128xf32> to vector<1x128xf32>
    %c0_50 = arith.constant 0 : index
    %c0_51 = arith.constant 0 : index
    %c0_52 = arith.constant 0 : index
    %95 = vector.load %arg21[%c0_50, %c0_51, %c0_52] : memref<1x1x128xf32, #tpu.memory_space<vmem>>, vector<1x1x128xf32>
    %96 = vector.shape_cast %95 : vector<1x1x128xf32> to vector<1x128xf32>
    %97 = arith.truncf %88 : vector<128x128xf32> to vector<128x128xbf16>
    %cst_53 = arith.constant dense<0.000000e+00> : vector<128x128xf32>
    %98 = tpu.matmul %97, %90, %cst_53 {dimension_numbers = #tpu.dot_dimension_numbers<[1], [0], [0], [1], [0, 0, 1, 1], [], []>} : vector<128x128xbf16>, vector<128x128xbf16>, vector<128x128xf32> -> vector<128x128xf32>
    %99 = vector.broadcast %94 : vector<1x128xf32> to vector<128x128xf32>
    %100 = arith.addf %98, %99 : vector<128x128xf32>
    %cst_54 = arith.constant dense<0.000000e+00> : vector<128x128xf32>
    %101 = tpu.matmul %97, %92, %cst_54 {dimension_numbers = #tpu.dot_dimension_numbers<[1], [0], [0], [1], [0, 0, 1, 1], [], []>} : vector<128x128xbf16>, vector<128x128xbf16>, vector<128x128xf32> -> vector<128x128xf32>
    %102 = vector.broadcast %96 : vector<1x128xf32> to vector<128x128xf32>
    %103 = arith.addf %101, %102 : vector<128x128xf32>
    %104 = arith.negf %103 : vector<128x128xf32>
    %105 = math.exp %104 : vector<128x128xf32>
    %cst_55 = arith.constant 1.000000e+00 : f32
    %106 = vector.broadcast %cst_55 : f32 to vector<128x128xf32>
    %107 = arith.addf %106, %105 : vector<128x128xf32>
    %108 = arith.divf %106, %107 : vector<128x128xf32>
    %109 = arith.mulf %100, %108 : vector<128x128xf32>
    %c0_56 = arith.constant 0 : index
    %c0_57 = arith.constant 0 : index
    %110 = vector.load %arg27[%c0_56, %c0_57] : memref<128x128xf32, #tpu.memory_space<vmem>>, vector<128x128xf32>
    %111 = arith.addf %110, %109 : vector<128x128xf32>
    %c0_58 = arith.constant 0 : index
    %c0_59 = arith.constant 0 : index
    %112 = vector.load %arg27[%c0_58, %c0_59] : memref<128x128xf32, #tpu.memory_space<vmem>>, vector<128x128xf32>
    tpu.vector_store %arg27[%c0_58, %c0_59], %111 {strides = array<i32>} : memref<128x128xf32, #tpu.memory_space<vmem>>, vector<128x128xf32>,
    %c0_60 = arith.constant 0 : index
    %c0_61 = arith.constant 0 : index
    %113 = vector.load %arg26[%c0_60, %c0_61] : memref<128x128xf32, #tpu.memory_space<vmem>>, vector<128x128xf32>
    %cst_62 = arith.constant 1.000000e+00 : f32
    %114 = vector.broadcast %cst_62 : f32 to vector<128x128xf32>
    %115 = arith.subf %114, %65 : vector<128x128xf32>
    %116 = arith.mulf %113, %115 : vector<128x128xf32>
    %c0_63 = arith.constant 0 : index
    %c0_64 = arith.constant 0 : index
    %117 = vector.load %arg26[%c0_63, %c0_64] : memref<128x128xf32, #tpu.memory_space<vmem>>, vector<128x128xf32>
    tpu.vector_store %arg26[%c0_63, %c0_64], %116 {strides = array<i32>} : memref<128x128xf32, #tpu.memory_space<vmem>>, vector<128x128xf32>,
    %c2_i32 = arith.constant 2 : i32
    %118 = arith.cmpi eq, %arg0, %c2_i32 : i32
    %119 = arith.extui %118 : i1 to i32
    %c0_i32_65 = arith.constant 0 : i32
    %120 = arith.cmpi ne, %119, %c0_i32_65 : i32
    scf.if %120 {
      %c0_66 = arith.constant 0 : index
      %c0_67 = arith.constant 0 : index
      %121 = vector.load %arg27[%c0_66, %c0_67] : memref<128x128xf32, #tpu.memory_space<vmem>>, vector<128x128xf32>
      %122 = arith.truncf %121 : vector<128x128xf32> to vector<128x128xbf16>
      %c0_68 = arith.constant 0 : index
      %c0_69 = arith.constant 0 : index
      %123 = vector.load %arg22[%c0_68, %c0_69] : memref<128x128xbf16, #tpu.memory_space<vmem>>, vector<128x128xbf16>
      %cst_70 = arith.constant dense<0.000000e+00> : vector<128x128xf32>
      %124 = tpu.matmul %122, %123, %cst_70 {dimension_numbers = #tpu.dot_dimension_numbers<[1], [0], [0], [1], [0, 0, 1, 1], [], []>} : vector<128x128xbf16>, vector<128x128xbf16>, vector<128x128xf32> -> vector<128x128xf32>
      %c0_71 = arith.constant 0 : index
      %c0_72 = arith.constant 0 : index
      %125 = vector.load %arg23[%c0_71, %c0_72] : memref<1x128xf32, #tpu.memory_space<vmem>>, vector<1x128xf32>
      %126 = vector.broadcast %125 : vector<1x128xf32> to vector<128x128xf32>
      %127 = arith.addf %124, %126 : vector<128x128xf32>
      %cst_73 = arith.constant dense<0xFF800000> : vector<128xf32>
      %128 = vector.multi_reduction <maximumf>, %127, %cst_73 [1] : vector<128x128xf32> to vector<128xf32>
      %129 = vector.shape_cast %128 : vector<128xf32> to vector<128x1xf32>
      %130 = vector.broadcast %129 : vector<128x1xf32> to vector<128x128xf32>
      %131 = arith.subf %127, %130 : vector<128x128xf32>
      %132 = math.exp %131 : vector<128x128xf32>
      %cst_74 = arith.constant dense<0.000000e+00> : vector<128xf32>
      %133 = vector.multi_reduction <add>, %132, %cst_74 [1] : vector<128x128xf32> to vector<128xf32>
      %134 = vector.shape_cast %133 : vector<128xf32> to vector<128x1xf32>
      %135 = math.log %134 : vector<128x1xf32>
      %136 = arith.addf %129, %135 : vector<128x1xf32>
      %137 = vector.broadcast %136 : vector<128x1xf32> to vector<128x128xf32>
      %138 = arith.subf %127, %137 : vector<128x128xf32>
      %c0_75 = arith.constant 0 : index
      %c0_76 = arith.constant 0 : index
      %139 = vector.load %arg24[%c0_75, %c0_76] : memref<128x128xf32, #tpu.memory_space<vmem>>, vector<128x128xf32>
      tpu.vector_store %arg24[%c0_75, %c0_76], %138 {strides = array<i32>} : memref<128x128xf32, #tpu.memory_space<vmem>>, vector<128x128xf32>,
    } else {
    }
    return
  }
  func.func @transform_0(%arg0: i32) -> (i32, i32) {
    %c0_i32 = arith.constant 0 : i32
    %c0_i32_0 = arith.constant 0 : i32
    %c0_i32_1 = arith.constant 0 : i32
    return %c0_i32, %c0_i32_0 : i32, i32
  }
  func.func @transform_1(%arg0: i32) -> (i32, i32) {
    %c0_i32 = arith.constant 0 : i32
    %c0_i32_0 = arith.constant 0 : i32
    %c0_i32_1 = arith.constant 0 : i32
    return %c0_i32, %c0_i32_0 : i32, i32
  }
  func.func @transform_2(%arg0: i32) -> (i32, i32) {
    %c0_i32 = arith.constant 0 : i32
    %c0_i32_0 = arith.constant 0 : i32
    %c0_i32_1 = arith.constant 0 : i32
    return %c0_i32, %c0_i32_0 : i32, i32
  }
  func.func @transform_3(%arg0: i32) -> (i32, i32) {
    %c0_i32 = arith.constant 0 : i32
    %c0_i32_0 = arith.constant 0 : i32
    %c0_i32_1 = arith.constant 0 : i32
    return %c0_i32, %c0_i32_0 : i32, i32
  }
  func.func @transform_4(%arg0: i32) -> (i32, i32) {
    %c0_i32 = arith.constant 0 : i32
    %c0_i32_0 = arith.constant 0 : i32
    %c0_i32_1 = arith.constant 0 : i32
    return %c0_i32, %c0_i32_0 : i32, i32
  }
  func.func @transform_5(%arg0: i32) -> (i32, i32) {
    %c0_i32 = arith.constant 0 : i32
    %c0_i32_0 = arith.constant 0 : i32
    %c0_i32_1 = arith.constant 0 : i32
    return %c0_i32, %c0_i32_0 : i32, i32
  }
  func.func @transform_6(%arg0: i32) -> (i32, i32) {
    %c0_i32 = arith.constant 0 : i32
    %c0_i32_0 = arith.constant 0 : i32
    %c0_i32_1 = arith.constant 0 : i32
    return %c0_i32, %c0_i32_0 : i32, i32
  }
  func.func @transform_7(%arg0: i32) -> (i32, i32) {
    %c0_i32 = arith.constant 0 : i32
    %c0_i32_0 = arith.constant 0 : i32
    %c0_i32_1 = arith.constant 0 : i32
    return %c0_i32, %c0_i32_0 : i32, i32
  }
  func.func @transform_8(%arg0: i32) -> (i32, i32) {
    %c0_i32 = arith.constant 0 : i32
    %c0_i32_0 = arith.constant 0 : i32
    %c0_i32_1 = arith.constant 0 : i32
    return %c0_i32, %c0_i32_0 : i32, i32
  }
  func.func @transform_9(%arg0: i32) -> (i32, i32, i32) {
    %c0_i32 = arith.constant 0 : i32
    %c0_i32_0 = arith.constant 0 : i32
    %c0_i32_1 = arith.constant 0 : i32
    return %arg0, %c0_i32, %c0_i32_0 : i32, i32, i32
  }
  func.func @transform_10(%arg0: i32) -> (i32, i32, i32) {
    %c0_i32 = arith.constant 0 : i32
    %c0_i32_0 = arith.constant 0 : i32
    %c0_i32_1 = arith.constant 0 : i32
    return %arg0, %c0_i32, %c0_i32_0 : i32, i32, i32
  }
  func.func @transform_11(%arg0: i32) -> (i32, i32, i32) {
    %c0_i32 = arith.constant 0 : i32
    %c0_i32_0 = arith.constant 0 : i32
    %c0_i32_1 = arith.constant 0 : i32
    return %arg0, %c0_i32, %c0_i32_0 : i32, i32, i32
  }
  func.func @transform_12(%arg0: i32) -> (i32, i32, i32) {
    %c0_i32 = arith.constant 0 : i32
    %c0_i32_0 = arith.constant 0 : i32
    %c0_i32_1 = arith.constant 0 : i32
    return %arg0, %c0_i32, %c0_i32_0 : i32, i32, i32
  }
  func.func @transform_13(%arg0: i32) -> (i32, i32, i32) {
    %c0_i32 = arith.constant 0 : i32
    %c0_i32_0 = arith.constant 0 : i32
    %c0_i32_1 = arith.constant 0 : i32
    return %arg0, %c0_i32, %c0_i32_0 : i32, i32, i32
  }
  func.func @transform_14(%arg0: i32) -> (i32, i32, i32) {
    %c0_i32 = arith.constant 0 : i32
    %c0_i32_0 = arith.constant 0 : i32
    %c0_i32_1 = arith.constant 0 : i32
    return %arg0, %c0_i32, %c0_i32_0 : i32, i32, i32
  }
  func.func @transform_15(%arg0: i32) -> (i32, i32, i32) {
    %c0_i32 = arith.constant 0 : i32
    %c0_i32_0 = arith.constant 0 : i32
    %c0_i32_1 = arith.constant 0 : i32
    return %arg0, %c0_i32, %c0_i32_0 : i32, i32, i32
  }
  func.func @transform_16(%arg0: i32) -> (i32, i32, i32) {
    %c0_i32 = arith.constant 0 : i32
    %c0_i32_0 = arith.constant 0 : i32
    %c0_i32_1 = arith.constant 0 : i32
    return %arg0, %c0_i32, %c0_i32_0 : i32, i32, i32
  }
  func.func @transform_17(%arg0: i32) -> (i32, i32, i32) {
    %c0_i32 = arith.constant 0 : i32
    %c0_i32_0 = arith.constant 0 : i32
    %c0_i32_1 = arith.constant 0 : i32
    return %arg0, %c0_i32, %c0_i32_0 : i32, i32, i32
  }
  func.func @transform_18(%arg0: i32) -> (i32, i32, i32) {
    %c0_i32 = arith.constant 0 : i32
    %c0_i32_0 = arith.constant 0 : i32
    %c0_i32_1 = arith.constant 0 : i32
    return %arg0, %c0_i32, %c0_i32_0 : i32, i32, i32
  }
  func.func @transform_19(%arg0: i32) -> (i32, i32, i32) {
    %c0_i32 = arith.constant 0 : i32
    %c0_i32_0 = arith.constant 0 : i32
    %c0_i32_1 = arith.constant 0 : i32
    return %arg0, %c0_i32, %c0_i32_0 : i32, i32, i32
  }
  func.func @transform_20(%arg0: i32) -> (i32, i32, i32) {
    %c0_i32 = arith.constant 0 : i32
    %c0_i32_0 = arith.constant 0 : i32
    %c0_i32_1 = arith.constant 0 : i32
    return %arg0, %c0_i32, %c0_i32_0 : i32, i32, i32
  }
  func.func @transform_21(%arg0: i32) -> (i32, i32) {
    %c0_i32 = arith.constant 0 : i32
    %c0_i32_0 = arith.constant 0 : i32
    %c0_i32_1 = arith.constant 0 : i32
    return %c0_i32, %c0_i32_0 : i32, i32
  }
  func.func @transform_22(%arg0: i32) -> (i32, i32) {
    %c0_i32 = arith.constant 0 : i32
    %c0_i32_0 = arith.constant 0 : i32
    %c0_i32_1 = arith.constant 0 : i32
    return %c0_i32, %c0_i32_0 : i32, i32
  }
  func.func @transform_23(%arg0: i32) -> (i32, i32) {
    %c0_i32 = arith.constant 0 : i32
    %c0_i32_0 = arith.constant 0 : i32
    %c0_i32_1 = arith.constant 0 : i32
    return %c0_i32, %c0_i32_0 : i32, i32
  }
}

</mosaic_0001>

<llo_original>
// kernel: tpu_custom_call.1
$region0: #{tpu_custom_call.1}
  #allocation0 [shape = 'u32[]', space=smem, size = 0x4, offset = 0x4, fixed_abs, tag = 'smem constant byte address 0x4 - core index']
  #allocation1 [shape = 'u32[144,128]{1,0:T(1,128)}', space=vmem, size = 0x12000, scoped, tag = 'internal scratch']
  #allocation2 [shape = 'f32[128,128]{1,0:T(8,128)}', space=vmem, size = 0x10000, scoped, tag = 'scratch operand']
  #allocation3 [shape = 'f32[128,128]{1,0:T(8,128)}', space=vmem, size = 0x10000, scoped, tag = 'scratch operand']
  #allocation4 [shape = 'f32[128,128]{1,0:T(8,128)}', space=vmem, size = 0x10000, scoped, tag = 'scratch operand']
  %s0 = inlined_call_operand.hbm [shape: f32[128,128], index: 0, kind: input, shape index: {}]
  %s1 = inlined_call_operand.hbm [shape: bf16[128,128], index: 1, kind: input, shape index: {}]
  %s2 = inlined_call_operand.hbm [shape: bf16[128,128], index: 2, kind: input, shape index: {}]
  %s3 = inlined_call_operand.hbm [shape: f32[1,128], index: 3, kind: input, shape index: {}]
  %s4 = inlined_call_operand.hbm [shape: f32[1,128], index: 4, kind: input, shape index: {}]
  %s5 = inlined_call_operand.hbm [shape: bf16[128,128], index: 5, kind: input, shape index: {}]
  %s6 = inlined_call_operand.hbm [shape: bf16[128,128], index: 6, kind: input, shape index: {}]
  %s7 = inlined_call_operand.hbm [shape: f32[1,128], index: 7, kind: input, shape index: {}]
  %s8 = inlined_call_operand.hbm [shape: f32[1,128], index: 8, kind: input, shape index: {}]
  %s9 = inlined_call_operand.hbm [shape: bf16[3,128,128], index: 9, kind: input, shape index: {}]
  %s10 = inlined_call_operand.vmem [shape: f32[3,1,128], index: 10, kind: input, shape index: {}]
  %s11 = inlined_call_operand.vmem [shape: f32[3,1,128], index: 11, kind: input, shape index: {}]
  %s12 = inlined_call_operand.vmem [shape: f32[3,1,128], index: 12, kind: input, shape index: {}]
  %s13 = inlined_call_operand.hbm [shape: bf16[3,128,128], index: 13, kind: input, shape index: {}]
  %s14 = inlined_call_operand.hbm [shape: bf16[3,128,128], index: 14, kind: input, shape index: {}]
  %s15 = inlined_call_operand.vmem [shape: f32[3,1,128], index: 15, kind: input, shape index: {}]
  %s16 = inlined_call_operand.vmem [shape: f32[3,1,128], index: 16, kind: input, shape index: {}]
  %s17 = inlined_call_operand.hbm [shape: bf16[3,128,128], index: 17, kind: input, shape index: {}]
  %s18 = inlined_call_operand.hbm [shape: bf16[3,128,128], index: 18, kind: input, shape index: {}]
  %s19 = inlined_call_operand.vmem [shape: f32[3,1,128], index: 19, kind: input, shape index: {}]
  %s20 = inlined_call_operand.vmem [shape: f32[3,1,128], index: 20, kind: input, shape index: {}]
  %s21 = inlined_call_operand.hbm [shape: bf16[128,128], index: 21, kind: input, shape index: {}]
  %s22 = inlined_call_operand.vmem [shape: f32[1,128], index: 22, kind: input, shape index: {}]
  %s23 = inlined_call_operand.hbm [shape: f32[128,128], index: 23, kind: output, shape index: {}]
  %s24 = sld [smem:[#allocation0]]
  $region193: #{tpu_custom_call.1} parent=0
    _
  %s26 = ssub.s32 1, %s24
  %s27 = scalar_select 0, %s26, %s24
  $region1: #{tpu_custom_call.1} parent=0
    #allocation5 [shape = 'u8[65536]{0}', space=vmem, size = 0x10000, scoped, tag = 'input window, operand 0, single buffered']
    #allocation6 [shape = 's32[2]{0}', space=sflag, size = 0x8, scoped, tag = 'scoped memory for tpu_custom_call.1']
    #allocation7 [shape = 's32[2]{0}', space=sflag, size = 0x8, scoped, tag = 'scoped memory for tpu_custom_call.1']
    #allocation8 [shape = 'u8[32768]{0}', space=vmem, size = 0x8000, scoped, tag = 'input window, operand 1, single buffered']
    #allocation9 [shape = 's32[1]{0}', space=sflag, size = 0x4, scoped, tag = 'scoped memory for tpu_custom_call.1']
    #allocation10 [shape = 'u8[32768]{0}', space=vmem, size = 0x8000, scoped, tag = 'input window, operand 2, single buffered']
    #allocation11 [shape = 'u8[512]{0}', space=vmem, size = 0x400, scoped, tag = 'input window, operand 3, single buffered']
    #allocation12 [shape = 's32[1]{0}', space=sflag, size = 0x4, scoped, tag = 'scoped memory for tpu_custom_call.1']
    #allocation13 [shape = 'u8[512]{0}', space=vmem, size = 0x400, scoped, tag = 'input window, operand 4, single buffered']
    #allocation14 [shape = 'u8[32768]{0}', space=vmem, size = 0x8000, scoped, tag = 'input window, operand 5, single buffered']
    #allocation15 [shape = 's32[1]{0}', space=sflag, size = 0x4, scoped, tag = 'scoped memory for tpu_custom_call.1']
    #allocation16 [shape = 'u8[32768]{0}', space=vmem, size = 0x8000, scoped, tag = 'input window, operand 6, single buffered']
    #allocation17 [shape = 'u8[512]{0}', space=vmem, size = 0x400, scoped, tag = 'input window, operand 7, single buffered']
    #allocation18 [shape = 's32[1]{0}', space=sflag, size = 0x4, scoped, tag = 'scoped memory for tpu_custom_call.1']
    #allocation19 [shape = 'u8[512]{0}', space=vmem, size = 0x400, scoped, tag = 'input window, operand 8, single buffered']
    #allocation20 [shape = 'u8[65536]{0}', space=vmem, size = 0x10000, scoped, tag = 'input window, operand 9']
    #allocation21 [shape = 's32[2]{0}', space=sflag, size = 0x8, scoped, tag = 'scoped memory for tpu_custom_call.1']
    #allocation22 [shape = 'u8[65536]{0}', space=vmem, size = 0x10000, scoped, tag = 'input window, operand 13']
    #allocation23 [shape = 'u8[65536]{0}', space=vmem, size = 0x10000, scoped, tag = 'input window, operand 14']
    #allocation24 [shape = 's32[2]{0}', space=sflag, size = 0x8, scoped, tag = 'scoped memory for tpu_custom_call.1']
    #allocation25 [shape = 'u8[65536]{0}', space=vmem, size = 0x10000, scoped, tag = 'input window, operand 17']
    #allocation26 [shape = 'u8[65536]{0}', space=vmem, size = 0x10000, scoped, tag = 'input window, operand 18']
    #allocation27 [shape = 's32[2]{0}', space=sflag, size = 0x8, scoped, tag = 'scoped memory for tpu_custom_call.1']
    #allocation28 [shape = 'u8[32768]{0}', space=vmem, size = 0x8000, scoped, tag = 'input window, operand 21, single buffered']
    #allocation29 [shape = 'u8[65536]{0}', space=vmem, size = 0x10000, scoped, tag = 'output window, operand 0, single buffered']
    %28 = vsyncpa [#allocation6], 0
    %29 = vsyncpa [#allocation9], 0
    %30 = vsyncpa [#allocation12], 0
    %31 = vsyncpa [#allocation15], 0
    %32 = vsyncpa [#allocation18], 0
    %33 = vsyncpa [#allocation21], 0
    %s34 = scalar_lea.sflag [#allocation21], 1
    %35 = vsyncpa %s34, 0
    %36 = vsyncpa [#allocation24], 0
    %s37 = scalar_lea.sflag [#allocation24], 1
    %38 = vsyncpa %s37, 0
    %39 = vsyncpa [#allocation27], 0
    %s40 = scalar_lea.sflag [#allocation27], 1
    %41 = vsyncpa %s40, 0
    %42 = vsyncpa [#allocation7], 0
    loop: start=0, step=1, limit=5
    $region2: #{tpu_custom_call.1} parent=1 // loop_pre_header
      _
    $region3: #{tpu_custom_call.1} parent=1 // loop_header
      %s44 = sphi 0, %s48
      %p45 = scmp.ge.s32.totalorder %s44, 5
      %s52 = sphi 0, %s52
      %s54 = sphi 0, %s52
      %s55 = sphi 0, %s54
      %s69 = sphi 0, %s55
      %s73 = sphi 0, %s73
      %s75 = sphi 0, %s73
      %s76 = sphi 0, %s75
      %s90 = sphi 0, %s76
      %s94 = sphi 0, %s94
      %s96 = sphi 0, %s94
      %s97 = sphi 0, %s96
      %s111 = sphi 0, %s97
      %s115 = sphi 0, %s115
      %s117 = sphi 0, %s115
      %s118 = sphi 0, %s117
      %s132 = sphi 0, %s118
      %s136 = sphi 0, %s136
      %s138 = sphi 0, %s136
      %s139 = sphi 0, %s138
      %s153 = sphi 0, %s139
      %s157 = sphi 0, %s157
      %s159 = sphi 0, %s157
      %s160 = sphi 0, %s159
      %s174 = sphi 0, %s160
      %s178 = sphi 0, %s178
      %s180 = sphi 0, %s178
      %s181 = sphi 0, %s180
      %s195 = sphi 0, %s181
      %s199 = sphi 0, %s199
      %s201 = sphi 0, %s199
      %s202 = sphi 0, %s201
      %s216 = sphi 0, %s202
      %s220 = sphi 0, %s220
      %s222 = sphi 0, %s220
      %s223 = sphi 0, %s222
      %s237 = sphi 0, %s223
      %s243 = sphi 0, %s245
      %s246 = sphi 0, %s243
      %s247 = sphi 0, %s246
      %s263 = sphi 0, %s247
      %s269 = sphi 0, %s271
      %s272 = sphi 0, %s269
      %s273 = sphi 0, %s272
      %s289 = sphi 0, %s273
      %s295 = sphi 0, %s297
      %s298 = sphi 0, %s295
      %s299 = sphi 0, %s298
      %s315 = sphi 0, %s299
      %s321 = sphi 0, %s323
      %s324 = sphi 0, %s321
      %s325 = sphi 0, %s324
      %s341 = sphi 0, %s325
      %s347 = sphi 0, %s349
      %s350 = sphi 0, %s347
      %s351 = sphi 0, %s350
      %s367 = sphi 0, %s351
      %s373 = sphi 0, %s375
      %s376 = sphi 0, %s373
      %s377 = sphi 0, %s376
      %s393 = sphi 0, %s377
      %s399 = sphi 0, %s401
      %s402 = sphi 0, %s399
      %s403 = sphi 0, %s402
      %s419 = sphi 0, %s403
      %s425 = sphi 0, %s427
      %s428 = sphi 0, %s425
      %s429 = sphi 0, %s428
      %s445 = sphi 0, %s429
      %s451 = sphi 0, %s453
      %s454 = sphi 0, %s451
      %s455 = sphi 0, %s454
      %s471 = sphi 0, %s455
      %s477 = sphi 0, %s479
      %s480 = sphi 0, %s477
      %s481 = sphi 0, %s480
      %s497 = sphi 0, %s481
      %s503 = sphi 0, %s505
      %s506 = sphi 0, %s503
      %s507 = sphi 0, %s506
      %s523 = sphi 0, %s507
      %s529 = sphi 0, %s531
      %s532 = sphi 0, %s529
      %s533 = sphi 0, %s532
      %s549 = sphi 0, %s533
      %s553 = sphi 0, %s553
      %s555 = sphi 0, %s553
      %s556 = sphi 0, %s555
      %s570 = sphi 0, %s556
      %s574 = sphi 0, %s574
      %s576 = sphi 0, %s574
      %s577 = sphi 0, %s576
      %s591 = sphi 0, %s577
      %s595 = sphi 0, %s595
      %s597 = sphi 0, %s595
      %s598 = sphi 0, %s597
      %s612 = sphi 0, %s598
    $region4: #{tpu_custom_call.1} parent=1 // loop_header_branch
      %47 = sbr.rel (%p45) target = $region8
    $region5: #{tpu_custom_call.1} parent=1 // loop_body
      %s49 = ssub.s32 %s44, 1
      %s50 = ssub.s32 %s44, 2
      %s51 = sadd.s32 %s44, 1
      %s53 = sadd.s32 %s52, 1
      %p56 = scmp.eq.s32.totalorder %s44, 2
      %p57 = scmp.ne.s32.totalorder %s52, %s54
      %p58 = scmp.eq.s32.totalorder %s44, 0
      %p59 = por %p57, %p58
      %p60 = scmp.ne.s32.totalorder %s52, %s54
      %p61 = scmp.eq.s32.totalorder %s49, 2
      %p62 = por %p60, %p61
      %p63 = scmp.ne.s32.totalorder %s54, %s55
      %p64 = scmp.eq.s32.totalorder %s49, 0
      %p65 = por %p63, %p64
      %p66 = scmp.ne.s32.totalorder %s54, %s55
      %p67 = scmp.eq.s32.totalorder %s50, 2
      %p68 = por %p66, %p67
      %p70 = scmp.ne.s32.totalorder %s55, %s69
      %p71 = scmp.eq.s32.totalorder %s50, 0
      %p72 = por %p70, %p71
      %s74 = sadd.s32 %s73, 1
      %p77 = scmp.eq.s32.totalorder %s44, 2
      %p78 = scmp.ne.s32.totalorder %s73, %s75
      %p79 = scmp.eq.s32.totalorder %s44, 0
      %p80 = por %p78, %p79
      %p81 = scmp.ne.s32.totalorder %s73, %s75
      %p82 = scmp.eq.s32.totalorder %s49, 2
      %p83 = por %p81, %p82
      %p84 = scmp.ne.s32.totalorder %s75, %s76
      %p85 = scmp.eq.s32.totalorder %s49, 0
      %p86 = por %p84, %p85
      %p87 = scmp.ne.s32.totalorder %s75, %s76
      %p88 = scmp.eq.s32.totalorder %s50, 2
      %p89 = por %p87, %p88
      %p91 = scmp.ne.s32.totalorder %s76, %s90
      %p92 = scmp.eq.s32.totalorder %s50, 0
      %p93 = por %p91, %p92
      %s95 = sadd.s32 %s94, 1
      %p98 = scmp.eq.s32.totalorder %s44, 2
      %p99 = scmp.ne.s32.totalorder %s94, %s96
      %p100 = scmp.eq.s32.totalorder %s44, 0
      %p101 = por %p99, %p100
      %p102 = scmp.ne.s32.totalorder %s94, %s96
      %p103 = scmp.eq.s32.totalorder %s49, 2
      %p104 = por %p102, %p103
      %p105 = scmp.ne.s32.totalorder %s96, %s97
      %p106 = scmp.eq.s32.totalorder %s49, 0
      %p107 = por %p105, %p106
      %p108 = scmp.ne.s32.totalorder %s96, %s97
      %p109 = scmp.eq.s32.totalorder %s50, 2
      %p110 = por %p108, %p109
      %p112 = scmp.ne.s32.totalorder %s97, %s111
      %p113 = scmp.eq.s32.totalorder %s50, 0
      %p114 = por %p112, %p113
      %s116 = sadd.s32 %s115, 1
      %p119 = scmp.eq.s32.totalorder %s44, 2
      %p120 = scmp.ne.s32.totalorder %s115, %s117
      %p121 = scmp.eq.s32.totalorder %s44, 0
      %p122 = por %p120, %p121
      %p123 = scmp.ne.s32.totalorder %s115, %s117
      %p124 = scmp.eq.s32.totalorder %s49, 2
      %p125 = por %p123, %p124
      %p126 = scmp.ne.s32.totalorder %s117, %s118
      %p127 = scmp.eq.s32.totalorder %s49, 0
      %p128 = por %p126, %p127
      %p129 = scmp.ne.s32.totalorder %s117, %s118
      %p130 = scmp.eq.s32.totalorder %s50, 2
      %p131 = por %p129, %p130
      %p133 = scmp.ne.s32.totalorder %s118, %s132
      %p134 = scmp.eq.s32.totalorder %s50, 0
      %p135 = por %p133, %p134
      %s137 = sadd.s32 %s136, 1
      %p140 = scmp.eq.s32.totalorder %s44, 2
      %p141 = scmp.ne.s32.totalorder %s136, %s138
      %p142 = scmp.eq.s32.totalorder %s44, 0
      %p143 = por %p141, %p142
      %p144 = scmp.ne.s32.totalorder %s136, %s138
      %p145 = scmp.eq.s32.totalorder %s49, 2
      %p146 = por %p144, %p145
      %p147 = scmp.ne.s32.totalorder %s138, %s139
      %p148 = scmp.eq.s32.totalorder %s49, 0
      %p149 = por %p147, %p148
      %p150 = scmp.ne.s32.totalorder %s138, %s139
      %p151 = scmp.eq.s32.totalorder %s50, 2
      %p152 = por %p150, %p151
      %p154 = scmp.ne.s32.totalorder %s139, %s153
      %p155 = scmp.eq.s32.totalorder %s50, 0
      %p156 = por %p154, %p155
      %s158 = sadd.s32 %s157, 1
      %p161 = scmp.eq.s32.totalorder %s44, 2
      %p162 = scmp.ne.s32.totalorder %s157, %s159
      %p163 = scmp.eq.s32.totalorder %s44, 0
      %p164 = por %p162, %p163
      %p165 = scmp.ne.s32.totalorder %s157, %s159
      %p166 = scmp.eq.s32.totalorder %s49, 2
      %p167 = por %p165, %p166
      %p168 = scmp.ne.s32.totalorder %s159, %s160
      %p169 = scmp.eq.s32.totalorder %s49, 0
      %p170 = por %p168, %p169
      %p171 = scmp.ne.s32.totalorder %s159, %s160
      %p172 = scmp.eq.s32.totalorder %s50, 2
      %p173 = por %p171, %p172
      %p175 = scmp.ne.s32.totalorder %s160, %s174
      %p176 = scmp.eq.s32.totalorder %s50, 0
      %p177 = por %p175, %p176
      %s179 = sadd.s32 %s178, 1
      %p182 = scmp.eq.s32.totalorder %s44, 2
      %p183 = scmp.ne.s32.totalorder %s178, %s180
      %p184 = scmp.eq.s32.totalorder %s44, 0
      %p185 = por %p183, %p184
      %p186 = scmp.ne.s32.totalorder %s178, %s180
      %p187 = scmp.eq.s32.totalorder %s49, 2
      %p188 = por %p186, %p187
      %p189 = scmp.ne.s32.totalorder %s180, %s181
      %p190 = scmp.eq.s32.totalorder %s49, 0
      %p191 = por %p189, %p190
      %p192 = scmp.ne.s32.totalorder %s180, %s181
      %p193 = scmp.eq.s32.totalorder %s50, 2
      %p194 = por %p192, %p193
      %p196 = scmp.ne.s32.totalorder %s181, %s195
      %p197 = scmp.eq.s32.totalorder %s50, 0
      %p198 = por %p196, %p197
      %s200 = sadd.s32 %s199, 1
      %p203 = scmp.eq.s32.totalorder %s44, 2
      %p204 = scmp.ne.s32.totalorder %s199, %s201
      %p205 = scmp.eq.s32.totalorder %s44, 0
      %p206 = por %p204, %p205
      %p207 = scmp.ne.s32.totalorder %s199, %s201
      %p208 = scmp.eq.s32.totalorder %s49, 2
      %p209 = por %p207, %p208
      %p210 = scmp.ne.s32.totalorder %s201, %s202
      %p211 = scmp.eq.s32.totalorder %s49, 0
      %p212 = por %p210, %p211
      %p213 = scmp.ne.s32.totalorder %s201, %s202
      %p214 = scmp.eq.s32.totalorder %s50, 2
      %p215 = por %p213, %p214
      %p217 = scmp.ne.s32.totalorder %s202, %s216
      %p218 = scmp.eq.s32.totalorder %s50, 0
      %p219 = por %p217, %p218
      %s221 = sadd.s32 %s220, 1
      %p224 = scmp.eq.s32.totalorder %s44, 2
      %p225 = scmp.ne.s32.totalorder %s220, %s222
      %p226 = scmp.eq.s32.totalorder %s44, 0
      %p227 = por %p225, %p226
      %p228 = scmp.ne.s32.totalorder %s220, %s222
      %p229 = scmp.eq.s32.totalorder %s49, 2
      %p230 = por %p228, %p229
      %p231 = scmp.ne.s32.totalorder %s222, %s223
      %p232 = scmp.eq.s32.totalorder %s49, 0
      %p233 = por %p231, %p232
      %p234 = scmp.ne.s32.totalorder %s222, %s223
      %p235 = scmp.eq.s32.totalorder %s50, 2
      %p236 = por %p234, %p235
      %p238 = scmp.ne.s32.totalorder %s223, %s237
      %p239 = scmp.eq.s32.totalorder %s50, 0
      %p240 = por %p238, %p239
      %s241 = ssub.s32 %s44, %s51
      %p242 = scmp.eq.s32.totalorder %s241, 0
      %s244 = sadd.s32 %s243, 1
      %s245 = scalar_select %p242, %s243, %s244
      %p248 = pneg %p242
      %p249 = scmp.eq.s32.totalorder %s44, 2
      %p250 = por %p248, %p249
      %p251 = scmp.ne.s32.totalorder %s243, %s246
      %p252 = scmp.eq.s32.totalorder %s44, 0
      %p253 = por %p251, %p252
      %p254 = scmp.ne.s32.totalorder %s243, %s246
      %p255 = scmp.eq.s32.totalorder %s49, 2
      %p256 = por %p254, %p255
      %p257 = scmp.ne.s32.totalorder %s246, %s247
      %p258 = scmp.eq.s32.totalorder %s49, 0
      %p259 = por %p257, %p258
      %p260 = scmp.ne.s32.totalorder %s246, %s247
      %p261 = scmp.eq.s32.totalorder %s50, 2
      %p262 = por %p260, %p261
      %p264 = scmp.ne.s32.totalorder %s247, %s263
      %p265 = scmp.eq.s32.totalorder %s50, 0
      %p266 = por %p264, %p265
      %s267 = ssub.s32 %s44, %s51
      %p268 = scmp.eq.s32.totalorder %s267, 0
      %s270 = sadd.s32 %s269, 1
      %s271 = scalar_select %p268, %s269, %s270
      %p274 = pneg %p268
      %p275 = scmp.eq.s32.totalorder %s44, 2
      %p276 = por %p274, %p275
      %p277 = scmp.ne.s32.totalorder %s269, %s272
      %p278 = scmp.eq.s32.totalorder %s44, 0
      %p279 = por %p277, %p278
      %p280 = scmp.ne.s32.totalorder %s269, %s272
      %p281 = scmp.eq.s32.totalorder %s49, 2
      %p282 = por %p280, %p281
      %p283 = scmp.ne.s32.totalorder %s272, %s273
      %p284 = scmp.eq.s32.totalorder %s49, 0
      %p285 = por %p283, %p284
      %p286 = scmp.ne.s32.totalorder %s272, %s273
      %p287 = scmp.eq.s32.totalorder %s50, 2
      %p288 = por %p286, %p287
      %p290 = scmp.ne.s32.totalorder %s273, %s289
      %p291 = scmp.eq.s32.totalorder %s50, 0
      %p292 = por %p290, %p291
      %s293 = ssub.s32 %s44, %s51
      %p294 = scmp.eq.s32.totalorder %s293, 0
      %s296 = sadd.s32 %s295, 1
      %s297 = scalar_select %p294, %s295, %s296
      %p300 = pneg %p294
      %p301 = scmp.eq.s32.totalorder %s44, 2
      %p302 = por %p300, %p301
      %p303 = scmp.ne.s32.totalorder %s295, %s298
      %p304 = scmp.eq.s32.totalorder %s44, 0
      %p305 = por %p303, %p304
      %p306 = scmp.ne.s32.totalorder %s295, %s298
      %p307 = scmp.eq.s32.totalorder %s49, 2
      %p308 = por %p306, %p307
      %p309 = scmp.ne.s32.totalorder %s298, %s299
      %p310 = scmp.eq.s32.totalorder %s49, 0
      %p311 = por %p309, %p310
      %p312 = scmp.ne.s32.totalorder %s298, %s299
      %p313 = scmp.eq.s32.totalorder %s50, 2
      %p314 = por %p312, %p313
      %p316 = scmp.ne.s32.totalorder %s299, %s315
      %p317 = scmp.eq.s32.totalorder %s50, 0
      %p318 = por %p316, %p317
      %s319 = ssub.s32 %s44, %s51
      %p320 = scmp.eq.s32.totalorder %s319, 0
      %s322 = sadd.s32 %s321, 1
      %s323 = scalar_select %p320, %s321, %s322
      %p326 = pneg %p320
      %p327 = scmp.eq.s32.totalorder %s44, 2
      %p328 = por %p326, %p327
      %p329 = scmp.ne.s32.totalorder %s321, %s324
      %p330 = scmp.eq.s32.totalorder %s44, 0
      %p331 = por %p329, %p330
      %p332 = scmp.ne.s32.totalorder %s321, %s324
      %p333 = scmp.eq.s32.totalorder %s49, 2
      %p334 = por %p332, %p333
      %p335 = scmp.ne.s32.totalorder %s324, %s325
      %p336 = scmp.eq.s32.totalorder %s49, 0
      %p337 = por %p335, %p336
      %p338 = scmp.ne.s32.totalorder %s324, %s325
      %p339 = scmp.eq.s32.totalorder %s50, 2
      %p340 = por %p338, %p339
      %p342 = scmp.ne.s32.totalorder %s325, %s341
      %p343 = scmp.eq.s32.totalorder %s50, 0
      %p344 = por %p342, %p343
      %s345 = ssub.s32 %s44, %s51
      %p346 = scmp.eq.s32.totalorder %s345, 0
      %s348 = sadd.s32 %s347, 1
      %s349 = scalar_select %p346, %s347, %s348
      %p352 = pneg %p346
      %p353 = scmp.eq.s32.totalorder %s44, 2
      %p354 = por %p352, %p353
      %p355 = scmp.ne.s32.totalorder %s347, %s350
      %p356 = scmp.eq.s32.totalorder %s44, 0
      %p357 = por %p355, %p356
      %p358 = scmp.ne.s32.totalorder %s347, %s350
      %p359 = scmp.eq.s32.totalorder %s49, 2
      %p360 = por %p358, %p359
      %p361 = scmp.ne.s32.totalorder %s350, %s351
      %p362 = scmp.eq.s32.totalorder %s49, 0
      %p363 = por %p361, %p362
      %p364 = scmp.ne.s32.totalorder %s350, %s351
      %p365 = scmp.eq.s32.totalorder %s50, 2
      %p366 = por %p364, %p365
      %p368 = scmp.ne.s32.totalorder %s351, %s367
      %p369 = scmp.eq.s32.totalorder %s50, 0
      %p370 = por %p368, %p369
      %s371 = ssub.s32 %s44, %s51
      %p372 = scmp.eq.s32.totalorder %s371, 0
      %s374 = sadd.s32 %s373, 1
      %s375 = scalar_select %p372, %s373, %s374
      %p378 = pneg %p372
      %p379 = scmp.eq.s32.totalorder %s44, 2
      %p380 = por %p378, %p379
      %p381 = scmp.ne.s32.totalorder %s373, %s376
      %p382 = scmp.eq.s32.totalorder %s44, 0
      %p383 = por %p381, %p382
      %p384 = scmp.ne.s32.totalorder %s373, %s376
      %p385 = scmp.eq.s32.totalorder %s49, 2
      %p386 = por %p384, %p385
      %p387 = scmp.ne.s32.totalorder %s376, %s377
      %p388 = scmp.eq.s32.totalorder %s49, 0
      %p389 = por %p387, %p388
      %p390 = scmp.ne.s32.totalorder %s376, %s377
      %p391 = scmp.eq.s32.totalorder %s50, 2
      %p392 = por %p390, %p391
      %p394 = scmp.ne.s32.totalorder %s377, %s393
      %p395 = scmp.eq.s32.totalorder %s50, 0
      %p396 = por %p394, %p395
      %s397 = ssub.s32 %s44, %s51
      %p398 = scmp.eq.s32.totalorder %s397, 0
      %s400 = sadd.s32 %s399, 1
      %s401 = scalar_select %p398, %s399, %s400
      %p404 = pneg %p398
      %p405 = scmp.eq.s32.totalorder %s44, 2
      %p406 = por %p404, %p405
      %p407 = scmp.ne.s32.totalorder %s399, %s402
      %p408 = scmp.eq.s32.totalorder %s44, 0
      %p409 = por %p407, %p408
      %p410 = scmp.ne.s32.totalorder %s399, %s402
      %p411 = scmp.eq.s32.totalorder %s49, 2
      %p412 = por %p410, %p411
      %p413 = scmp.ne.s32.totalorder %s402, %s403
      %p414 = scmp.eq.s32.totalorder %s49, 0
      %p415 = por %p413, %p414
      %p416 = scmp.ne.s32.totalorder %s402, %s403
      %p417 = scmp.eq.s32.totalorder %s50, 2
      %p418 = por %p416, %p417
      %p420 = scmp.ne.s32.totalorder %s403, %s419
      %p421 = scmp.eq.s32.totalorder %s50, 0
      %p422 = por %p420, %p421
      %s423 = ssub.s32 %s44, %s51
      %p424 = scmp.eq.s32.totalorder %s423, 0
      %s426 = sadd.s32 %s425, 1
      %s427 = scalar_select %p424, %s425, %s426
      %p430 = pneg %p424
      %p431 = scmp.eq.s32.totalorder %s44, 2
      %p432 = por %p430, %p431
      %p433 = scmp.ne.s32.totalorder %s425, %s428
      %p434 = scmp.eq.s32.totalorder %s44, 0
      %p435 = por %p433, %p434
      %p436 = scmp.ne.s32.totalorder %s425, %s428
      %p437 = scmp.eq.s32.totalorder %s49, 2
      %p438 = por %p436, %p437
      %p439 = scmp.ne.s32.totalorder %s428, %s429
      %p440 = scmp.eq.s32.totalorder %s49, 0
      %p441 = por %p439, %p440
      %p442 = scmp.ne.s32.totalorder %s428, %s429
      %p443 = scmp.eq.s32.totalorder %s50, 2
      %p444 = por %p442, %p443
      %p446 = scmp.ne.s32.totalorder %s429, %s445
      %p447 = scmp.eq.s32.totalorder %s50, 0
      %p448 = por %p446, %p447
      %s449 = ssub.s32 %s44, %s51
      %p450 = scmp.eq.s32.totalorder %s449, 0
      %s452 = sadd.s32 %s451, 1
      %s453 = scalar_select %p450, %s451, %s452
      %p456 = pneg %p450
      %p457 = scmp.eq.s32.totalorder %s44, 2
      %p458 = por %p456, %p457
      %p459 = scmp.ne.s32.totalorder %s451, %s454
      %p460 = scmp.eq.s32.totalorder %s44, 0
      %p461 = por %p459, %p460
      %p462 = scmp.ne.s32.totalorder %s451, %s454
      %p463 = scmp.eq.s32.totalorder %s49, 2
      %p464 = por %p462, %p463
      %p465 = scmp.ne.s32.totalorder %s454, %s455
      %p466 = scmp.eq.s32.totalorder %s49, 0
      %p467 = por %p465, %p466
      %p468 = scmp.ne.s32.totalorder %s454, %s455
      %p469 = scmp.eq.s32.totalorder %s50, 2
      %p470 = por %p468, %p469
      %p472 = scmp.ne.s32.totalorder %s455, %s471
      %p473 = scmp.eq.s32.totalorder %s50, 0
      %p474 = por %p472, %p473
      %s475 = ssub.s32 %s44, %s51
      %p476 = scmp.eq.s32.totalorder %s475, 0
      %s478 = sadd.s32 %s477, 1
      %s479 = scalar_select %p476, %s477, %s478
      %p482 = pneg %p476
      %p483 = scmp.eq.s32.totalorder %s44, 2
      %p484 = por %p482, %p483
      %p485 = scmp.ne.s32.totalorder %s477, %s480
      %p486 = scmp.eq.s32.totalorder %s44, 0
      %p487 = por %p485, %p486
      %p488 = scmp.ne.s32.totalorder %s477, %s480
      %p489 = scmp.eq.s32.totalorder %s49, 2
      %p490 = por %p488, %p489
      %p491 = scmp.ne.s32.totalorder %s480, %s481
      %p492 = scmp.eq.s32.totalorder %s49, 0
      %p493 = por %p491, %p492
      %p494 = scmp.ne.s32.totalorder %s480, %s481
      %p495 = scmp.eq.s32.totalorder %s50, 2
      %p496 = por %p494, %p495
      %p498 = scmp.ne.s32.totalorder %s481, %s497
      %p499 = scmp.eq.s32.totalorder %s50, 0
      %p500 = por %p498, %p499
      %s501 = ssub.s32 %s44, %s51
      %p502 = scmp.eq.s32.totalorder %s501, 0
      %s504 = sadd.s32 %s503, 1
      %s505 = scalar_select %p502, %s503, %s504
      %p508 = pneg %p502
      %p509 = scmp.eq.s32.totalorder %s44, 2
      %p510 = por %p508, %p509
      %p511 = scmp.ne.s32.totalorder %s503, %s506
      %p512 = scmp.eq.s32.totalorder %s44, 0
      %p513 = por %p511, %p512
      %p514 = scmp.ne.s32.totalorder %s503, %s506
      %p515 = scmp.eq.s32.totalorder %s49, 2
      %p516 = por %p514, %p515
      %p517 = scmp.ne.s32.totalorder %s506, %s507
      %p518 = scmp.eq.s32.totalorder %s49, 0
      %p519 = por %p517, %p518
      %p520 = scmp.ne.s32.totalorder %s506, %s507
      %p521 = scmp.eq.s32.totalorder %s50, 2
      %p522 = por %p520, %p521
      %p524 = scmp.ne.s32.totalorder %s507, %s523
      %p525 = scmp.eq.s32.totalorder %s50, 0
      %p526 = por %p524, %p525
      %s527 = ssub.s32 %s44, %s51
      %p528 = scmp.eq.s32.totalorder %s527, 0
      %s530 = sadd.s32 %s529, 1
      %s531 = scalar_select %p528, %s529, %s530
      %p534 = pneg %p528
      %p535 = scmp.eq.s32.totalorder %s44, 2
      %p536 = por %p534, %p535
      %p537 = scmp.ne.s32.totalorder %s529, %s532
      %p538 = scmp.eq.s32.totalorder %s44, 0
      %p539 = por %p537, %p538
      %p540 = scmp.ne.s32.totalorder %s529, %s532
      %p541 = scmp.eq.s32.totalorder %s49, 2
      %p542 = por %p540, %p541
      %p543 = scmp.ne.s32.totalorder %s532, %s533
      %p544 = scmp.eq.s32.totalorder %s49, 0
      %p545 = por %p543, %p544
      %p546 = scmp.ne.s32.totalorder %s532, %s533
      %p547 = scmp.eq.s32.totalorder %s50, 2
      %p548 = por %p546, %p547
      %p550 = scmp.ne.s32.totalorder %s533, %s549
      %p551 = scmp.eq.s32.totalorder %s50, 0
      %p552 = por %p550, %p551
      %s554 = sadd.s32 %s553, 1
      %p557 = scmp.eq.s32.totalorder %s44, 2
      %p558 = scmp.ne.s32.totalorder %s553, %s555
      %p559 = scmp.eq.s32.totalorder %s44, 0
      %p560 = por %p558, %p559
      %p561 = scmp.ne.s32.totalorder %s553, %s555
      %p562 = scmp.eq.s32.totalorder %s49, 2
      %p563 = por %p561, %p562
      %p564 = scmp.ne.s32.totalorder %s555, %s556
      %p565 = scmp.eq.s32.totalorder %s49, 0
      %p566 = por %p564, %p565
      %p567 = scmp.ne.s32.totalorder %s555, %s556
      %p568 = scmp.eq.s32.totalorder %s50, 2
      %p569 = por %p567, %p568
      %p571 = scmp.ne.s32.totalorder %s556, %s570
      %p572 = scmp.eq.s32.totalorder %s50, 0
      %p573 = por %p571, %p572
      %s575 = sadd.s32 %s574, 1
      %p578 = scmp.eq.s32.totalorder %s44, 2
      %p579 = scmp.ne.s32.totalorder %s574, %s576
      %p580 = scmp.eq.s32.totalorder %s44, 0
      %p581 = por %p579, %p580
      %p582 = scmp.ne.s32.totalorder %s574, %s576
      %p583 = scmp.eq.s32.totalorder %s49, 2
      %p584 = por %p582, %p583
      %p585 = scmp.ne.s32.totalorder %s576, %s577
      %p586 = scmp.eq.s32.totalorder %s49, 0
      %p587 = por %p585, %p586
      %p588 = scmp.ne.s32.totalorder %s576, %s577
      %p589 = scmp.eq.s32.totalorder %s50, 2
      %p590 = por %p588, %p589
      %p592 = scmp.ne.s32.totalorder %s577, %s591
      %p593 = scmp.eq.s32.totalorder %s50, 0
      %p594 = por %p592, %p593
      %s596 = sadd.s32 %s595, 1
      %p599 = scmp.eq.s32.totalorder %s44, 2
      %p600 = scmp.ne.s32.totalorder %s595, %s597
      %p601 = scmp.eq.s32.totalorder %s44, 0
      %p602 = por %p600, %p601
      %p603 = scmp.ne.s32.totalorder %s595, %s597
      %p604 = scmp.eq.s32.totalorder %s49, 2
      %p605 = por %p603, %p604
      %p606 = scmp.ne.s32.totalorder %s597, %s598
      %p607 = scmp.eq.s32.totalorder %s49, 0
      %p608 = por %p606, %p607
      %p609 = scmp.ne.s32.totalorder %s597, %s598
      %p610 = scmp.eq.s32.totalorder %s50, 2
      %p611 = por %p609, %p610
      %p613 = scmp.ne.s32.totalorder %s598, %s612
      %p614 = scmp.eq.s32.totalorder %s50, 0
      %p615 = por %p613, %p614
      %p616 = scmp.le.s32.totalorder 1, %s44
      %p617 = scmp.lt.s32.totalorder %s44, 4
      %p618 = pnand %p616, %p617
      %p619 = pneg %p618
      // Predicated region
      $region9: #{tpu_custom_call.1} parent=5 // pred_check
        _
      $region10: #{tpu_custom_call.1} parent=5 // pred_check_branch
        %621 = sbr.rel (%p618) target = $region12
      $region11: #{tpu_custom_call.1} parent=5 // pred_region
        %s622 = ssub.s32 %s44, 1
        // Predicated region
        $region13: #{tpu_custom_call.1} parent=11 // pred_check
          %p623 = pneg %p65
        $region14: #{tpu_custom_call.1} parent=11 // pred_check_branch
          %625 = sbr.rel (%p623) target = $region16
        $region15: #{tpu_custom_call.1} parent=11 // pred_region
          %s627 = ssub.s32 2048, 2048
          %628 = vsyncadd [#allocation6], %s627
          %s629 = sshll.u32 [#allocation5], 4
          %s630 = int_to_ptr.vmem [resolvable:$true] %s629
          %635 = dma.hbm_to_vmem [thread:$0]  %s0, 2048, %s630, [#allocation6], 128, 128, 8
        $region16: #{tpu_custom_call.1} parent=11 // pred_fallthru
          _
        // Predicated region
        $region17: #{tpu_custom_call.1} parent=11 // pred_check
          %p636 = pneg %p86
        $region18: #{tpu_custom_call.1} parent=11 // pred_check_branch
          %638 = sbr.rel (%p636) target = $region20
        $region19: #{tpu_custom_call.1} parent=11 // pred_region
          %s640 = ssub.s32 1024, 1024
          %641 = vsyncadd [#allocation9], %s640
          %s642 = sshll.u32 [#allocation8], 4
          %s643 = int_to_ptr.vmem [resolvable:$true] %s642
          %648 = dma.hbm_to_vmem [thread:$0]  %s1, 1024, %s643, [#allocation9], 64, 64, 4
        $region20: #{tpu_custom_call.1} parent=11 // pred_fallthru
          _
        // Predicated region
        $region21: #{tpu_custom_call.1} parent=11 // pred_check
          %p649 = pneg %p107
        $region22: #{tpu_custom_call.1} parent=11 // pred_check_branch
          %651 = sbr.rel (%p649) target = $region24
        $region23: #{tpu_custom_call.1} parent=11 // pred_region
          %s653 = ssub.s32 1024, 1024
          %654 = vsyncadd [#allocation9], %s653
          %s655 = sshll.u32 [#allocation10], 4
          %s656 = int_to_ptr.vmem [resolvable:$true] %s655
          %661 = dma.hbm_to_vmem [thread:$0]  %s2, 1024, %s656, [#allocation9], 64, 64, 4
        $region24: #{tpu_custom_call.1} parent=11 // pred_fallthru
          _
        // Predicated region
        $region25: #{tpu_custom_call.1} parent=11 // pred_check
          %p662 = pneg %p128
        $region26: #{tpu_custom_call.1} parent=11 // pred_check_branch
          %664 = sbr.rel (%p662) target = $region28
        $region27: #{tpu_custom_call.1} parent=11 // pred_region
          %s666 = ssub.s32 16, 16
          %667 = vsyncadd [#allocation12], %s666
          %s669 = sshll.u32 [#allocation11], 4
          %s670 = int_to_ptr.vmem [resolvable:$true] %s669
          %672 = dma.hbm_to_vmem [thread:$0]  %s3, 16, %s670, [#allocation12]
        $region28: #{tpu_custom_call.1} parent=11 // pred_fallthru
          _
        // Predicated region
        $region29: #{tpu_custom_call.1} parent=11 // pred_check
          %p673 = pneg %p149
        $region30: #{tpu_custom_call.1} parent=11 // pred_check_branch
          %675 = sbr.rel (%p673) target = $region32
        $region31: #{tpu_custom_call.1} parent=11 // pred_region
          %s677 = ssub.s32 16, 16
          %678 = vsyncadd [#allocation12], %s677
          %s680 = sshll.u32 [#allocation13], 4
          %s681 = int_to_ptr.vmem [resolvable:$true] %s680
          %683 = dma.hbm_to_vmem [thread:$0]  %s4, 16, %s681, [#allocation12]
        $region32: #{tpu_custom_call.1} parent=11 // pred_fallthru
          _
        // Predicated region
        $region33: #{tpu_custom_call.1} parent=11 // pred_check
          %p684 = pneg %p170
        $region34: #{tpu_custom_call.1} parent=11 // pred_check_branch
          %686 = sbr.rel (%p684) target = $region36
        $region35: #{tpu_custom_call.1} parent=11 // pred_region
          %s688 = ssub.s32 1024, 1024
          %689 = vsyncadd [#allocation15], %s688
          %s690 = sshll.u32 [#allocation14], 4
          %s691 = int_to_ptr.vmem [resolvable:$true] %s690
          %696 = dma.hbm_to_vmem [thread:$0]  %s5, 1024, %s691, [#allocation15], 64, 64, 4
        $region36: #{tpu_custom_call.1} parent=11 // pred_fallthru
          _
        // Predicated region
        $region37: #{tpu_custom_call.1} parent=11 // pred_check
          %p697 = pneg %p191
        $region38: #{tpu_custom_call.1} parent=11 // pred_check_branch
          %699 = sbr.rel (%p697) target = $region40
        $region39: #{tpu_custom_call.1} parent=11 // pred_region
          %s701 = ssub.s32 1024, 1024
          %702 = vsyncadd [#allocation15], %s701
          %s703 = sshll.u32 [#allocation16], 4
          %s704 = int_to_ptr.vmem [resolvable:$true] %s703
          %709 = dma.hbm_to_vmem [thread:$0]  %s6, 1024, %s704, [#allocation15], 64, 64, 4
        $region40: #{tpu_custom_call.1} parent=11 // pred_fallthru
          _
        // Predicated region
        $region41: #{tpu_custom_call.1} parent=11 // pred_check
          %p710 = pneg %p212
        $region42: #{tpu_custom_call.1} parent=11 // pred_check_branch
          %712 = sbr.rel (%p710) target = $region44
        $region43: #{tpu_custom_call.1} parent=11 // pred_region
          %s714 = ssub.s32 16, 16
          %715 = vsyncadd [#allocation18], %s714
          %s717 = sshll.u32 [#allocation17], 4
          %s718 = int_to_ptr.vmem [resolvable:$true] %s717
          %720 = dma.hbm_to_vmem [thread:$0]  %s7, 16, %s718, [#allocation18]
        $region44: #{tpu_custom_call.1} parent=11 // pred_fallthru
          _
        // Predicated region
        $region45: #{tpu_custom_call.1} parent=11 // pred_check
          %p721 = pneg %p233
        $region46: #{tpu_custom_call.1} parent=11 // pred_check_branch
          %723 = sbr.rel (%p721) target = $region48
        $region47: #{tpu_custom_call.1} parent=11 // pred_region
          %s725 = ssub.s32 16, 16
          %726 = vsyncadd [#allocation18], %s725
          %s728 = sshll.u32 [#allocation19], 4
          %s729 = int_to_ptr.vmem [resolvable:$true] %s728
          %731 = dma.hbm_to_vmem [thread:$0]  %s8, 16, %s729, [#allocation18]
        $region48: #{tpu_custom_call.1} parent=11 // pred_fallthru
          _
        // Predicated region
        $region49: #{tpu_custom_call.1} parent=11 // pred_check
          %p732 = pneg %p566
        $region50: #{tpu_custom_call.1} parent=11 // pred_check_branch
          %734 = sbr.rel (%p732) target = $region52
        $region51: #{tpu_custom_call.1} parent=11 // pred_region
          %s736 = ssub.s32 1024, 1024
          %737 = vsyncadd [#allocation27], %s736
          %s738 = sshll.u32 [#allocation28], 4
          %s739 = int_to_ptr.vmem [resolvable:$true] %s738
          %744 = dma.hbm_to_vmem [thread:$0]  %s21, 1024, %s739, [#allocation27], 64, 64, 4
        $region52: #{tpu_custom_call.1} parent=11 // pred_fallthru
          _
        // Predicated region
        $region53: #{tpu_custom_call.1} parent=11 // pred_check
          %p745 = pneg %p587
        $region54: #{tpu_custom_call.1} parent=11 // pred_check_branch
          %747 = sbr.rel (%p745) target = $region56
        $region55: #{tpu_custom_call.1} parent=11 // pred_region
          _
        $region56: #{tpu_custom_call.1} parent=11 // pred_fallthru
          _
      $region12: #{tpu_custom_call.1} parent=5 // pred_fallthru
        _
      %p748 = scmp.lt.s32.totalorder %s44, 3
      // Predicated region
      $region57: #{tpu_custom_call.1} parent=5 // pred_check
        %p749 = pneg %p748
      $region58: #{tpu_custom_call.1} parent=5 // pred_check_branch
        %751 = sbr.rel (%p749) target = $region60
      $region59: #{tpu_custom_call.1} parent=5 // pred_region
        // Predicated region
        $region61: #{tpu_custom_call.1} parent=59 // pred_check
          %p752 = pneg %p253
        $region62: #{tpu_custom_call.1} parent=59 // pred_check_branch
          %754 = sbr.rel (%p752) target = $region64
        $region63: #{tpu_custom_call.1} parent=59 // pred_region
          %s755 = sand.u32 %s44, 1
          %s756 = scalar_lea.sflag [#allocation21], %s755
          %s757 = sand.u32 %s243, 1
          %s758 = smul.addr %s757, 64
          %s759 = scalar_lea.vmem [#allocation20], %s758
          %s761 = ssub.s32 1024, 1024
          %762 = vsyncadd %s756, %s761
          %s763 = smul.addr %s44, 16
          %s764 = smul.addr %s763, 64
          %s765 = scalar_lea.hbm %s9, %s764
          %s766 = sshll.u32 %s759, 4
          %s767 = int_to_ptr.vmem [resolvable:$true] %s766
          %772 = dma.hbm_to_vmem [thread:$0]  %s765, 1024, %s767, %s756, 64, 64, 4
        $region64: #{tpu_custom_call.1} parent=59 // pred_fallthru
          _
        // Predicated region
        $region65: #{tpu_custom_call.1} parent=59 // pred_check
          %p773 = pneg %p279
        $region66: #{tpu_custom_call.1} parent=59 // pred_check_branch
          %775 = sbr.rel (%p773) target = $region68
        $region67: #{tpu_custom_call.1} parent=59 // pred_region
          %p776 = scmp.lt.s32.totalorder %s44, 2
          %s777 = scalar_select %p776, %s44, 2
          %s778 = scalar_lea.vmem %s10, %s777
        $region68: #{tpu_custom_call.1} parent=59 // pred_fallthru
          _
        // Predicated region
        $region69: #{tpu_custom_call.1} parent=59 // pred_check
          %p779 = pneg %p305
        $region70: #{tpu_custom_call.1} parent=59 // pred_check_branch
          %781 = sbr.rel (%p779) target = $region72
        $region71: #{tpu_custom_call.1} parent=59 // pred_region
          %p782 = scmp.lt.s32.totalorder %s44, 2
          %s783 = scalar_select %p782, %s44, 2
          %s784 = scalar_lea.vmem %s11, %s783
        $region72: #{tpu_custom_call.1} parent=59 // pred_fallthru
          _
        // Predicated region
        $region73: #{tpu_custom_call.1} parent=59 // pred_check
          %p785 = pneg %p331
        $region74: #{tpu_custom_call.1} parent=59 // pred_check_branch
          %787 = sbr.rel (%p785) target = $region76
        $region75: #{tpu_custom_call.1} parent=59 // pred_region
          %p788 = scmp.lt.s32.totalorder %s44, 2
          %s789 = scalar_select %p788, %s44, 2
          %s790 = scalar_lea.vmem %s12, %s789
        $region76: #{tpu_custom_call.1} parent=59 // pred_fallthru
          _
        // Predicated region
        $region77: #{tpu_custom_call.1} parent=59 // pred_check
          %p791 = pneg %p357
        $region78: #{tpu_custom_call.1} parent=59 // pred_check_branch
          %793 = sbr.rel (%p791) target = $region80
        $region79: #{tpu_custom_call.1} parent=59 // pred_region
          %s794 = sand.u32 %s44, 1
          %s795 = scalar_lea.sflag [#allocation21], %s794
          %s796 = sand.u32 %s347, 1
          %s797 = smul.addr %s796, 64
          %s798 = scalar_lea.vmem [#allocation22], %s797
          %s800 = ssub.s32 1024, 1024
          %801 = vsyncadd %s795, %s800
          %s802 = smul.addr %s44, 16
          %s803 = smul.addr %s802, 64
          %s804 = scalar_lea.hbm %s13, %s803
          %s805 = sshll.u32 %s798, 4
          %s806 = int_to_ptr.vmem [resolvable:$true] %s805
          %811 = dma.hbm_to_vmem [thread:$0]  %s804, 1024, %s806, %s795, 64, 64, 4
        $region80: #{tpu_custom_call.1} parent=59 // pred_fallthru
          _
        // Predicated region
        $region81: #{tpu_custom_call.1} parent=59 // pred_check
          %p812 = pneg %p383
        $region82: #{tpu_custom_call.1} parent=59 // pred_check_branch
          %814 = sbr.rel (%p812) target = $region84
        $region83: #{tpu_custom_call.1} parent=59 // pred_region
          %s815 = sand.u32 %s44, 1
          %s816 = scalar_lea.sflag [#allocation24], %s815
          %s817 = sand.u32 %s373, 1
          %s818 = smul.addr %s817, 64
          %s819 = scalar_lea.vmem [#allocation23], %s818
          %s821 = ssub.s32 1024, 1024
          %822 = vsyncadd %s816, %s821
          %s823 = smul.addr %s44, 16
          %s824 = smul.addr %s823, 64
          %s825 = scalar_lea.hbm %s14, %s824
          %s826 = sshll.u32 %s819, 4
          %s827 = int_to_ptr.vmem [resolvable:$true] %s826
          %832 = dma.hbm_to_vmem [thread:$0]  %s825, 1024, %s827, %s816, 64, 64, 4
        $region84: #{tpu_custom_call.1} parent=59 // pred_fallthru
          _
        // Predicated region
        $region85: #{tpu_custom_call.1} parent=59 // pred_check
          %p833 = pneg %p409
        $region86: #{tpu_custom_call.1} parent=59 // pred_check_branch
          %835 = sbr.rel (%p833) target = $region88
        $region87: #{tpu_custom_call.1} parent=59 // pred_region
          %p836 = scmp.lt.s32.totalorder %s44, 2
          %s837 = scalar_select %p836, %s44, 2
          %s838 = scalar_lea.vmem %s15, %s837
        $region88: #{tpu_custom_call.1} parent=59 // pred_fallthru
          _
        // Predicated region
        $region89: #{tpu_custom_call.1} parent=59 // pred_check
          %p839 = pneg %p435
        $region90: #{tpu_custom_call.1} parent=59 // pred_check_branch
          %841 = sbr.rel (%p839) target = $region92
        $region91: #{tpu_custom_call.1} parent=59 // pred_region
          %p842 = scmp.lt.s32.totalorder %s44, 2
          %s843 = scalar_select %p842, %s44, 2
          %s844 = scalar_lea.vmem %s16, %s843
        $region92: #{tpu_custom_call.1} parent=59 // pred_fallthru
          _
        // Predicated region
        $region93: #{tpu_custom_call.1} parent=59 // pred_check
          %p845 = pneg %p461
        $region94: #{tpu_custom_call.1} parent=59 // pred_check_branch
          %847 = sbr.rel (%p845) target = $region96
        $region95: #{tpu_custom_call.1} parent=59 // pred_region
          %s848 = sand.u32 %s44, 1
          %s849 = scalar_lea.sflag [#allocation24], %s848
          %s850 = sand.u32 %s451, 1
          %s851 = smul.addr %s850, 64
          %s852 = scalar_lea.vmem [#allocation25], %s851
          %s854 = ssub.s32 1024, 1024
          %855 = vsyncadd %s849, %s854
          %s856 = smul.addr %s44, 16
          %s857 = smul.addr %s856, 64
          %s858 = scalar_lea.hbm %s17, %s857
          %s859 = sshll.u32 %s852, 4
          %s860 = int_to_ptr.vmem [resolvable:$true] %s859
          %865 = dma.hbm_to_vmem [thread:$0]  %s858, 1024, %s860, %s849, 64, 64, 4
        $region96: #{tpu_custom_call.1} parent=59 // pred_fallthru
          _
        // Predicated region
        $region97: #{tpu_custom_call.1} parent=59 // pred_check
          %p866 = pneg %p487
        $region98: #{tpu_custom_call.1} parent=59 // pred_check_branch
          %868 = sbr.rel (%p866) target = $region100
        $region99: #{tpu_custom_call.1} parent=59 // pred_region
          %s869 = sand.u32 %s44, 1
          %s870 = scalar_lea.sflag [#allocation27], %s869
          %s871 = sand.u32 %s477, 1
          %s872 = smul.addr %s871, 64
          %s873 = scalar_lea.vmem [#allocation26], %s872
          %s875 = ssub.s32 1024, 1024
          %876 = vsyncadd %s870, %s875
          %s877 = smul.addr %s44, 16
          %s878 = smul.addr %s877, 64
          %s879 = scalar_lea.hbm %s18, %s878
          %s880 = sshll.u32 %s873, 4
          %s881 = int_to_ptr.vmem [resolvable:$true] %s880
          %886 = dma.hbm_to_vmem [thread:$0]  %s879, 1024, %s881, %s870, 64, 64, 4
        $region100: #{tpu_custom_call.1} parent=59 // pred_fallthru
          _
        // Predicated region
        $region101: #{tpu_custom_call.1} parent=59 // pred_check
          %p887 = pneg %p513
        $region102: #{tpu_custom_call.1} parent=59 // pred_check_branch
          %889 = sbr.rel (%p887) target = $region104
        $region103: #{tpu_custom_call.1} parent=59 // pred_region
          %p890 = scmp.lt.s32.totalorder %s44, 2
          %s891 = scalar_select %p890, %s44, 2
          %s892 = scalar_lea.vmem %s19, %s891
        $region104: #{tpu_custom_call.1} parent=59 // pred_fallthru
          _
        // Predicated region
        $region105: #{tpu_custom_call.1} parent=59 // pred_check
          %p893 = pneg %p539
        $region106: #{tpu_custom_call.1} parent=59 // pred_check_branch
          %895 = sbr.rel (%p893) target = $region108
        $region107: #{tpu_custom_call.1} parent=59 // pred_region
          %p896 = scmp.lt.s32.totalorder %s44, 2
          %s897 = scalar_select %p896, %s44, 2
          %s898 = scalar_lea.vmem %s20, %s897
        $region108: #{tpu_custom_call.1} parent=59 // pred_fallthru
          _
      $region60: #{tpu_custom_call.1} parent=5 // pred_fallthru
        _
      %p899 = scmp.le.s32.totalorder 1, %s44
      %p900 = scmp.lt.s32.totalorder %s44, 4
      %p901 = pnand %p899, %p900
      %p902 = pneg %p901
      // Predicated region
      $region109: #{tpu_custom_call.1} parent=5 // pred_check
        _
      $region110: #{tpu_custom_call.1} parent=5 // pred_check_branch
        %904 = sbr.rel (%p901) target = $region112
      $region111: #{tpu_custom_call.1} parent=5 // pred_region
        %s905 = ssub.s32 %s44, 1
        // Predicated region
        $region113: #{tpu_custom_call.1} parent=111 // pred_check
          %p906 = pneg %p65
        $region114: #{tpu_custom_call.1} parent=111 // pred_check_branch
          %908 = sbr.rel (%p906) target = $region116
        $region115: #{tpu_custom_call.1} parent=111 // pred_region
          %909 = dma.done [#allocation6], 2048
        $region116: #{tpu_custom_call.1} parent=111 // pred_fallthru
          _
        // Predicated region
        $region117: #{tpu_custom_call.1} parent=111 // pred_check
          %p910 = pneg %p86
        $region118: #{tpu_custom_call.1} parent=111 // pred_check_branch
          %912 = sbr.rel (%p910) target = $region120
        $region119: #{tpu_custom_call.1} parent=111 // pred_region
          %913 = dma.done [#allocation9], 1024
        $region120: #{tpu_custom_call.1} parent=111 // pred_fallthru
          _
        // Predicated region
        $region121: #{tpu_custom_call.1} parent=111 // pred_check
          %p914 = pneg %p107
        $region122: #{tpu_custom_call.1} parent=111 // pred_check_branch
          %916 = sbr.rel (%p914) target = $region124
        $region123: #{tpu_custom_call.1} parent=111 // pred_region
          %917 = dma.done [#allocation9], 1024
        $region124: #{tpu_custom_call.1} parent=111 // pred_fallthru
          _
        // Predicated region
        $region125: #{tpu_custom_call.1} parent=111 // pred_check
          %p918 = pneg %p128
        $region126: #{tpu_custom_call.1} parent=111 // pred_check_branch
          %920 = sbr.rel (%p918) target = $region128
        $region127: #{tpu_custom_call.1} parent=111 // pred_region
          %921 = dma.done [#allocation12], 16
        $region128: #{tpu_custom_call.1} parent=111 // pred_fallthru
          _
        // Predicated region
        $region129: #{tpu_custom_call.1} parent=111 // pred_check
          %p922 = pneg %p149
        $region130: #{tpu_custom_call.1} parent=111 // pred_check_branch
          %924 = sbr.rel (%p922) target = $region132
        $region131: #{tpu_custom_call.1} parent=111 // pred_region
          %925 = dma.done [#allocation12], 16
        $region132: #{tpu_custom_call.1} parent=111 // pred_fallthru
          _
        // Predicated region
        $region133: #{tpu_custom_call.1} parent=111 // pred_check
          %p926 = pneg %p170
        $region134: #{tpu_custom_call.1} parent=111 // pred_check_branch
          %928 = sbr.rel (%p926) target = $region136
        $region135: #{tpu_custom_call.1} parent=111 // pred_region
          %929 = dma.done [#allocation15], 1024
        $region136: #{tpu_custom_call.1} parent=111 // pred_fallthru
          _
        // Predicated region
        $region137: #{tpu_custom_call.1} parent=111 // pred_check
          %p930 = pneg %p191
        $region138: #{tpu_custom_call.1} parent=111 // pred_check_branch
          %932 = sbr.rel (%p930) target = $region140
        $region139: #{tpu_custom_call.1} parent=111 // pred_region
          %933 = dma.done [#allocation15], 1024
        $region140: #{tpu_custom_call.1} parent=111 // pred_fallthru
          _
        // Predicated region
        $region141: #{tpu_custom_call.1} parent=111 // pred_check
          %p934 = pneg %p212
        $region142: #{tpu_custom_call.1} parent=111 // pred_check_branch
          %936 = sbr.rel (%p934) target = $region144
        $region143: #{tpu_custom_call.1} parent=111 // pred_region
          %937 = dma.done [#allocation18], 16
        $region144: #{tpu_custom_call.1} parent=111 // pred_fallthru
          _
        // Predicated region
        $region145: #{tpu_custom_call.1} parent=111 // pred_check
          %p938 = pneg %p233
        $region146: #{tpu_custom_call.1} parent=111 // pred_check_branch
          %940 = sbr.rel (%p938) target = $region148
        $region147: #{tpu_custom_call.1} parent=111 // pred_region
          %941 = dma.done [#allocation18], 16
        $region148: #{tpu_custom_call.1} parent=111 // pred_fallthru
          _
        %s942 = sand.u32 %s49, 1
        %s943 = scalar_lea.sflag [#allocation21], %s942
        %s944 = sand.u32 %s246, 1
        %s945 = smul.addr %s944, 64
        %s946 = scalar_lea.vmem [#allocation20], %s945
        // Predicated region
        $region149: #{tpu_custom_call.1} parent=111 // pred_check
          %p947 = pneg %p259
        $region150: #{tpu_custom_call.1} parent=111 // pred_check_branch
          %949 = sbr.rel (%p947) target = $region152
        $region151: #{tpu_custom_call.1} parent=111 // pred_region
          %950 = dma.done %s943, 1024
        $region152: #{tpu_custom_call.1} parent=111 // pred_fallthru
          _
        %s951 = sand.u32 %s49, 1
        %s952 = scalar_lea.sflag [#allocation21], %s951
        %s953 = sand.u32 %s350, 1
        %s954 = smul.addr %s953, 64
        %s955 = scalar_lea.vmem [#allocation22], %s954
        // Predicated region
        $region153: #{tpu_custom_call.1} parent=111 // pred_check
          %p956 = pneg %p363
        $region154: #{tpu_custom_call.1} parent=111 // pred_check_branch
          %958 = sbr.rel (%p956) target = $region156
        $region155: #{tpu_custom_call.1} parent=111 // pred_region
          %959 = dma.done %s952, 1024
        $region156: #{tpu_custom_call.1} parent=111 // pred_fallthru
          _
        %s960 = sand.u32 %s49, 1
        %s961 = scalar_lea.sflag [#allocation24], %s960
        %s962 = sand.u32 %s376, 1
        %s963 = smul.addr %s962, 64
        %s964 = scalar_lea.vmem [#allocation23], %s963
        // Predicated region
        $region157: #{tpu_custom_call.1} parent=111 // pred_check
          %p965 = pneg %p389
        $region158: #{tpu_custom_call.1} parent=111 // pred_check_branch
          %967 = sbr.rel (%p965) target = $region160
        $region159: #{tpu_custom_call.1} parent=111 // pred_region
          %968 = dma.done %s961, 1024
        $region160: #{tpu_custom_call.1} parent=111 // pred_fallthru
          _
        %s969 = sand.u32 %s49, 1
        %s970 = scalar_lea.sflag [#allocation24], %s969
        %s971 = sand.u32 %s454, 1
        %s972 = smul.addr %s971, 64
        %s973 = scalar_lea.vmem [#allocation25], %s972
        // Predicated region
        $region161: #{tpu_custom_call.1} parent=111 // pred_check
          %p974 = pneg %p467
        $region162: #{tpu_custom_call.1} parent=111 // pred_check_branch
          %976 = sbr.rel (%p974) target = $region164
        $region163: #{tpu_custom_call.1} parent=111 // pred_region
          %977 = dma.done %s970, 1024
        $region164: #{tpu_custom_call.1} parent=111 // pred_fallthru
          _
        %s978 = sand.u32 %s49, 1
        %s979 = scalar_lea.sflag [#allocation27], %s978
        %s980 = sand.u32 %s480, 1
        %s981 = smul.addr %s980, 64
        %s982 = scalar_lea.vmem [#allocation26], %s981
        // Predicated region
        $region165: #{tpu_custom_call.1} parent=111 // pred_check
          %p983 = pneg %p493
        $region166: #{tpu_custom_call.1} parent=111 // pred_check_branch
          %985 = sbr.rel (%p983) target = $region168
        $region167: #{tpu_custom_call.1} parent=111 // pred_region
          %986 = dma.done %s979, 1024
        $region168: #{tpu_custom_call.1} parent=111 // pred_fallthru
          _
        // Predicated region
        $region169: #{tpu_custom_call.1} parent=111 // pred_check
          %p987 = pneg %p566
        $region170: #{tpu_custom_call.1} parent=111 // pred_check_branch
          %989 = sbr.rel (%p987) target = $region172
        $region171: #{tpu_custom_call.1} parent=111 // pred_region
          %990 = dma.done [#allocation27], 1024
        $region172: #{tpu_custom_call.1} parent=111 // pred_fallthru
          _
        %p991 = pneg %p65
        %p992 = pneg %p62
        %p993 = pneg %p86
        %p994 = pneg %p83
        %p995 = pneg %p107
        %p996 = pneg %p104
        %p997 = pneg %p128
        %p998 = pneg %p125
        %p999 = pneg %p149
        %p1000 = pneg %p146
        %p1001 = pneg %p170
        %p1002 = pneg %p167
        %p1003 = pneg %p191
        %p1004 = pneg %p188
        %p1005 = pneg %p212
        %p1006 = pneg %p209
        %p1007 = pneg %p233
        %p1008 = pneg %p230
        %s1009 = sand.u32 %s49, 1
        %s1010 = scalar_lea.sflag [#allocation21], %s1009
        %s1011 = sand.u32 %s246, 1
        %s1012 = smul.addr %s1011, 64
        %s1013 = scalar_lea.vmem [#allocation20], %s1012
        %p1014 = pneg %p259
        %p1015 = pneg %p256
        %p1016 = scmp.lt.s32.totalorder %s49, 2
        %s1017 = scalar_select %p1016, %s49, 2
        %s1018 = scalar_lea.vmem %s10, %s1017
        %p1019 = pneg %p285
        %p1020 = pneg %p282
        %p1021 = scmp.lt.s32.totalorder %s49, 2
        %s1022 = scalar_select %p1021, %s49, 2
        %s1023 = scalar_lea.vmem %s11, %s1022
        %p1024 = pneg %p311
        %p1025 = pneg %p308
        %p1026 = scmp.lt.s32.totalorder %s49, 2
        %s1027 = scalar_select %p1026, %s49, 2
        %s1028 = scalar_lea.vmem %s12, %s1027
        %p1029 = pneg %p337
        %p1030 = pneg %p334
        %s1031 = sand.u32 %s49, 1
        %s1032 = scalar_lea.sflag [#allocation21], %s1031
        %s1033 = sand.u32 %s350, 1
        %s1034 = smul.addr %s1033, 64
        %s1035 = scalar_lea.vmem [#allocation22], %s1034
        %p1036 = pneg %p363
        %p1037 = pneg %p360
        %s1038 = sand.u32 %s49, 1
        %s1039 = scalar_lea.sflag [#allocation24], %s1038
        %s1040 = sand.u32 %s376, 1
        %s1041 = smul.addr %s1040, 64
        %s1042 = scalar_lea.vmem [#allocation23], %s1041
        %p1043 = pneg %p389
        %p1044 = pneg %p386
        %p1045 = scmp.lt.s32.totalorder %s49, 2
        %s1046 = scalar_select %p1045, %s49, 2
        %s1047 = scalar_lea.vmem %s15, %s1046
        %p1048 = pneg %p415
        %p1049 = pneg %p412
        %p1050 = scmp.lt.s32.totalorder %s49, 2
        %s1051 = scalar_select %p1050, %s49, 2
        %s1052 = scalar_lea.vmem %s16, %s1051
        %p1053 = pneg %p441
        %p1054 = pneg %p438
        %s1055 = sand.u32 %s49, 1
        %s1056 = scalar_lea.sflag [#allocation24], %s1055
        %s1057 = sand.u32 %s454, 1
        %s1058 = smul.addr %s1057, 64
        %s1059 = scalar_lea.vmem [#allocation25], %s1058
        %p1060 = pneg %p467
        %p1061 = pneg %p464
        %s1062 = sand.u32 %s49, 1
        %s1063 = scalar_lea.sflag [#allocation27], %s1062
        %s1064 = sand.u32 %s480, 1
        %s1065 = smul.addr %s1064, 64
        %s1066 = scalar_lea.vmem [#allocation26], %s1065
        %p1067 = pneg %p493
        %p1068 = pneg %p490
        %p1069 = scmp.lt.s32.totalorder %s49, 2
        %s1070 = scalar_select %p1069, %s49, 2
        %s1071 = scalar_lea.vmem %s19, %s1070
        %p1072 = pneg %p519
        %p1073 = pneg %p516
        %p1074 = scmp.lt.s32.totalorder %s49, 2
        %s1075 = scalar_select %p1074, %s49, 2
        %s1076 = scalar_lea.vmem %s20, %s1075
        %p1077 = pneg %p545
        %p1078 = pneg %p542
        %p1079 = pneg %p566
        %p1080 = pneg %p563
        %p1081 = pneg %p587
        %p1082 = pneg %p584
        %p1083 = pneg %p608
        %p1084 = pneg %p605
        %p1085 = scmp.lt.s32.totalorder %s49, 2
        %s1086 = scalar_select %p1085, %s49, 2
        %s1087 = scalar_lea.vmem %s10, %s1086
        %p1088 = scmp.lt.s32.totalorder %s49, 2
        %s1089 = scalar_select %p1088, %s49, 2
        %s1090 = scalar_lea.vmem %s11, %s1089
        %p1091 = scmp.lt.s32.totalorder %s49, 2
        %s1092 = scalar_select %p1091, %s49, 2
        %s1093 = scalar_lea.vmem %s12, %s1092
        %p1094 = scmp.lt.s32.totalorder %s49, 2
        %s1095 = scalar_select %p1094, %s49, 2
        %s1096 = scalar_lea.vmem %s15, %s1095
        %p1097 = scmp.lt.s32.totalorder %s49, 2
        %s1098 = scalar_select %p1097, %s49, 2
        %s1099 = scalar_lea.vmem %s16, %s1098
        %p1100 = scmp.lt.s32.totalorder %s49, 2
        %s1101 = scalar_select %p1100, %s49, 2
        %s1102 = scalar_lea.vmem %s19, %s1101
        %p1103 = scmp.lt.s32.totalorder %s49, 2
        %s1104 = scalar_select %p1103, %s49, 2
        %s1105 = scalar_lea.vmem %s20, %s1104
        %p1107 = scmp.eq.s32.totalorder %s49, 0
        // Predicated region
        $region173: #{tpu_custom_call.1} parent=111 // pred_check
          %p1108 = pneg %p1107
        $region174: #{tpu_custom_call.1} parent=111 // pred_check_branch
          %1110 = sbr.rel (%p1108) target = $region176
        $region175: #{tpu_custom_call.1} parent=111 // pred_region
          %v1111 = vld [vmem:[#allocation5] sm:$0xff]
          %v1112 = vld [vmem:[#allocation5 + $0x8] sm:$0xff]
          %v1113 = vld [vmem:[#allocation5 + $0x10] sm:$0xff]
          %v1114 = vld [vmem:[#allocation5 + $0x18] sm:$0xff]
          %v1115 = vld [vmem:[#allocation5 + $0x20] sm:$0xff]
          %v1116 = vld [vmem:[#allocation5 + $0x28] sm:$0xff]
          %v1117 = vld [vmem:[#allocation5 + $0x30] sm:$0xff]
          %v1118 = vld [vmem:[#allocation5 + $0x38] sm:$0xff]
          %v1119 = vld [vmem:[#allocation5 + $0x40] sm:$0xff]
          %v1120 = vld [vmem:[#allocation5 + $0x48] sm:$0xff]
          %v1121 = vld [vmem:[#allocation5 + $0x50] sm:$0xff]
          %v1122 = vld [vmem:[#allocation5 + $0x58] sm:$0xff]
          %v1123 = vld [vmem:[#allocation5 + $0x60] sm:$0xff]
          %v1124 = vld [vmem:[#allocation5 + $0x68] sm:$0xff]
          %v1125 = vld [vmem:[#allocation5 + $0x70] sm:$0xff]
          %v1126 = vld [vmem:[#allocation5 + $0x78] sm:$0xff]
          %v1127 = vld [vmem:[#allocation8] sm:$0xf]
          %v1128 = vld [vmem:[#allocation8 + $0x4] sm:$0xf]
          %v1129 = vld [vmem:[#allocation8 + $0x8] sm:$0xf]
          %v1130 = vld [vmem:[#allocation8 + $0xc] sm:$0xf]
          %v1131 = vld [vmem:[#allocation8 + $0x10] sm:$0xf]
          %v1132 = vld [vmem:[#allocation8 + $0x14] sm:$0xf]
          %v1133 = vld [vmem:[#allocation8 + $0x18] sm:$0xf]
          %v1134 = vld [vmem:[#allocation8 + $0x1c] sm:$0xf]
          %v1135 = vld [vmem:[#allocation8 + $0x20] sm:$0xf]
          %v1136 = vld [vmem:[#allocation8 + $0x24] sm:$0xf]
          %v1137 = vld [vmem:[#allocation8 + $0x28] sm:$0xf]
          %v1138 = vld [vmem:[#allocation8 + $0x2c] sm:$0xf]
          %v1139 = vld [vmem:[#allocation8 + $0x30] sm:$0xf]
          %v1140 = vld [vmem:[#allocation8 + $0x34] sm:$0xf]
          %v1141 = vld [vmem:[#allocation8 + $0x38] sm:$0xf]
          %v1142 = vld [vmem:[#allocation8 + $0x3c] sm:$0xf]
          %v1143 = vld [vmem:[#allocation10] sm:$0xf]
          %v1144 = vld [vmem:[#allocation10 + $0x4] sm:$0xf]
          %v1145 = vld [vmem:[#allocation10 + $0x8] sm:$0xf]
          %v1146 = vld [vmem:[#allocation10 + $0xc] sm:$0xf]
          %v1147 = vld [vmem:[#allocation10 + $0x10] sm:$0xf]
          %v1148 = vld [vmem:[#allocation10 + $0x14] sm:$0xf]
          %v1149 = vld [vmem:[#allocation10 + $0x18] sm:$0xf]
          %v1150 = vld [vmem:[#allocation10 + $0x1c] sm:$0xf]
          %v1151 = vld [vmem:[#allocation10 + $0x20] sm:$0xf]
          %v1152 = vld [vmem:[#allocation10 + $0x24] sm:$0xf]
          %v1153 = vld [vmem:[#allocation10 + $0x28] sm:$0xf]
          %v1154 = vld [vmem:[#allocation10 + $0x2c] sm:$0xf]
          %v1155 = vld [vmem:[#allocation10 + $0x30] sm:$0xf]
          %v1156 = vld [vmem:[#allocation10 + $0x34] sm:$0xf]
          %v1157 = vld [vmem:[#allocation10 + $0x38] sm:$0xf]
          %v1158 = vld [vmem:[#allocation10 + $0x3c] sm:$0xf]
          %v1159 = vld [vmem:[#allocation11] sm:$0x1]
          %v1160 = vld [vmem:[#allocation13] sm:$0x1]
          %v1161 = vpack.c.bf16 %v1112, %v1111
          %v1162 = vpack.c.bf16 %v1114, %v1113
          %v1163 = vpack.c.bf16 %v1116, %v1115
          %v1164 = vpack.c.bf16 %v1118, %v1117
          %v1165 = vpack.c.bf16 %v1120, %v1119
          %v1166 = vpack.c.bf16 %v1122, %v1121
          %v1167 = vpack.c.bf16 %v1124, %v1123
          %v1168 = vpack.c.bf16 %v1126, %v1125
          %v1170 = vlaneseq
          %v1171 = vshrl.u32 %v1170, 7
          %v1172 = vsub.s32 0, %v1171
          %v1173 = vrot.slane %v1159, %v1172
          %v1191 = vunpack.c.l.b16 %v1127
          %v1192 = vunpack.c.l.b16 %v1128
          %v1193 = vunpack.c.l.b16 %v1129
          %v1194 = vunpack.c.l.b16 %v1130
          %v1195 = vunpack.c.l.b16 %v1131
          %v1196 = vunpack.c.l.b16 %v1132
          %v1197 = vunpack.c.l.b16 %v1133
          %v1198 = vunpack.c.l.b16 %v1134
          %v1199 = vunpack.c.l.b16 %v1135
          %v1200 = vunpack.c.l.b16 %v1136
          %v1201 = vunpack.c.l.b16 %v1137
          %v1202 = vunpack.c.l.b16 %v1138
          %v1203 = vunpack.c.l.b16 %v1139
          %v1204 = vunpack.c.l.b16 %v1140
          %v1205 = vunpack.c.l.b16 %v1141
          %v1206 = vunpack.c.l.b16 %v1142
          %v1207 = vpack.c.b16 %v1192, %v1191
          %v1208 = vpack.c.b16 %v1194, %v1193
          %v1209 = vpack.c.b16 %v1196, %v1195
          %v1210 = vpack.c.b16 %v1198, %v1197
          %v1211 = vpack.c.b16 %v1200, %v1199
          %v1212 = vpack.c.b16 %v1202, %v1201
          %v1213 = vpack.c.b16 %v1204, %v1203
          %v1214 = vpack.c.b16 %v1206, %v1205
          %1223 = vmatprep.subr.bf16.mxu0 0
          %1224 = vmatpush1.bf16.msra.mxu0 %v1214
          %1225 = vmatprep.subr.bf16.mxu0 0
          %1226 = vmatpush1.bf16.msra.mxu0 %v1213
          %1227 = vmatprep.subr.bf16.mxu0 0
          %1228 = vmatpush1.bf16.msra.mxu0 %v1212
          %1229 = vmatprep.subr.bf16.mxu0 0
          %1230 = vmatpush1.bf16.msra.mxu0 %v1211
          %1231 = vmatprep.subr.bf16.mxu0 0
          %1232 = vmatpush1.bf16.msra.mxu0 %v1210
          %1233 = vmatprep.subr.bf16.mxu0 0
          %1234 = vmatpush1.bf16.msra.mxu0 %v1209
          %1235 = vmatprep.subr.bf16.mxu0 0
          %1236 = vmatpush1.bf16.msra.mxu0 %v1208
          %1237 = vmatprep.subr.bf16.mxu0 0
          %1238 = vmatpush1.bf16.msra.mxu0 %v1207
          %1239 = vmatprep.subr.bf16.mxu0 0
          %1240 = vmatpush2.bf16.msra.mxu0 0
          %1241 = vmatprep.subr.bf16.mxu0 0
          %1242 = vmatpush2.bf16.msra.mxu0 0
          %1243 = vmatprep.subr.bf16.mxu0 0
          %1244 = vmatpush2.bf16.msra.mxu0 0
          %1245 = vmatprep.subr.bf16.mxu0 0
          %1246 = vmatpush2.bf16.msra.mxu0 0
          %1247 = vmatprep.subr.bf16.mxu0 0
          %1248 = vmatpush2.bf16.msra.mxu0 0
          %1249 = vmatprep.subr.bf16.mxu0 0
          %1250 = vmatpush2.bf16.msra.mxu0 0
          %1251 = vmatprep.subr.bf16.mxu0 0
          %1252 = vmatpush2.bf16.msra.mxu0 0
          %1253 = vmatprep.subr.bf16.mxu0 0
          %1254 = vmatpush2.bf16.msra.mxu0 0
          %1255 = vmatprep.mubr.bf16.mxu0 0
          %1256 = vmatmul.mubr.bf16.gmra.mxu0 %v1161
          %v1257 = vpop.f32.mrf.mxu0
          %v1258 = vadd.f32 %v1173, %v1257
          %v1259 = vpop.f32.mrf.mxu0
          %v1260 = vpop.f32.mrf.mxu0
          %v1261 = vadd.f32 %v1173, %v1260
          %v1262 = vpop.f32.mrf.mxu0
          %1263 = vmatprep.mubr.bf16.mxu0 0
          %1264 = vmatmul.mubr.bf16.gmra.mxu0 %v1162
          %v1265 = vpop.f32.mrf.mxu0
          %v1266 = vadd.f32 %v1173, %v1265
          %v1267 = vpop.f32.mrf.mxu0
          %v1268 = vpop.f32.mrf.mxu0
          %v1269 = vadd.f32 %v1173, %v1268
          %v1270 = vpop.f32.mrf.mxu0
          %1271 = vmatprep.mubr.bf16.mxu0 0
          %1272 = vmatmul.mubr.bf16.gmra.mxu0 %v1163
          %v1273 = vpop.f32.mrf.mxu0
          %v1274 = vadd.f32 %v1173, %v1273
          %v1275 = vpop.f32.mrf.mxu0
          %v1276 = vpop.f32.mrf.mxu0
          %v1277 = vadd.f32 %v1173, %v1276
          %v1278 = vpop.f32.mrf.mxu0
          %1279 = vmatprep.mubr.bf16.mxu0 0
          %1280 = vmatmul.mubr.bf16.gmra.mxu0 %v1164
          %v1281 = vpop.f32.mrf.mxu0
          %v1282 = vadd.f32 %v1173, %v1281
          %v1283 = vpop.f32.mrf.mxu0
          %v1284 = vpop.f32.mrf.mxu0
          %v1285 = vadd.f32 %v1173, %v1284
          %v1286 = vpop.f32.mrf.mxu0
          %1287 = vmatprep.mubr.bf16.mxu0 0
          %1288 = vmatmul.mubr.bf16.gmra.mxu0 %v1165
          %v1289 = vpop.f32.mrf.mxu0
          %v1290 = vadd.f32 %v1173, %v1289
          %v1291 = vpop.f32.mrf.mxu0
          %v1292 = vpop.f32.mrf.mxu0
          %v1293 = vadd.f32 %v1173, %v1292
          %v1294 = vpop.f32.mrf.mxu0
          %1295 = vmatprep.mubr.bf16.mxu0 0
          %1296 = vmatmul.mubr.bf16.gmra.mxu0 %v1166
          %v1297 = vpop.f32.mrf.mxu0
          %v1298 = vadd.f32 %v1173, %v1297
          %v1299 = vpop.f32.mrf.mxu0
          %v1300 = vpop.f32.mrf.mxu0
          %v1301 = vadd.f32 %v1173, %v1300
          %v1302 = vpop.f32.mrf.mxu0
          %1303 = vmatprep.mubr.bf16.mxu0 0
          %1304 = vmatmul.mubr.bf16.gmra.mxu0 %v1167
          %v1305 = vpop.f32.mrf.mxu0
          %v1306 = vadd.f32 %v1173, %v1305
          %v1307 = vpop.f32.mrf.mxu0
          %v1308 = vpop.f32.mrf.mxu0
          %v1309 = vadd.f32 %v1173, %v1308
          %v1310 = vpop.f32.mrf.mxu0
          %1311 = vmatprep.mubr.bf16.mxu0 0
          %1312 = vmatmul.mubr.bf16.gmra.mxu0 %v1168
          %v1313 = vpop.f32.mrf.mxu0
          %v1314 = vadd.f32 %v1173, %v1313
          %v1315 = vpop.f32.mrf.mxu0
          %v1316 = vpop.f32.mrf.mxu0
          %v1317 = vadd.f32 %v1173, %v1316
          %v1318 = vpop.f32.mrf.mxu0
          %1319 = vdwg.mxu0
          %v1321 = vlaneseq
          %v1322 = vshrl.u32 %v1321, 7
          %v1323 = vsub.s32 0, %v1322
          %v1324 = vrot.slane %v1160, %v1323
          %v1342 = vunpack.c.l.b16 %v1143
          %v1343 = vunpack.c.l.b16 %v1144
          %v1344 = vunpack.c.l.b16 %v1145
          %v1345 = vunpack.c.l.b16 %v1146
          %v1346 = vunpack.c.l.b16 %v1147
          %v1347 = vunpack.c.l.b16 %v1148
          %v1348 = vunpack.c.l.b16 %v1149
          %v1349 = vunpack.c.l.b16 %v1150
          %v1350 = vunpack.c.l.b16 %v1151
          %v1351 = vunpack.c.l.b16 %v1152
          %v1352 = vunpack.c.l.b16 %v1153
          %v1353 = vunpack.c.l.b16 %v1154
          %v1354 = vunpack.c.l.b16 %v1155
          %v1355 = vunpack.c.l.b16 %v1156
          %v1356 = vunpack.c.l.b16 %v1157
          %v1357 = vunpack.c.l.b16 %v1158
          %v1358 = vpack.c.b16 %v1343, %v1342
          %v1359 = vpack.c.b16 %v1345, %v1344
          %v1360 = vpack.c.b16 %v1347, %v1346
          %v1361 = vpack.c.b16 %v1349, %v1348
          %v1362 = vpack.c.b16 %v1351, %v1350
          %v1363 = vpack.c.b16 %v1353, %v1352
          %v1364 = vpack.c.b16 %v1355, %v1354
          %v1365 = vpack.c.b16 %v1357, %v1356
          %1374 = vmatprep.subr.bf16.mxu0 0
          %1375 = vmatpush1.bf16.msra.mxu0 %v1365
          %1376 = vmatprep.subr.bf16.mxu0 0
          %1377 = vmatpush1.bf16.msra.mxu0 %v1364
          %1378 = vmatprep.subr.bf16.mxu0 0
          %1379 = vmatpush1.bf16.msra.mxu0 %v1363
          %1380 = vmatprep.subr.bf16.mxu0 0
          %1381 = vmatpush1.bf16.msra.mxu0 %v1362
          %1382 = vmatprep.subr.bf16.mxu0 0
          %1383 = vmatpush1.bf16.msra.mxu0 %v1361
          %1384 = vmatprep.subr.bf16.mxu0 0
          %1385 = vmatpush1.bf16.msra.mxu0 %v1360
          %1386 = vmatprep.subr.bf16.mxu0 0
          %1387 = vmatpush1.bf16.msra.mxu0 %v1359
          %1388 = vmatprep.subr.bf16.mxu0 0
          %1389 = vmatpush1.bf16.msra.mxu0 %v1358
          %1390 = vmatprep.subr.bf16.mxu0 0
          %1391 = vmatpush2.bf16.msra.mxu0 0
          %1392 = vmatprep.subr.bf16.mxu0 0
          %1393 = vmatpush2.bf16.msra.mxu0 0
          %1394 = vmatprep.subr.bf16.mxu0 0
          %1395 = vmatpush2.bf16.msra.mxu0 0
          %1396 = vmatprep.subr.bf16.mxu0 0
          %1397 = vmatpush2.bf16.msra.mxu0 0
          %1398 = vmatprep.subr.bf16.mxu0 0
          %1399 = vmatpush2.bf16.msra.mxu0 0
          %1400 = vmatprep.subr.bf16.mxu0 0
          %1401 = vmatpush2.bf16.msra.mxu0 0
          %1402 = vmatprep.subr.bf16.mxu0 0
          %1403 = vmatpush2.bf16.msra.mxu0 0
          %1404 = vmatprep.subr.bf16.mxu0 0
          %1405 = vmatpush2.bf16.msra.mxu0 0
          %1406 = vmatprep.mubr.bf16.mxu0 0
          %1407 = vmatmul.mubr.bf16.gmra.mxu0 %v1161
          %v1408 = vpop.f32.mrf.mxu0
          %v1409 = vadd.f32 %v1324, %v1408
          %v1410 = vpop.f32.mrf.mxu0
          %v1411 = vpop.f32.mrf.mxu0
          %v1412 = vadd.f32 %v1324, %v1411
          %v1413 = vpop.f32.mrf.mxu0
          %1414 = vmatprep.mubr.bf16.mxu0 0
          %1415 = vmatmul.mubr.bf16.gmra.mxu0 %v1162
          %v1416 = vpop.f32.mrf.mxu0
          %v1417 = vadd.f32 %v1324, %v1416
          %v1418 = vpop.f32.mrf.mxu0
          %v1419 = vpop.f32.mrf.mxu0
          %v1420 = vadd.f32 %v1324, %v1419
          %v1421 = vpop.f32.mrf.mxu0
          %1422 = vmatprep.mubr.bf16.mxu0 0
          %1423 = vmatmul.mubr.bf16.gmra.mxu0 %v1163
          %v1424 = vpop.f32.mrf.mxu0
          %v1425 = vadd.f32 %v1324, %v1424
          %v1426 = vpop.f32.mrf.mxu0
          %v1427 = vpop.f32.mrf.mxu0
          %v1428 = vadd.f32 %v1324, %v1427
          %v1429 = vpop.f32.mrf.mxu0
          %1430 = vmatprep.mubr.bf16.mxu0 0
          %1431 = vmatmul.mubr.bf16.gmra.mxu0 %v1164
          %v1432 = vpop.f32.mrf.mxu0
          %v1433 = vadd.f32 %v1324, %v1432
          %v1434 = vpop.f32.mrf.mxu0
          %v1435 = vpop.f32.mrf.mxu0
          %v1436 = vadd.f32 %v1324, %v1435
          %v1437 = vpop.f32.mrf.mxu0
          %1438 = vmatprep.mubr.bf16.mxu0 0
          %1439 = vmatmul.mubr.bf16.gmra.mxu0 %v1165
          %v1440 = vpop.f32.mrf.mxu0
          %v1441 = vadd.f32 %v1324, %v1440
          %v1442 = vpop.f32.mrf.mxu0
          %v1443 = vpop.f32.mrf.mxu0
          %v1444 = vadd.f32 %v1324, %v1443
          %v1445 = vpop.f32.mrf.mxu0
          %1446 = vmatprep.mubr.bf16.mxu0 0
          %1447 = vmatmul.mubr.bf16.gmra.mxu0 %v1166
          %v1448 = vpop.f32.mrf.mxu0
          %v1449 = vadd.f32 %v1324, %v1448
          %v1450 = vpop.f32.mrf.mxu0
          %v1451 = vpop.f32.mrf.mxu0
          %v1452 = vadd.f32 %v1324, %v1451
          %v1453 = vpop.f32.mrf.mxu0
          %1454 = vmatprep.mubr.bf16.mxu0 0
          %1455 = vmatmul.mubr.bf16.gmra.mxu0 %v1167
          %v1456 = vpop.f32.mrf.mxu0
          %v1457 = vadd.f32 %v1324, %v1456
          %v1458 = vpop.f32.mrf.mxu0
          %v1459 = vpop.f32.mrf.mxu0
          %v1460 = vadd.f32 %v1324, %v1459
          %v1461 = vpop.f32.mrf.mxu0
          %1462 = vmatprep.mubr.bf16.mxu0 0
          %1463 = vmatmul.mubr.bf16.gmra.mxu0 %v1168
          %v1464 = vpop.f32.mrf.mxu0
          %v1465 = vadd.f32 %v1324, %v1464
          %v1466 = vpop.f32.mrf.mxu0
          %v1467 = vpop.f32.mrf.mxu0
          %v1468 = vadd.f32 %v1324, %v1467
          %v1469 = vpop.f32.mrf.mxu0
          %1470 = vdwg.mxu0
          %v1471 = vxor.u32 %v1409, 2147483648
          %v1472 = vxor.u32 %v1412, 2147483648
          %v1473 = vxor.u32 %v1417, 2147483648
          %v1474 = vxor.u32 %v1420, 2147483648
          %v1475 = vxor.u32 %v1425, 2147483648
          %v1476 = vxor.u32 %v1428, 2147483648
          %v1477 = vxor.u32 %v1433, 2147483648
          %v1478 = vxor.u32 %v1436, 2147483648
          %v1479 = vxor.u32 %v1441, 2147483648
          %v1480 = vxor.u32 %v1444, 2147483648
          %v1481 = vxor.u32 %v1449, 2147483648
          %v1482 = vxor.u32 %v1452, 2147483648
          %v1483 = vxor.u32 %v1457, 2147483648
          %v1484 = vxor.u32 %v1460, 2147483648
          %v1485 = vxor.u32 %v1465, 2147483648
          %v1486 = vxor.u32 %v1468, 2147483648
          %v1487 = vmul.f32 %v1471, 1.442695
          %v1488 = vpow.pop %v1487
          %v1489 = vmul.f32 %v1472, 1.442695
          %v1490 = vpow.pop %v1489
          %v1491 = vmul.f32 %v1473, 1.442695
          %v1492 = vpow.pop %v1491
          %v1493 = vmul.f32 %v1474, 1.442695
          %v1494 = vpow.pop %v1493
          %v1495 = vmul.f32 %v1475, 1.442695
          %v1496 = vpow.pop %v1495
          %v1497 = vmul.f32 %v1476, 1.442695
          %v1498 = vpow.pop %v1497
          %v1499 = vmul.f32 %v1477, 1.442695
          %v1500 = vpow.pop %v1499
          %v1501 = vmul.f32 %v1478, 1.442695
          %v1502 = vpow.pop %v1501
          %v1503 = vmul.f32 %v1479, 1.442695
          %v1504 = vpow.pop %v1503
          %v1505 = vmul.f32 %v1480, 1.442695
          %v1506 = vpow.pop %v1505
          %v1507 = vmul.f32 %v1481, 1.442695
          %v1508 = vpow.pop %v1507
          %v1509 = vmul.f32 %v1482, 1.442695
          %v1510 = vpow.pop %v1509
          %v1511 = vmul.f32 %v1483, 1.442695
          %v1512 = vpow.pop %v1511
          %v1513 = vmul.f32 %v1484, 1.442695
          %v1514 = vpow.pop %v1513
          %v1515 = vmul.f32 %v1485, 1.442695
          %v1516 = vpow.pop %v1515
          %v1517 = vmul.f32 %v1486, 1.442695
          %v1518 = vpow.pop %v1517
          %v1519 = vadd.f32 %v1488, 1.0
          %v1520 = vadd.f32 %v1490, 1.0
          %v1521 = vadd.f32 %v1492, 1.0
          %v1522 = vadd.f32 %v1494, 1.0
          %v1523 = vadd.f32 %v1496, 1.0
          %v1524 = vadd.f32 %v1498, 1.0
          %v1525 = vadd.f32 %v1500, 1.0
          %v1526 = vadd.f32 %v1502, 1.0
          %v1527 = vadd.f32 %v1504, 1.0
          %v1528 = vadd.f32 %v1506, 1.0
          %v1529 = vadd.f32 %v1508, 1.0
          %v1530 = vadd.f32 %v1510, 1.0
          %v1531 = vadd.f32 %v1512, 1.0
          %v1532 = vadd.f32 %v1514, 1.0
          %v1533 = vadd.f32 %v1516, 1.0
          %v1534 = vadd.f32 %v1518, 1.0
          %v1535 = vrcp.pop %v1519
          %v1536 = vmul.f32 1.0, %v1535
          %v1537 = vrcp.pop %v1520
          %v1538 = vmul.f32 1.0, %v1537
          %v1539 = vrcp.pop %v1521
          %v1540 = vmul.f32 1.0, %v1539
          %v1541 = vrcp.pop %v1522
          %v1542 = vmul.f32 1.0, %v1541
          %v1543 = vrcp.pop %v1523
          %v1544 = vmul.f32 1.0, %v1543
          %v1545 = vrcp.pop %v1524
          %v1546 = vmul.f32 1.0, %v1545
          %v1547 = vrcp.pop %v1525
          %v1548 = vmul.f32 1.0, %v1547
          %v1549 = vrcp.pop %v1526
          %v1550 = vmul.f32 1.0, %v1549
          %v1551 = vrcp.pop %v1527
          %v1552 = vmul.f32 1.0, %v1551
          %v1553 = vrcp.pop %v1528
          %v1554 = vmul.f32 1.0, %v1553
          %v1555 = vrcp.pop %v1529
          %v1556 = vmul.f32 1.0, %v1555
          %v1557 = vrcp.pop %v1530
          %v1558 = vmul.f32 1.0, %v1557
          %v1559 = vrcp.pop %v1531
          %v1560 = vmul.f32 1.0, %v1559
          %v1561 = vrcp.pop %v1532
          %v1562 = vmul.f32 1.0, %v1561
          %v1563 = vrcp.pop %v1533
          %v1564 = vmul.f32 1.0, %v1563
          %v1565 = vrcp.pop %v1534
          %v1566 = vmul.f32 1.0, %v1565
          %v1567 = vmul.f32 %v1258, %v1536
          %v1568 = vmul.f32 %v1261, %v1538
          %v1569 = vmul.f32 %v1266, %v1540
          %v1570 = vmul.f32 %v1269, %v1542
          %v1571 = vmul.f32 %v1274, %v1544
          %v1572 = vmul.f32 %v1277, %v1546
          %v1573 = vmul.f32 %v1282, %v1548
          %v1574 = vmul.f32 %v1285, %v1550
          %v1575 = vmul.f32 %v1290, %v1552
          %v1576 = vmul.f32 %v1293, %v1554
          %v1577 = vmul.f32 %v1298, %v1556
          %v1578 = vmul.f32 %v1301, %v1558
          %v1579 = vmul.f32 %v1306, %v1560
          %v1580 = vmul.f32 %v1309, %v1562
          %v1581 = vmul.f32 %v1314, %v1564
          %v1582 = vmul.f32 %v1317, %v1566
          %v1583 = vld [vmem:[#allocation14] sm:$0xf]
          %v1584 = vld [vmem:[#allocation14 + $0x4] sm:$0xf]
          %v1585 = vld [vmem:[#allocation14 + $0x8] sm:$0xf]
          %v1586 = vld [vmem:[#allocation14 + $0xc] sm:$0xf]
          %v1587 = vld [vmem:[#allocation14 + $0x10] sm:$0xf]
          %v1588 = vld [vmem:[#allocation14 + $0x14] sm:$0xf]
          %v1589 = vld [vmem:[#allocation14 + $0x18] sm:$0xf]
          %v1590 = vld [vmem:[#allocation14 + $0x1c] sm:$0xf]
          %v1591 = vld [vmem:[#allocation14 + $0x20] sm:$0xf]
          %v1592 = vld [vmem:[#allocation14 + $0x24] sm:$0xf]
          %v1593 = vld [vmem:[#allocation14 + $0x28] sm:$0xf]
          %v1594 = vld [vmem:[#allocation14 + $0x2c] sm:$0xf]
          %v1595 = vld [vmem:[#allocation14 + $0x30] sm:$0xf]
          %v1596 = vld [vmem:[#allocation14 + $0x34] sm:$0xf]
          %v1597 = vld [vmem:[#allocation14 + $0x38] sm:$0xf]
          %v1598 = vld [vmem:[#allocation14 + $0x3c] sm:$0xf]
          %v1599 = vld [vmem:[#allocation16] sm:$0xf]
          %v1600 = vld [vmem:[#allocation16 + $0x4] sm:$0xf]
          %v1601 = vld [vmem:[#allocation16 + $0x8] sm:$0xf]
          %v1602 = vld [vmem:[#allocation16 + $0xc] sm:$0xf]
          %v1603 = vld [vmem:[#allocation16 + $0x10] sm:$0xf]
          %v1604 = vld [vmem:[#allocation16 + $0x14] sm:$0xf]
          %v1605 = vld [vmem:[#allocation16 + $0x18] sm:$0xf]
          %v1606 = vld [vmem:[#allocation16 + $0x1c] sm:$0xf]
          %v1607 = vld [vmem:[#allocation16 + $0x20] sm:$0xf]
          %v1608 = vld [vmem:[#allocation16 + $0x24] sm:$0xf]
          %v1609 = vld [vmem:[#allocation16 + $0x28] sm:$0xf]
          %v1610 = vld [vmem:[#allocation16 + $0x2c] sm:$0xf]
          %v1611 = vld [vmem:[#allocation16 + $0x30] sm:$0xf]
          %v1612 = vld [vmem:[#allocation16 + $0x34] sm:$0xf]
          %v1613 = vld [vmem:[#allocation16 + $0x38] sm:$0xf]
          %v1614 = vld [vmem:[#allocation16 + $0x3c] sm:$0xf]
          %v1615 = vld [vmem:[#allocation17] sm:$0x1]
          %v1616 = vld [vmem:[#allocation19] sm:$0x1]
          %v1617 = vpack.c.bf16 %v1568, %v1567
          %v1618 = vpack.c.bf16 %v1570, %v1569
          %v1619 = vpack.c.bf16 %v1572, %v1571
          %v1620 = vpack.c.bf16 %v1574, %v1573
          %v1621 = vpack.c.bf16 %v1576, %v1575
          %v1622 = vpack.c.bf16 %v1578, %v1577
          %v1623 = vpack.c.bf16 %v1580, %v1579
          %v1624 = vpack.c.bf16 %v1582, %v1581
          %v1626 = vlaneseq
          %v1627 = vshrl.u32 %v1626, 7
          %v1628 = vsub.s32 0, %v1627
          %v1629 = vrot.slane %v1615, %v1628
          %v1647 = vunpack.c.l.b16 %v1583
          %v1648 = vunpack.c.l.b16 %v1584
          %v1649 = vunpack.c.l.b16 %v1585
          %v1650 = vunpack.c.l.b16 %v1586
          %v1651 = vunpack.c.l.b16 %v1587
          %v1652 = vunpack.c.l.b16 %v1588
          %v1653 = vunpack.c.l.b16 %v1589
          %v1654 = vunpack.c.l.b16 %v1590
          %v1655 = vunpack.c.l.b16 %v1591
          %v1656 = vunpack.c.l.b16 %v1592
          %v1657 = vunpack.c.l.b16 %v1593
          %v1658 = vunpack.c.l.b16 %v1594
          %v1659 = vunpack.c.l.b16 %v1595
          %v1660 = vunpack.c.l.b16 %v1596
          %v1661 = vunpack.c.l.b16 %v1597
          %v1662 = vunpack.c.l.b16 %v1598
          %v1663 = vpack.c.b16 %v1648, %v1647
          %v1664 = vpack.c.b16 %v1650, %v1649
          %v1665 = vpack.c.b16 %v1652, %v1651
          %v1666 = vpack.c.b16 %v1654, %v1653
          %v1667 = vpack.c.b16 %v1656, %v1655
          %v1668 = vpack.c.b16 %v1658, %v1657
          %v1669 = vpack.c.b16 %v1660, %v1659
          %v1670 = vpack.c.b16 %v1662, %v1661
          %1679 = vmatprep.subr.bf16.mxu0 0
          %1680 = vmatpush1.bf16.msra.mxu0 %v1670
          %1681 = vmatprep.subr.bf16.mxu0 0
          %1682 = vmatpush1.bf16.msra.mxu0 %v1669
          %1683 = vmatprep.subr.bf16.mxu0 0
          %1684 = vmatpush1.bf16.msra.mxu0 %v1668
          %1685 = vmatprep.subr.bf16.mxu0 0
          %1686 = vmatpush1.bf16.msra.mxu0 %v1667
          %1687 = vmatprep.subr.bf16.mxu0 0
          %1688 = vmatpush1.bf16.msra.mxu0 %v1666
          %1689 = vmatprep.subr.bf16.mxu0 0
          %1690 = vmatpush1.bf16.msra.mxu0 %v1665
          %1691 = vmatprep.subr.bf16.mxu0 0
          %1692 = vmatpush1.bf16.msra.mxu0 %v1664
          %1693 = vmatprep.subr.bf16.mxu0 0
          %1694 = vmatpush1.bf16.msra.mxu0 %v1663
          %1695 = vmatprep.subr.bf16.mxu0 0
          %1696 = vmatpush2.bf16.msra.mxu0 0
          %1697 = vmatprep.subr.bf16.mxu0 0
          %1698 = vmatpush2.bf16.msra.mxu0 0
          %1699 = vmatprep.subr.bf16.mxu0 0
          %1700 = vmatpush2.bf16.msra.mxu0 0
          %1701 = vmatprep.subr.bf16.mxu0 0
          %1702 = vmatpush2.bf16.msra.mxu0 0
          %1703 = vmatprep.subr.bf16.mxu0 0
          %1704 = vmatpush2.bf16.msra.mxu0 0
          %1705 = vmatprep.subr.bf16.mxu0 0
          %1706 = vmatpush2.bf16.msra.mxu0 0
          %1707 = vmatprep.subr.bf16.mxu0 0
          %1708 = vmatpush2.bf16.msra.mxu0 0
          %1709 = vmatprep.subr.bf16.mxu0 0
          %1710 = vmatpush2.bf16.msra.mxu0 0
          %1711 = vmatprep.mubr.bf16.mxu0 0
          %1712 = vmatmul.mubr.bf16.gmra.mxu0 %v1617
          %v1713 = vpop.f32.mrf.mxu0
          %v1714 = vadd.f32 %v1629, %v1713
          %v1715 = vpop.f32.mrf.mxu0
          %v1716 = vpop.f32.mrf.mxu0
          %v1717 = vadd.f32 %v1629, %v1716
          %v1718 = vpop.f32.mrf.mxu0
          %1719 = vmatprep.mubr.bf16.mxu0 0
          %1720 = vmatmul.mubr.bf16.gmra.mxu0 %v1618
          %v1721 = vpop.f32.mrf.mxu0
          %v1722 = vadd.f32 %v1629, %v1721
          %v1723 = vpop.f32.mrf.mxu0
          %v1724 = vpop.f32.mrf.mxu0
          %v1725 = vadd.f32 %v1629, %v1724
          %v1726 = vpop.f32.mrf.mxu0
          %1727 = vmatprep.mubr.bf16.mxu0 0
          %1728 = vmatmul.mubr.bf16.gmra.mxu0 %v1619
          %v1729 = vpop.f32.mrf.mxu0
          %v1730 = vadd.f32 %v1629, %v1729
          %v1731 = vpop.f32.mrf.mxu0
          %v1732 = vpop.f32.mrf.mxu0
          %v1733 = vadd.f32 %v1629, %v1732
          %v1734 = vpop.f32.mrf.mxu0
          %1735 = vmatprep.mubr.bf16.mxu0 0
          %1736 = vmatmul.mubr.bf16.gmra.mxu0 %v1620
          %v1737 = vpop.f32.mrf.mxu0
          %v1738 = vadd.f32 %v1629, %v1737
          %v1739 = vpop.f32.mrf.mxu0
          %v1740 = vpop.f32.mrf.mxu0
          %v1741 = vadd.f32 %v1629, %v1740
          %v1742 = vpop.f32.mrf.mxu0
          %1743 = vmatprep.mubr.bf16.mxu0 0
          %1744 = vmatmul.mubr.bf16.gmra.mxu0 %v1621
          %v1745 = vpop.f32.mrf.mxu0
          %v1746 = vadd.f32 %v1629, %v1745
          %v1747 = vpop.f32.mrf.mxu0
          %v1748 = vpop.f32.mrf.mxu0
          %v1749 = vadd.f32 %v1629, %v1748
          %v1750 = vpop.f32.mrf.mxu0
          %1751 = vmatprep.mubr.bf16.mxu0 0
          %1752 = vmatmul.mubr.bf16.gmra.mxu0 %v1622
          %v1753 = vpop.f32.mrf.mxu0
          %v1754 = vadd.f32 %v1629, %v1753
          %v1755 = vpop.f32.mrf.mxu0
          %v1756 = vpop.f32.mrf.mxu0
          %v1757 = vadd.f32 %v1629, %v1756
          %v1758 = vpop.f32.mrf.mxu0
          %1759 = vmatprep.mubr.bf16.mxu0 0
          %1760 = vmatmul.mubr.bf16.gmra.mxu0 %v1623
          %v1761 = vpop.f32.mrf.mxu0
          %v1762 = vadd.f32 %v1629, %v1761
          %v1763 = vpop.f32.mrf.mxu0
          %v1764 = vpop.f32.mrf.mxu0
          %v1765 = vadd.f32 %v1629, %v1764
          %v1766 = vpop.f32.mrf.mxu0
          %1767 = vmatprep.mubr.bf16.mxu0 0
          %1768 = vmatmul.mubr.bf16.gmra.mxu0 %v1624
          %v1769 = vpop.f32.mrf.mxu0
          %v1770 = vadd.f32 %v1629, %v1769
          %v1771 = vpop.f32.mrf.mxu0
          %v1772 = vpop.f32.mrf.mxu0
          %v1773 = vadd.f32 %v1629, %v1772
          %v1774 = vpop.f32.mrf.mxu0
          %1775 = vdwg.mxu0
          %v1777 = vlaneseq
          %v1778 = vshrl.u32 %v1777, 7
          %v1779 = vsub.s32 0, %v1778
          %v1780 = vrot.slane %v1616, %v1779
          %v1798 = vunpack.c.l.b16 %v1599
          %v1799 = vunpack.c.l.b16 %v1600
          %v1800 = vunpack.c.l.b16 %v1601
          %v1801 = vunpack.c.l.b16 %v1602
          %v1802 = vunpack.c.l.b16 %v1603
          %v1803 = vunpack.c.l.b16 %v1604
          %v1804 = vunpack.c.l.b16 %v1605
          %v1805 = vunpack.c.l.b16 %v1606
          %v1806 = vunpack.c.l.b16 %v1607
          %v1807 = vunpack.c.l.b16 %v1608
          %v1808 = vunpack.c.l.b16 %v1609
          %v1809 = vunpack.c.l.b16 %v1610
          %v1810 = vunpack.c.l.b16 %v1611
          %v1811 = vunpack.c.l.b16 %v1612
          %v1812 = vunpack.c.l.b16 %v1613
          %v1813 = vunpack.c.l.b16 %v1614
          %v1814 = vpack.c.b16 %v1799, %v1798
          %v1815 = vpack.c.b16 %v1801, %v1800
          %v1816 = vpack.c.b16 %v1803, %v1802
          %v1817 = vpack.c.b16 %v1805, %v1804
          %v1818 = vpack.c.b16 %v1807, %v1806
          %v1819 = vpack.c.b16 %v1809, %v1808
          %v1820 = vpack.c.b16 %v1811, %v1810
          %v1821 = vpack.c.b16 %v1813, %v1812
          %1830 = vmatprep.subr.bf16.mxu0 0
          %1831 = vmatpush1.bf16.msra.mxu0 %v1821
          %1832 = vmatprep.subr.bf16.mxu0 0
          %1833 = vmatpush1.bf16.msra.mxu0 %v1820
          %1834 = vmatprep.subr.bf16.mxu0 0
          %1835 = vmatpush1.bf16.msra.mxu0 %v1819
          %1836 = vmatprep.subr.bf16.mxu0 0
          %1837 = vmatpush1.bf16.msra.mxu0 %v1818
          %1838 = vmatprep.subr.bf16.mxu0 0
          %1839 = vmatpush1.bf16.msra.mxu0 %v1817
          %1840 = vmatprep.subr.bf16.mxu0 0
          %1841 = vmatpush1.bf16.msra.mxu0 %v1816
          %1842 = vmatprep.subr.bf16.mxu0 0
          %1843 = vmatpush1.bf16.msra.mxu0 %v1815
          %1844 = vmatprep.subr.bf16.mxu0 0
          %1845 = vmatpush1.bf16.msra.mxu0 %v1814
          %1846 = vmatprep.subr.bf16.mxu0 0
          %1847 = vmatpush2.bf16.msra.mxu0 0
          %1848 = vmatprep.subr.bf16.mxu0 0
          %1849 = vmatpush2.bf16.msra.mxu0 0
          %1850 = vmatprep.subr.bf16.mxu0 0
          %1851 = vmatpush2.bf16.msra.mxu0 0
          %1852 = vmatprep.subr.bf16.mxu0 0
          %1853 = vmatpush2.bf16.msra.mxu0 0
          %1854 = vmatprep.subr.bf16.mxu0 0
          %1855 = vmatpush2.bf16.msra.mxu0 0
          %1856 = vmatprep.subr.bf16.mxu0 0
          %1857 = vmatpush2.bf16.msra.mxu0 0
          %1858 = vmatprep.subr.bf16.mxu0 0
          %1859 = vmatpush2.bf16.msra.mxu0 0
          %1860 = vmatprep.subr.bf16.mxu0 0
          %1861 = vmatpush2.bf16.msra.mxu0 0
          %1862 = vmatprep.mubr.bf16.mxu0 0
          %1863 = vmatmul.mubr.bf16.gmra.mxu0 %v1617
          %v1864 = vpop.f32.mrf.mxu0
          %v1865 = vadd.f32 %v1780, %v1864
          %v1866 = vpop.f32.mrf.mxu0
          %v1867 = vpop.f32.mrf.mxu0
          %v1868 = vadd.f32 %v1780, %v1867
          %v1869 = vpop.f32.mrf.mxu0
          %1870 = vmatprep.mubr.bf16.mxu0 0
          %1871 = vmatmul.mubr.bf16.gmra.mxu0 %v1618
          %v1872 = vpop.f32.mrf.mxu0
          %v1873 = vadd.f32 %v1780, %v1872
          %v1874 = vpop.f32.mrf.mxu0
          %v1875 = vpop.f32.mrf.mxu0
          %v1876 = vadd.f32 %v1780, %v1875
          %v1877 = vpop.f32.mrf.mxu0
          %1878 = vmatprep.mubr.bf16.mxu0 0
          %1879 = vmatmul.mubr.bf16.gmra.mxu0 %v1619
          %v1880 = vpop.f32.mrf.mxu0
          %v1881 = vadd.f32 %v1780, %v1880
          %v1882 = vpop.f32.mrf.mxu0
          %v1883 = vpop.f32.mrf.mxu0
          %v1884 = vadd.f32 %v1780, %v1883
          %v1885 = vpop.f32.mrf.mxu0
          %1886 = vmatprep.mubr.bf16.mxu0 0
          %1887 = vmatmul.mubr.bf16.gmra.mxu0 %v1620
          %v1888 = vpop.f32.mrf.mxu0
          %v1889 = vadd.f32 %v1780, %v1888
          %v1890 = vpop.f32.mrf.mxu0
          %v1891 = vpop.f32.mrf.mxu0
          %v1892 = vadd.f32 %v1780, %v1891
          %v1893 = vpop.f32.mrf.mxu0
          %1894 = vmatprep.mubr.bf16.mxu0 0
          %1895 = vmatmul.mubr.bf16.gmra.mxu0 %v1621
          %v1896 = vpop.f32.mrf.mxu0
          %v1897 = vadd.f32 %v1780, %v1896
          %v1898 = vpop.f32.mrf.mxu0
          %v1899 = vpop.f32.mrf.mxu0
          %v1900 = vadd.f32 %v1780, %v1899
          %v1901 = vpop.f32.mrf.mxu0
          %1902 = vmatprep.mubr.bf16.mxu0 0
          %1903 = vmatmul.mubr.bf16.gmra.mxu0 %v1622
          %v1904 = vpop.f32.mrf.mxu0
          %v1905 = vadd.f32 %v1780, %v1904
          %v1906 = vpop.f32.mrf.mxu0
          %v1907 = vpop.f32.mrf.mxu0
          %v1908 = vadd.f32 %v1780, %v1907
          %v1909 = vpop.f32.mrf.mxu0
          %1910 = vmatprep.mubr.bf16.mxu0 0
          %1911 = vmatmul.mubr.bf16.gmra.mxu0 %v1623
          %v1912 = vpop.f32.mrf.mxu0
          %v1913 = vadd.f32 %v1780, %v1912
          %v1914 = vpop.f32.mrf.mxu0
          %v1915 = vpop.f32.mrf.mxu0
          %v1916 = vadd.f32 %v1780, %v1915
          %v1917 = vpop.f32.mrf.mxu0
          %1918 = vmatprep.mubr.bf16.mxu0 0
          %1919 = vmatmul.mubr.bf16.gmra.mxu0 %v1624
          %v1920 = vpop.f32.mrf.mxu0
          %v1921 = vadd.f32 %v1780, %v1920
          %v1922 = vpop.f32.mrf.mxu0
          %v1923 = vpop.f32.mrf.mxu0
          %v1924 = vadd.f32 %v1780, %v1923
          %v1925 = vpop.f32.mrf.mxu0
          %1926 = vdwg.mxu0
          %v1927 = vxor.u32 %v1865, 2147483648
          %v1928 = vxor.u32 %v1868, 2147483648
          %v1929 = vxor.u32 %v1873, 2147483648
          %v1930 = vxor.u32 %v1876, 2147483648
          %v1931 = vxor.u32 %v1881, 2147483648
          %v1932 = vxor.u32 %v1884, 2147483648
          %v1933 = vxor.u32 %v1889, 2147483648
          %v1934 = vxor.u32 %v1892, 2147483648
          %v1935 = vxor.u32 %v1897, 2147483648
          %v1936 = vxor.u32 %v1900, 2147483648
          %v1937 = vxor.u32 %v1905, 2147483648
          %v1938 = vxor.u32 %v1908, 2147483648
          %v1939 = vxor.u32 %v1913, 2147483648
          %v1940 = vxor.u32 %v1916, 2147483648
          %v1941 = vxor.u32 %v1921, 2147483648
          %v1942 = vxor.u32 %v1924, 2147483648
          %v1943 = vmul.f32 %v1927, 1.442695
          %v1944 = vpow.pop %v1943
          %v1945 = vmul.f32 %v1928, 1.442695
          %v1946 = vpow.pop %v1945
          %v1947 = vmul.f32 %v1929, 1.442695
          %v1948 = vpow.pop %v1947
          %v1949 = vmul.f32 %v1930, 1.442695
          %v1950 = vpow.pop %v1949
          %v1951 = vmul.f32 %v1931, 1.442695
          %v1952 = vpow.pop %v1951
          %v1953 = vmul.f32 %v1932, 1.442695
          %v1954 = vpow.pop %v1953
          %v1955 = vmul.f32 %v1933, 1.442695
          %v1956 = vpow.pop %v1955
          %v1957 = vmul.f32 %v1934, 1.442695
          %v1958 = vpow.pop %v1957
          %v1959 = vmul.f32 %v1935, 1.442695
          %v1960 = vpow.pop %v1959
          %v1961 = vmul.f32 %v1936, 1.442695
          %v1962 = vpow.pop %v1961
          %v1963 = vmul.f32 %v1937, 1.442695
          %v1964 = vpow.pop %v1963
          %v1965 = vmul.f32 %v1938, 1.442695
          %v1966 = vpow.pop %v1965
          %v1967 = vmul.f32 %v1939, 1.442695
          %v1968 = vpow.pop %v1967
          %v1969 = vmul.f32 %v1940, 1.442695
          %v1970 = vpow.pop %v1969
          %v1971 = vmul.f32 %v1941, 1.442695
          %v1972 = vpow.pop %v1971
          %v1973 = vmul.f32 %v1942, 1.442695
          %v1974 = vpow.pop %v1973
          %v1975 = vadd.f32 %v1944, 1.0
          %v1976 = vadd.f32 %v1946, 1.0
          %v1977 = vadd.f32 %v1948, 1.0
          %v1978 = vadd.f32 %v1950, 1.0
          %v1979 = vadd.f32 %v1952, 1.0
          %v1980 = vadd.f32 %v1954, 1.0
          %v1981 = vadd.f32 %v1956, 1.0
          %v1982 = vadd.f32 %v1958, 1.0
          %v1983 = vadd.f32 %v1960, 1.0
          %v1984 = vadd.f32 %v1962, 1.0
          %v1985 = vadd.f32 %v1964, 1.0
          %v1986 = vadd.f32 %v1966, 1.0
          %v1987 = vadd.f32 %v1968, 1.0
          %v1988 = vadd.f32 %v1970, 1.0
          %v1989 = vadd.f32 %v1972, 1.0
          %v1990 = vadd.f32 %v1974, 1.0
          %v1991 = vrcp.pop %v1975
          %v1992 = vmul.f32 1.0, %v1991
          %v1993 = vrcp.pop %v1976
          %v1994 = vmul.f32 1.0, %v1993
          %v1995 = vrcp.pop %v1977
          %v1996 = vmul.f32 1.0, %v1995
          %v1997 = vrcp.pop %v1978
          %v1998 = vmul.f32 1.0, %v1997
          %v1999 = vrcp.pop %v1979
          %v2000 = vmul.f32 1.0, %v1999
          %v2001 = vrcp.pop %v1980
          %v2002 = vmul.f32 1.0, %v2001
          %v2003 = vrcp.pop %v1981
          %v2004 = vmul.f32 1.0, %v2003
          %v2005 = vrcp.pop %v1982
          %v2006 = vmul.f32 1.0, %v2005
          %v2007 = vrcp.pop %v1983
          %v2008 = vmul.f32 1.0, %v2007
          %v2009 = vrcp.pop %v1984
          %v2010 = vmul.f32 1.0, %v2009
          %v2011 = vrcp.pop %v1985
          %v2012 = vmul.f32 1.0, %v2011
          %v2013 = vrcp.pop %v1986
          %v2014 = vmul.f32 1.0, %v2013
          %v2015 = vrcp.pop %v1987
          %v2016 = vmul.f32 1.0, %v2015
          %v2017 = vrcp.pop %v1988
          %v2018 = vmul.f32 1.0, %v2017
          %v2019 = vrcp.pop %v1989
          %v2020 = vmul.f32 1.0, %v2019
          %v2021 = vrcp.pop %v1990
          %v2022 = vmul.f32 1.0, %v2021
          %v2023 = vmul.f32 %v1714, %v1992
          %v2024 = vmul.f32 %v1717, %v1994
          %v2025 = vmul.f32 %v1722, %v1996
          %v2026 = vmul.f32 %v1725, %v1998
          %v2027 = vmul.f32 %v1730, %v2000
          %v2028 = vmul.f32 %v1733, %v2002
          %v2029 = vmul.f32 %v1738, %v2004
          %v2030 = vmul.f32 %v1741, %v2006
          %v2031 = vmul.f32 %v1746, %v2008
          %v2032 = vmul.f32 %v1749, %v2010
          %v2033 = vmul.f32 %v1754, %v2012
          %v2034 = vmul.f32 %v1757, %v2014
          %v2035 = vmul.f32 %v1762, %v2016
          %v2036 = vmul.f32 %v1765, %v2018
          %v2037 = vmul.f32 %v1770, %v2020
          %v2038 = vmul.f32 %v1773, %v2022
          %2039 = vst [vmem:[#allocation2] sm:$0xff] %v2023
          %2040 = vst [vmem:[#allocation2 + $0x8] sm:$0xff] %v2024
          %2041 = vst [vmem:[#allocation2 + $0x10] sm:$0xff] %v2025
          %2042 = vst [vmem:[#allocation2 + $0x18] sm:$0xff] %v2026
          %2043 = vst [vmem:[#allocation2 + $0x20] sm:$0xff] %v2027
          %2044 = vst [vmem:[#allocation2 + $0x28] sm:$0xff] %v2028
          %2045 = vst [vmem:[#allocation2 + $0x30] sm:$0xff] %v2029
          %2046 = vst [vmem:[#allocation2 + $0x38] sm:$0xff] %v2030
          %2047 = vst [vmem:[#allocation2 + $0x40] sm:$0xff] %v2031
          %2048 = vst [vmem:[#allocation2 + $0x48] sm:$0xff] %v2032
          %2049 = vst [vmem:[#allocation2 + $0x50] sm:$0xff] %v2033
          %2050 = vst [vmem:[#allocation2 + $0x58] sm:$0xff] %v2034
          %2051 = vst [vmem:[#allocation2 + $0x60] sm:$0xff] %v2035
          %2052 = vst [vmem:[#allocation2 + $0x68] sm:$0xff] %v2036
          %2053 = vst [vmem:[#allocation2 + $0x70] sm:$0xff] %v2037
          %2054 = vst [vmem:[#allocation2 + $0x78] sm:$0xff] %v2038
          %2055 = vst [vmem:[#allocation3] sm:$0xff] 1.0
          %2056 = vst [vmem:[#allocation3 + $0x8] sm:$0xff] 1.0
          %2057 = vst [vmem:[#allocation3 + $0x10] sm:$0xff] 1.0
          %2058 = vst [vmem:[#allocation3 + $0x18] sm:$0xff] 1.0
          %2059 = vst [vmem:[#allocation3 + $0x20] sm:$0xff] 1.0
          %2060 = vst [vmem:[#allocation3 + $0x28] sm:$0xff] 1.0
          %2061 = vst [vmem:[#allocation3 + $0x30] sm:$0xff] 1.0
          %2062 = vst [vmem:[#allocation3 + $0x38] sm:$0xff] 1.0
          %2063 = vst [vmem:[#allocation3 + $0x40] sm:$0xff] 1.0
          %2064 = vst [vmem:[#allocation3 + $0x48] sm:$0xff] 1.0
          %2065 = vst [vmem:[#allocation3 + $0x50] sm:$0xff] 1.0
          %2066 = vst [vmem:[#allocation3 + $0x58] sm:$0xff] 1.0
          %2067 = vst [vmem:[#allocation3 + $0x60] sm:$0xff] 1.0
          %2068 = vst [vmem:[#allocation3 + $0x68] sm:$0xff] 1.0
          %2069 = vst [vmem:[#allocation3 + $0x70] sm:$0xff] 1.0
          %2070 = vst [vmem:[#allocation3 + $0x78] sm:$0xff] 1.0
          %2071 = vst [vmem:[#allocation4] sm:$0xff] 0.0
          %2072 = vst [vmem:[#allocation4 + $0x8] sm:$0xff] 0.0
          %2073 = vst [vmem:[#allocation4 + $0x10] sm:$0xff] 0.0
          %2074 = vst [vmem:[#allocation4 + $0x18] sm:$0xff] 0.0
          %2075 = vst [vmem:[#allocation4 + $0x20] sm:$0xff] 0.0
          %2076 = vst [vmem:[#allocation4 + $0x28] sm:$0xff] 0.0
          %2077 = vst [vmem:[#allocation4 + $0x30] sm:$0xff] 0.0
          %2078 = vst [vmem:[#allocation4 + $0x38] sm:$0xff] 0.0
          %2079 = vst [vmem:[#allocation4 + $0x40] sm:$0xff] 0.0
          %2080 = vst [vmem:[#allocation4 + $0x48] sm:$0xff] 0.0
          %2081 = vst [vmem:[#allocation4 + $0x50] sm:$0xff] 0.0
          %2082 = vst [vmem:[#allocation4 + $0x58] sm:$0xff] 0.0
          %2083 = vst [vmem:[#allocation4 + $0x60] sm:$0xff] 0.0
          %2084 = vst [vmem:[#allocation4 + $0x68] sm:$0xff] 0.0
          %2085 = vst [vmem:[#allocation4 + $0x70] sm:$0xff] 0.0
          %2086 = vst [vmem:[#allocation4 + $0x78] sm:$0xff] 0.0
        $region176: #{tpu_custom_call.1} parent=111 // pred_fallthru
          _
        %v2087 = vld [vmem:[#allocation2] sm:$0xff]
        %v2088 = vld [vmem:[#allocation2 + $0x8] sm:$0xff]
        %v2089 = vld [vmem:[#allocation2 + $0x10] sm:$0xff]
        %v2090 = vld [vmem:[#allocation2 + $0x18] sm:$0xff]
        %v2091 = vld [vmem:[#allocation2 + $0x20] sm:$0xff]
        %v2092 = vld [vmem:[#allocation2 + $0x28] sm:$0xff]
        %v2093 = vld [vmem:[#allocation2 + $0x30] sm:$0xff]
        %v2094 = vld [vmem:[#allocation2 + $0x38] sm:$0xff]
        %v2095 = vld [vmem:[#allocation2 + $0x40] sm:$0xff]
        %v2096 = vld [vmem:[#allocation2 + $0x48] sm:$0xff]
        %v2097 = vld [vmem:[#allocation2 + $0x50] sm:$0xff]
        %v2098 = vld [vmem:[#allocation2 + $0x58] sm:$0xff]
        %v2099 = vld [vmem:[#allocation2 + $0x60] sm:$0xff]
        %v2100 = vld [vmem:[#allocation2 + $0x68] sm:$0xff]
        %v2101 = vld [vmem:[#allocation2 + $0x70] sm:$0xff]
        %v2102 = vld [vmem:[#allocation2 + $0x78] sm:$0xff]
        %v2103 = vpack.c.bf16 %v2088, %v2087
        %v2104 = vpack.c.bf16 %v2090, %v2089
        %v2105 = vpack.c.bf16 %v2092, %v2091
        %v2106 = vpack.c.bf16 %v2094, %v2093
        %v2107 = vpack.c.bf16 %v2096, %v2095
        %v2108 = vpack.c.bf16 %v2098, %v2097
        %v2109 = vpack.c.bf16 %v2100, %v2099
        %v2110 = vpack.c.bf16 %v2102, %v2101
        %v2111 = vld [vmem:[%s946] sm:$0xf]
        %v2112 = vld [vmem:[%s946 + $0x4] sm:$0xf]
        %v2113 = vld [vmem:[%s946 + $0x8] sm:$0xf]
        %v2114 = vld [vmem:[%s946 + $0xc] sm:$0xf]
        %v2115 = vld [vmem:[%s946 + $0x10] sm:$0xf]
        %v2116 = vld [vmem:[%s946 + $0x14] sm:$0xf]
        %v2117 = vld [vmem:[%s946 + $0x18] sm:$0xf]
        %v2118 = vld [vmem:[%s946 + $0x1c] sm:$0xf]
        %v2119 = vld [vmem:[%s946 + $0x20] sm:$0xf]
        %v2120 = vld [vmem:[%s946 + $0x24] sm:$0xf]
        %v2121 = vld [vmem:[%s946 + $0x28] sm:$0xf]
        %v2122 = vld [vmem:[%s946 + $0x2c] sm:$0xf]
        %v2123 = vld [vmem:[%s946 + $0x30] sm:$0xf]
        %v2124 = vld [vmem:[%s946 + $0x34] sm:$0xf]
        %v2125 = vld [vmem:[%s946 + $0x38] sm:$0xf]
        %v2126 = vld [vmem:[%s946 + $0x3c] sm:$0xf]
        %v2127 = vld [vmem:[%s1087] sm:$0x1]
        %v2129 = vlaneseq
        %v2130 = vshrl.u32 %v2129, 7
        %v2131 = vsub.s32 0, %v2130
        %v2132 = vrot.slane %v2127, %v2131
        %v2150 = vunpack.c.l.b16 %v2111
        %v2151 = vunpack.c.l.b16 %v2112
        %v2152 = vunpack.c.l.b16 %v2113
        %v2153 = vunpack.c.l.b16 %v2114
        %v2154 = vunpack.c.l.b16 %v2115
        %v2155 = vunpack.c.l.b16 %v2116
        %v2156 = vunpack.c.l.b16 %v2117
        %v2157 = vunpack.c.l.b16 %v2118
        %v2158 = vunpack.c.l.b16 %v2119
        %v2159 = vunpack.c.l.b16 %v2120
        %v2160 = vunpack.c.l.b16 %v2121
        %v2161 = vunpack.c.l.b16 %v2122
        %v2162 = vunpack.c.l.b16 %v2123
        %v2163 = vunpack.c.l.b16 %v2124
        %v2164 = vunpack.c.l.b16 %v2125
        %v2165 = vunpack.c.l.b16 %v2126
        %v2166 = vpack.c.b16 %v2151, %v2150
        %v2167 = vpack.c.b16 %v2153, %v2152
        %v2168 = vpack.c.b16 %v2155, %v2154
        %v2169 = vpack.c.b16 %v2157, %v2156
        %v2170 = vpack.c.b16 %v2159, %v2158
        %v2171 = vpack.c.b16 %v2161, %v2160
        %v2172 = vpack.c.b16 %v2163, %v2162
        %v2173 = vpack.c.b16 %v2165, %v2164
        %2182 = vmatprep.subr.bf16.mxu0 0
        %2183 = vmatpush1.bf16.msra.mxu0 %v2173
        %2184 = vmatprep.subr.bf16.mxu0 0
        %2185 = vmatpush1.bf16.msra.mxu0 %v2172
        %2186 = vmatprep.subr.bf16.mxu0 0
        %2187 = vmatpush1.bf16.msra.mxu0 %v2171
        %2188 = vmatprep.subr.bf16.mxu0 0
        %2189 = vmatpush1.bf16.msra.mxu0 %v2170
        %2190 = vmatprep.subr.bf16.mxu0 0
        %2191 = vmatpush1.bf16.msra.mxu0 %v2169
        %2192 = vmatprep.subr.bf16.mxu0 0
        %2193 = vmatpush1.bf16.msra.mxu0 %v2168
        %2194 = vmatprep.subr.bf16.mxu0 0
        %2195 = vmatpush1.bf16.msra.mxu0 %v2167
        %2196 = vmatprep.subr.bf16.mxu0 0
        %2197 = vmatpush1.bf16.msra.mxu0 %v2166
        %2198 = vmatprep.subr.bf16.mxu0 0
        %2199 = vmatpush2.bf16.msra.mxu0 0
        %2200 = vmatprep.subr.bf16.mxu0 0
        %2201 = vmatpush2.bf16.msra.mxu0 0
        %2202 = vmatprep.subr.bf16.mxu0 0
        %2203 = vmatpush2.bf16.msra.mxu0 0
        %2204 = vmatprep.subr.bf16.mxu0 0
        %2205 = vmatpush2.bf16.msra.mxu0 0
        %2206 = vmatprep.subr.bf16.mxu0 0
        %2207 = vmatpush2.bf16.msra.mxu0 0
        %2208 = vmatprep.subr.bf16.mxu0 0
        %2209 = vmatpush2.bf16.msra.mxu0 0
        %2210 = vmatprep.subr.bf16.mxu0 0
        %2211 = vmatpush2.bf16.msra.mxu0 0
        %2212 = vmatprep.subr.bf16.mxu0 0
        %2213 = vmatpush2.bf16.msra.mxu0 0
        %2214 = vmatprep.mubr.bf16.mxu0 0
        %2215 = vmatmul.mubr.bf16.gmra.mxu0 %v2103
        %v2216 = vpop.f32.mrf.mxu0
        %v2217 = vadd.f32 %v2132, %v2216
        %v2218 = vpop.f32.mrf.mxu0
        %v2219 = vpop.f32.mrf.mxu0
        %v2220 = vadd.f32 %v2132, %v2219
        %v2221 = vpop.f32.mrf.mxu0
        %2222 = vmatprep.mubr.bf16.mxu0 0
        %2223 = vmatmul.mubr.bf16.gmra.mxu0 %v2104
        %v2224 = vpop.f32.mrf.mxu0
        %v2225 = vadd.f32 %v2132, %v2224
        %v2226 = vpop.f32.mrf.mxu0
        %v2227 = vpop.f32.mrf.mxu0
        %v2228 = vadd.f32 %v2132, %v2227
        %v2229 = vpop.f32.mrf.mxu0
        %2230 = vmatprep.mubr.bf16.mxu0 0
        %2231 = vmatmul.mubr.bf16.gmra.mxu0 %v2105
        %v2232 = vpop.f32.mrf.mxu0
        %v2233 = vadd.f32 %v2132, %v2232
        %v2234 = vpop.f32.mrf.mxu0
        %v2235 = vpop.f32.mrf.mxu0
        %v2236 = vadd.f32 %v2132, %v2235
        %v2237 = vpop.f32.mrf.mxu0
        %2238 = vmatprep.mubr.bf16.mxu0 0
        %2239 = vmatmul.mubr.bf16.gmra.mxu0 %v2106
        %v2240 = vpop.f32.mrf.mxu0
        %v2241 = vadd.f32 %v2132, %v2240
        %v2242 = vpop.f32.mrf.mxu0
        %v2243 = vpop.f32.mrf.mxu0
        %v2244 = vadd.f32 %v2132, %v2243
        %v2245 = vpop.f32.mrf.mxu0
        %2246 = vmatprep.mubr.bf16.mxu0 0
        %2247 = vmatmul.mubr.bf16.gmra.mxu0 %v2107
        %v2248 = vpop.f32.mrf.mxu0
        %v2249 = vadd.f32 %v2132, %v2248
        %v2250 = vpop.f32.mrf.mxu0
        %v2251 = vpop.f32.mrf.mxu0
        %v2252 = vadd.f32 %v2132, %v2251
        %v2253 = vpop.f32.mrf.mxu0
        %2254 = vmatprep.mubr.bf16.mxu0 0
        %2255 = vmatmul.mubr.bf16.gmra.mxu0 %v2108
        %v2256 = vpop.f32.mrf.mxu0
        %v2257 = vadd.f32 %v2132, %v2256
        %v2258 = vpop.f32.mrf.mxu0
        %v2259 = vpop.f32.mrf.mxu0
        %v2260 = vadd.f32 %v2132, %v2259
        %v2261 = vpop.f32.mrf.mxu0
        %2262 = vmatprep.mubr.bf16.mxu0 0
        %2263 = vmatmul.mubr.bf16.gmra.mxu0 %v2109
        %v2264 = vpop.f32.mrf.mxu0
        %v2265 = vadd.f32 %v2132, %v2264
        %v2266 = vpop.f32.mrf.mxu0
        %v2267 = vpop.f32.mrf.mxu0
        %v2268 = vadd.f32 %v2132, %v2267
        %v2269 = vpop.f32.mrf.mxu0
        %2270 = vmatprep.mubr.bf16.mxu0 0
        %2271 = vmatmul.mubr.bf16.gmra.mxu0 %v2110
        %v2272 = vpop.f32.mrf.mxu0
        %v2273 = vadd.f32 %v2132, %v2272
        %v2274 = vpop.f32.mrf.mxu0
        %v2275 = vpop.f32.mrf.mxu0
        %v2276 = vadd.f32 %v2132, %v2275
        %v2277 = vpop.f32.mrf.mxu0
        %2278 = vdwg.mxu0
        %v2279 = vlaneseq
        %v2280 = vshrl.u32 %v2279, 7
        %v2281 = vadd.s32 %v2280, 8
        %v2282 = vadd.s32 %v2280, 16
        %v2283 = vadd.s32 %v2280, 24
        %v2284 = vadd.s32 %v2280, 32
        %v2285 = vadd.s32 %v2280, 40
        %v2286 = vadd.s32 %v2280, 48
        %v2287 = vadd.s32 %v2280, 56
        %v2288 = vadd.s32 %v2280, 64
        %v2289 = vadd.s32 %v2280, 72
        %v2290 = vadd.s32 %v2280, 80
        %v2291 = vadd.s32 %v2280, 88
        %v2292 = vadd.s32 %v2280, 96
        %v2293 = vadd.s32 %v2280, 104
        %v2294 = vadd.s32 %v2280, 112
        %v2295 = vadd.s32 %v2280, 120
        %vm2296 = vcmp.lt.s32.totalorder %v2280, 128
        %vm2297 = vcmp.lt.s32.totalorder %v2281, 128
        %vm2298 = vcmp.lt.s32.totalorder %v2282, 128
        %vm2299 = vcmp.lt.s32.totalorder %v2283, 128
        %vm2300 = vcmp.lt.s32.totalorder %v2284, 128
        %vm2301 = vcmp.lt.s32.totalorder %v2285, 128
        %vm2302 = vcmp.lt.s32.totalorder %v2286, 128
        %vm2303 = vcmp.lt.s32.totalorder %v2287, 128
        %vm2304 = vcmp.lt.s32.totalorder %v2288, 128
        %vm2305 = vcmp.lt.s32.totalorder %v2289, 128
        %vm2306 = vcmp.lt.s32.totalorder %v2290, 128
        %vm2307 = vcmp.lt.s32.totalorder %v2291, 128
        %vm2308 = vcmp.lt.s32.totalorder %v2292, 128
        %vm2309 = vcmp.lt.s32.totalorder %v2293, 128
        %vm2310 = vcmp.lt.s32.totalorder %v2294, 128
        %vm2311 = vcmp.lt.s32.totalorder %v2295, 128
        %v2312 = vsel %vm2296, 1, 0
        %v2313 = vsel %vm2297, 1, 0
        %v2314 = vsel %vm2298, 1, 0
        %v2315 = vsel %vm2299, 1, 0
        %v2316 = vsel %vm2300, 1, 0
        %v2317 = vsel %vm2301, 1, 0
        %v2318 = vsel %vm2302, 1, 0
        %v2319 = vsel %vm2303, 1, 0
        %v2320 = vsel %vm2304, 1, 0
        %v2321 = vsel %vm2305, 1, 0
        %v2322 = vsel %vm2306, 1, 0
        %v2323 = vsel %vm2307, 1, 0
        %v2324 = vsel %vm2308, 1, 0
        %v2325 = vsel %vm2309, 1, 0
        %v2326 = vsel %vm2310, 1, 0
        %v2327 = vsel %vm2311, 1, 0
        %v2328 = vcvt.s32.f32 %v2312
        %v2329 = vcvt.s32.f32 %v2313
        %v2330 = vcvt.s32.f32 %v2314
        %v2331 = vcvt.s32.f32 %v2315
        %v2332 = vcvt.s32.f32 %v2316
        %v2333 = vcvt.s32.f32 %v2317
        %v2334 = vcvt.s32.f32 %v2318
        %v2335 = vcvt.s32.f32 %v2319
        %v2336 = vcvt.s32.f32 %v2320
        %v2337 = vcvt.s32.f32 %v2321
        %v2338 = vcvt.s32.f32 %v2322
        %v2339 = vcvt.s32.f32 %v2323
        %v2340 = vcvt.s32.f32 %v2324
        %v2341 = vcvt.s32.f32 %v2325
        %v2342 = vcvt.s32.f32 %v2326
        %v2343 = vcvt.s32.f32 %v2327
        %v2344 = vmul.f32 %v2217, %v2328
        %v2345 = vmul.f32 %v2220, %v2329
        %v2346 = vmul.f32 %v2225, %v2330
        %v2347 = vmul.f32 %v2228, %v2331
        %v2348 = vmul.f32 %v2233, %v2332
        %v2349 = vmul.f32 %v2236, %v2333
        %v2350 = vmul.f32 %v2241, %v2334
        %v2351 = vmul.f32 %v2244, %v2335
        %v2352 = vmul.f32 %v2249, %v2336
        %v2353 = vmul.f32 %v2252, %v2337
        %v2354 = vmul.f32 %v2257, %v2338
        %v2355 = vmul.f32 %v2260, %v2339
        %v2356 = vmul.f32 %v2265, %v2340
        %v2357 = vmul.f32 %v2268, %v2341
        %v2358 = vmul.f32 %v2273, %v2342
        %v2359 = vmul.f32 %v2276, %v2343
        %v2360 = vadd.f32 %v2344, %v2345
        %v2361 = vadd.f32 %v2360, %v2346
        %v2362 = vadd.f32 %v2361, %v2347
        %v2363 = vadd.f32 %v2362, %v2348
        %v2364 = vadd.f32 %v2363, %v2349
        %v2365 = vadd.f32 %v2364, %v2350
        %v2366 = vadd.f32 %v2365, %v2351
        %v2367 = vadd.f32 %v2366, %v2352
        %v2368 = vadd.f32 %v2367, %v2353
        %v2369 = vadd.f32 %v2368, %v2354
        %v2370 = vadd.f32 %v2369, %v2355
        %v2371 = vadd.f32 %v2370, %v2356
        %v2372 = vadd.f32 %v2371, %v2357
        %v2373 = vadd.f32 %v2372, %v2358
        %v2374 = vadd.f32 %v2373, %v2359
        %v2375 = vrot.slane %v2374, 4
        %v2376 = vadd.f32 %v2374, %v2375
        %v2377 = vrot.slane %v2376, 2
        %v2378 = vadd.f32 %v2376, %v2377
        %v2379 = vrot.slane %v2378, 1
        %v2380 = vadd.f32 %v2378, %v2379
        %v2381 = vmul.f32 %v2380, 0.0078125
        %v2382 = vsub.f32 %v2217, %v2381
        %v2383 = vsub.f32 %v2220, %v2381
        %v2384 = vsub.f32 %v2225, %v2381
        %v2385 = vsub.f32 %v2228, %v2381
        %v2386 = vsub.f32 %v2233, %v2381
        %v2387 = vsub.f32 %v2236, %v2381
        %v2388 = vsub.f32 %v2241, %v2381
        %v2389 = vsub.f32 %v2244, %v2381
        %v2390 = vsub.f32 %v2249, %v2381
        %v2391 = vsub.f32 %v2252, %v2381
        %v2392 = vsub.f32 %v2257, %v2381
        %v2393 = vsub.f32 %v2260, %v2381
        %v2394 = vsub.f32 %v2265, %v2381
        %v2395 = vsub.f32 %v2268, %v2381
        %v2396 = vsub.f32 %v2273, %v2381
        %v2397 = vsub.f32 %v2276, %v2381
        %v2398 = vmul.f32 %v2382, %v2328
        %v2399 = vmul.f32 %v2383, %v2329
        %v2400 = vmul.f32 %v2384, %v2330
        %v2401 = vmul.f32 %v2385, %v2331
        %v2402 = vmul.f32 %v2386, %v2332
        %v2403 = vmul.f32 %v2387, %v2333
        %v2404 = vmul.f32 %v2388, %v2334
        %v2405 = vmul.f32 %v2389, %v2335
        %v2406 = vmul.f32 %v2390, %v2336
        %v2407 = vmul.f32 %v2391, %v2337
        %v2408 = vmul.f32 %v2392, %v2338
        %v2409 = vmul.f32 %v2393, %v2339
        %v2410 = vmul.f32 %v2394, %v2340
        %v2411 = vmul.f32 %v2395, %v2341
        %v2412 = vmul.f32 %v2396, %v2342
        %v2413 = vmul.f32 %v2397, %v2343
        %v2414 = vmul.f32 %v2398, %v2398
        %v2415 = vmul.f32 %v2399, %v2399
        %v2416 = vmul.f32 %v2400, %v2400
        %v2417 = vmul.f32 %v2401, %v2401
        %v2418 = vmul.f32 %v2402, %v2402
        %v2419 = vmul.f32 %v2403, %v2403
        %v2420 = vmul.f32 %v2404, %v2404
        %v2421 = vmul.f32 %v2405, %v2405
        %v2422 = vmul.f32 %v2406, %v2406
        %v2423 = vmul.f32 %v2407, %v2407
        %v2424 = vmul.f32 %v2408, %v2408
        %v2425 = vmul.f32 %v2409, %v2409
        %v2426 = vmul.f32 %v2410, %v2410
        %v2427 = vmul.f32 %v2411, %v2411
        %v2428 = vmul.f32 %v2412, %v2412
        %v2429 = vmul.f32 %v2413, %v2413
        %v2430 = vadd.f32 %v2414, %v2415
        %v2431 = vadd.f32 %v2430, %v2416
        %v2432 = vadd.f32 %v2431, %v2417
        %v2433 = vadd.f32 %v2432, %v2418
        %v2434 = vadd.f32 %v2433, %v2419
        %v2435 = vadd.f32 %v2434, %v2420
        %v2436 = vadd.f32 %v2435, %v2421
        %v2437 = vadd.f32 %v2436, %v2422
        %v2438 = vadd.f32 %v2437, %v2423
        %v2439 = vadd.f32 %v2438, %v2424
        %v2440 = vadd.f32 %v2439, %v2425
        %v2441 = vadd.f32 %v2440, %v2426
        %v2442 = vadd.f32 %v2441, %v2427
        %v2443 = vadd.f32 %v2442, %v2428
        %v2444 = vadd.f32 %v2443, %v2429
        %v2445 = vrot.slane %v2444, 4
        %v2446 = vadd.f32 %v2444, %v2445
        %v2447 = vrot.slane %v2446, 2
        %v2448 = vadd.f32 %v2446, %v2447
        %v2449 = vrot.slane %v2448, 1
        %v2450 = vadd.f32 %v2448, %v2449
        %v2451 = vmul.f32 %v2450, 0.0078125
        %v2452 = vadd.f32 %v2451, 1e-05
        %v2453 = vrsqrt.pop %v2452
        %v2454 = vmul.f32 %v2382, %v2453
        %v2455 = vmul.f32 %v2383, %v2453
        %v2456 = vmul.f32 %v2384, %v2453
        %v2457 = vmul.f32 %v2385, %v2453
        %v2458 = vmul.f32 %v2386, %v2453
        %v2459 = vmul.f32 %v2387, %v2453
        %v2460 = vmul.f32 %v2388, %v2453
        %v2461 = vmul.f32 %v2389, %v2453
        %v2462 = vmul.f32 %v2390, %v2453
        %v2463 = vmul.f32 %v2391, %v2453
        %v2464 = vmul.f32 %v2392, %v2453
        %v2465 = vmul.f32 %v2393, %v2453
        %v2466 = vmul.f32 %v2394, %v2453
        %v2467 = vmul.f32 %v2395, %v2453
        %v2468 = vmul.f32 %v2396, %v2453
        %v2469 = vmul.f32 %v2397, %v2453
        %v2470 = vld [vmem:[%s1090] sm:$0x1]
        %v2472 = vlaneseq
        %v2473 = vshrl.u32 %v2472, 7
        %v2474 = vsub.s32 0, %v2473
        %v2475 = vrot.slane %v2470, %v2474
        %v2477 = vmul.f32 %v2454, %v2475
        %v2478 = vmul.f32 %v2455, %v2475
        %v2479 = vmul.f32 %v2456, %v2475
        %v2480 = vmul.f32 %v2457, %v2475
        %v2481 = vmul.f32 %v2458, %v2475
        %v2482 = vmul.f32 %v2459, %v2475
        %v2483 = vmul.f32 %v2460, %v2475
        %v2484 = vmul.f32 %v2461, %v2475
        %v2485 = vmul.f32 %v2462, %v2475
        %v2486 = vmul.f32 %v2463, %v2475
        %v2487 = vmul.f32 %v2464, %v2475
        %v2488 = vmul.f32 %v2465, %v2475
        %v2489 = vmul.f32 %v2466, %v2475
        %v2490 = vmul.f32 %v2467, %v2475
        %v2491 = vmul.f32 %v2468, %v2475
        %v2492 = vmul.f32 %v2469, %v2475
        %v2493 = vld [vmem:[%s1093] sm:$0x1]
        %v2495 = vlaneseq
        %v2496 = vshrl.u32 %v2495, 7
        %v2497 = vsub.s32 0, %v2496
        %v2498 = vrot.slane %v2493, %v2497
        %v2500 = vadd.f32 %v2477, %v2498
        %v2501 = vadd.f32 %v2478, %v2498
        %v2502 = vadd.f32 %v2479, %v2498
        %v2503 = vadd.f32 %v2480, %v2498
        %v2504 = vadd.f32 %v2481, %v2498
        %v2505 = vadd.f32 %v2482, %v2498
        %v2506 = vadd.f32 %v2483, %v2498
        %v2507 = vadd.f32 %v2484, %v2498
        %v2508 = vadd.f32 %v2485, %v2498
        %v2509 = vadd.f32 %v2486, %v2498
        %v2510 = vadd.f32 %v2487, %v2498
        %v2511 = vadd.f32 %v2488, %v2498
        %v2512 = vadd.f32 %v2489, %v2498
        %v2513 = vadd.f32 %v2490, %v2498
        %v2514 = vadd.f32 %v2491, %v2498
        %v2515 = vadd.f32 %v2492, %v2498
        %v2516 = vlaneseq
        %v2517 = vand.u32 %v2516, 127
        %vm2518 = vcmp.lt.s32.totalorder %v2517, 16
        %v2519 = vld [vmem:[#allocation3] sm:$0xff]
        %v2520 = vld [vmem:[#allocation3 + $0x8] sm:$0xff]
        %v2521 = vld [vmem:[#allocation3 + $0x10] sm:$0xff]
        %v2522 = vld [vmem:[#allocation3 + $0x18] sm:$0xff]
        %v2523 = vld [vmem:[#allocation3 + $0x20] sm:$0xff]
        %v2524 = vld [vmem:[#allocation3 + $0x28] sm:$0xff]
        %v2525 = vld [vmem:[#allocation3 + $0x30] sm:$0xff]
        %v2526 = vld [vmem:[#allocation3 + $0x38] sm:$0xff]
        %v2527 = vld [vmem:[#allocation3 + $0x40] sm:$0xff]
        %v2528 = vld [vmem:[#allocation3 + $0x48] sm:$0xff]
        %v2529 = vld [vmem:[#allocation3 + $0x50] sm:$0xff]
        %v2530 = vld [vmem:[#allocation3 + $0x58] sm:$0xff]
        %v2531 = vld [vmem:[#allocation3 + $0x60] sm:$0xff]
        %v2532 = vld [vmem:[#allocation3 + $0x68] sm:$0xff]
        %v2533 = vld [vmem:[#allocation3 + $0x70] sm:$0xff]
        %v2534 = vld [vmem:[#allocation3 + $0x78] sm:$0xff]
        %v2535 = vmul.f32 %v2500, %v2519
        %v2536 = vmul.f32 %v2501, %v2520
        %v2537 = vmul.f32 %v2502, %v2521
        %v2538 = vmul.f32 %v2503, %v2522
        %v2539 = vmul.f32 %v2504, %v2523
        %v2540 = vmul.f32 %v2505, %v2524
        %v2541 = vmul.f32 %v2506, %v2525
        %v2542 = vmul.f32 %v2507, %v2526
        %v2543 = vmul.f32 %v2508, %v2527
        %v2544 = vmul.f32 %v2509, %v2528
        %v2545 = vmul.f32 %v2510, %v2529
        %v2546 = vmul.f32 %v2511, %v2530
        %v2547 = vmul.f32 %v2512, %v2531
        %v2548 = vmul.f32 %v2513, %v2532
        %v2549 = vmul.f32 %v2514, %v2533
        %v2550 = vmul.f32 %v2515, %v2534
        %v2551 = vsel %vm2518, 1, 0
        %vm2552 = vcmp.eq.s32.totalorder %v2551, 1
        %v2553 = vsel %vm2552, %v2535, -1e+30
        %v2554 = vsel %vm2552, %v2536, -1e+30
        %v2555 = vsel %vm2552, %v2537, -1e+30
        %v2556 = vsel %vm2552, %v2538, -1e+30
        %v2557 = vsel %vm2552, %v2539, -1e+30
        %v2558 = vsel %vm2552, %v2540, -1e+30
        %v2559 = vsel %vm2552, %v2541, -1e+30
        %v2560 = vsel %vm2552, %v2542, -1e+30
        %v2561 = vsel %vm2552, %v2543, -1e+30
        %v2562 = vsel %vm2552, %v2544, -1e+30
        %v2563 = vsel %vm2552, %v2545, -1e+30
        %v2564 = vsel %vm2552, %v2546, -1e+30
        %v2565 = vsel %vm2552, %v2547, -1e+30
        %v2566 = vsel %vm2552, %v2548, -1e+30
        %v2567 = vsel %vm2552, %v2549, -1e+30
        %v2568 = vsel %vm2552, %v2550, -1e+30
        %2569 = vmax.xlane.f32.xlu0 %v2553
        %v2570 = vpop.xlane.xlu0 %2569
        %2571 = vmax.xlane.f32.xlu0 %v2554
        %v2572 = vpop.xlane.xlu0 %2571
        %2573 = vmax.xlane.f32.xlu0 %v2555
        %v2574 = vpop.xlane.xlu0 %2573
        %2575 = vmax.xlane.f32.xlu0 %v2556
        %v2576 = vpop.xlane.xlu0 %2575
        %2577 = vmax.xlane.f32.xlu0 %v2557
        %v2578 = vpop.xlane.xlu0 %2577
        %2579 = vmax.xlane.f32.xlu0 %v2558
        %v2580 = vpop.xlane.xlu0 %2579
        %2581 = vmax.xlane.f32.xlu0 %v2559
        %v2582 = vpop.xlane.xlu0 %2581
        %2583 = vmax.xlane.f32.xlu0 %v2560
        %v2584 = vpop.xlane.xlu0 %2583
        %2585 = vmax.xlane.f32.xlu0 %v2561
        %v2586 = vpop.xlane.xlu0 %2585
        %2587 = vmax.xlane.f32.xlu0 %v2562
        %v2588 = vpop.xlane.xlu0 %2587
        %2589 = vmax.xlane.f32.xlu0 %v2563
        %v2590 = vpop.xlane.xlu0 %2589
        %2591 = vmax.xlane.f32.xlu0 %v2564
        %v2592 = vpop.xlane.xlu0 %2591
        %2593 = vmax.xlane.f32.xlu0 %v2565
        %v2594 = vpop.xlane.xlu0 %2593
        %2595 = vmax.xlane.f32.xlu0 %v2566
        %v2596 = vpop.xlane.xlu0 %2595
        %2597 = vmax.xlane.f32.xlu0 %v2567
        %v2598 = vpop.xlane.xlu0 %2597
        %2599 = vmax.xlane.f32.xlu0 %v2568
        %v2600 = vpop.xlane.xlu0 %2599
        %v2601 = vsub.f32 %v2553, %v2570
        %v2602 = vsub.f32 %v2554, %v2572
        %v2603 = vsub.f32 %v2555, %v2574
        %v2604 = vsub.f32 %v2556, %v2576
        %v2605 = vsub.f32 %v2557, %v2578
        %v2606 = vsub.f32 %v2558, %v2580
        %v2607 = vsub.f32 %v2559, %v2582
        %v2608 = vsub.f32 %v2560, %v2584
        %v2609 = vsub.f32 %v2561, %v2586
        %v2610 = vsub.f32 %v2562, %v2588
        %v2611 = vsub.f32 %v2563, %v2590
        %v2612 = vsub.f32 %v2564, %v2592
        %v2613 = vsub.f32 %v2565, %v2594
        %v2614 = vsub.f32 %v2566, %v2596
        %v2615 = vsub.f32 %v2567, %v2598
        %v2616 = vsub.f32 %v2568, %v2600
        %v2617 = vmul.f32 %v2601, 1.442695
        %v2618 = vpow.pop %v2617
        %v2619 = vmul.f32 %v2602, 1.442695
        %v2620 = vpow.pop %v2619
        %v2621 = vmul.f32 %v2603, 1.442695
        %v2622 = vpow.pop %v2621
        %v2623 = vmul.f32 %v2604, 1.442695
        %v2624 = vpow.pop %v2623
        %v2625 = vmul.f32 %v2605, 1.442695
        %v2626 = vpow.pop %v2625
        %v2627 = vmul.f32 %v2606, 1.442695
        %v2628 = vpow.pop %v2627
        %v2629 = vmul.f32 %v2607, 1.442695
        %v2630 = vpow.pop %v2629
        %v2631 = vmul.f32 %v2608, 1.442695
        %v2632 = vpow.pop %v2631
        %v2633 = vmul.f32 %v2609, 1.442695
        %v2634 = vpow.pop %v2633
        %v2635 = vmul.f32 %v2610, 1.442695
        %v2636 = vpow.pop %v2635
        %v2637 = vmul.f32 %v2611, 1.442695
        %v2638 = vpow.pop %v2637
        %v2639 = vmul.f32 %v2612, 1.442695
        %v2640 = vpow.pop %v2639
        %v2641 = vmul.f32 %v2613, 1.442695
        %v2642 = vpow.pop %v2641
        %v2643 = vmul.f32 %v2614, 1.442695
        %v2644 = vpow.pop %v2643
        %v2645 = vmul.f32 %v2615, 1.442695
        %v2646 = vpow.pop %v2645
        %v2647 = vmul.f32 %v2616, 1.442695
        %v2648 = vpow.pop %v2647
        %2649 = vadd.xlane.f32.xlu0 %v2618
        %v2650 = vpop.xlane.xlu0 %2649
        %2651 = vadd.xlane.f32.xlu0 %v2620
        %v2652 = vpop.xlane.xlu0 %2651
        %2653 = vadd.xlane.f32.xlu0 %v2622
        %v2654 = vpop.xlane.xlu0 %2653
        %2655 = vadd.xlane.f32.xlu0 %v2624
        %v2656 = vpop.xlane.xlu0 %2655
        %2657 = vadd.xlane.f32.xlu0 %v2626
        %v2658 = vpop.xlane.xlu0 %2657
        %2659 = vadd.xlane.f32.xlu0 %v2628
        %v2660 = vpop.xlane.xlu0 %2659
        %2661 = vadd.xlane.f32.xlu0 %v2630
        %v2662 = vpop.xlane.xlu0 %2661
        %2663 = vadd.xlane.f32.xlu0 %v2632
        %v2664 = vpop.xlane.xlu0 %2663
        %2665 = vadd.xlane.f32.xlu0 %v2634
        %v2666 = vpop.xlane.xlu0 %2665
        %2667 = vadd.xlane.f32.xlu0 %v2636
        %v2668 = vpop.xlane.xlu0 %2667
        %2669 = vadd.xlane.f32.xlu0 %v2638
        %v2670 = vpop.xlane.xlu0 %2669
        %2671 = vadd.xlane.f32.xlu0 %v2640
        %v2672 = vpop.xlane.xlu0 %2671
        %2673 = vadd.xlane.f32.xlu0 %v2642
        %v2674 = vpop.xlane.xlu0 %2673
        %2675 = vadd.xlane.f32.xlu0 %v2644
        %v2676 = vpop.xlane.xlu0 %2675
        %2677 = vadd.xlane.f32.xlu0 %v2646
        %v2678 = vpop.xlane.xlu0 %2677
        %2679 = vadd.xlane.f32.xlu0 %v2648
        %v2680 = vpop.xlane.xlu0 %2679
        %v2681 = vrcp.pop %v2650
        %v2682 = vrcp.pop %v2652
        %v2683 = vrcp.pop %v2654
        %v2684 = vrcp.pop %v2656
        %v2685 = vrcp.pop %v2658
        %v2686 = vrcp.pop %v2660
        %v2687 = vrcp.pop %v2662
        %v2688 = vrcp.pop %v2664
        %v2689 = vrcp.pop %v2666
        %v2690 = vrcp.pop %v2668
        %v2691 = vrcp.pop %v2670
        %v2692 = vrcp.pop %v2672
        %v2693 = vrcp.pop %v2674
        %v2694 = vrcp.pop %v2676
        %v2695 = vrcp.pop %v2678
        %v2696 = vrcp.pop %v2680
        %v2697 = vmul.f32 %v2618, %v2681
        %v2698 = vmul.f32 %v2620, %v2682
        %v2699 = vmul.f32 %v2622, %v2683
        %v2700 = vmul.f32 %v2624, %v2684
        %v2701 = vmul.f32 %v2626, %v2685
        %v2702 = vmul.f32 %v2628, %v2686
        %v2703 = vmul.f32 %v2630, %v2687
        %v2704 = vmul.f32 %v2632, %v2688
        %v2705 = vmul.f32 %v2634, %v2689
        %v2706 = vmul.f32 %v2636, %v2690
        %v2707 = vmul.f32 %v2638, %v2691
        %v2708 = vmul.f32 %v2640, %v2692
        %v2709 = vmul.f32 %v2642, %v2693
        %v2710 = vmul.f32 %v2644, %v2694
        %v2711 = vmul.f32 %v2646, %v2695
        %v2712 = vmul.f32 %v2648, %v2696
        %v2713 = vld [vmem:[#allocation5] sm:$0xff]
        %v2714 = vld [vmem:[#allocation5 + $0x8] sm:$0xff]
        %v2715 = vld [vmem:[#allocation5 + $0x10] sm:$0xff]
        %v2716 = vld [vmem:[#allocation5 + $0x18] sm:$0xff]
        %v2717 = vld [vmem:[#allocation5 + $0x20] sm:$0xff]
        %v2718 = vld [vmem:[#allocation5 + $0x28] sm:$0xff]
        %v2719 = vld [vmem:[#allocation5 + $0x30] sm:$0xff]
        %v2720 = vld [vmem:[#allocation5 + $0x38] sm:$0xff]
        %v2721 = vld [vmem:[#allocation5 + $0x40] sm:$0xff]
        %v2722 = vld [vmem:[#allocation5 + $0x48] sm:$0xff]
        %v2723 = vld [vmem:[#allocation5 + $0x50] sm:$0xff]
        %v2724 = vld [vmem:[#allocation5 + $0x58] sm:$0xff]
        %v2725 = vld [vmem:[#allocation5 + $0x60] sm:$0xff]
        %v2726 = vld [vmem:[#allocation5 + $0x68] sm:$0xff]
        %v2727 = vld [vmem:[#allocation5 + $0x70] sm:$0xff]
        %v2728 = vld [vmem:[#allocation5 + $0x78] sm:$0xff]
        %v2729 = vmul.f32 %v2713, %v2697
        %v2730 = vmul.f32 %v2714, %v2698
        %v2731 = vmul.f32 %v2715, %v2699
        %v2732 = vmul.f32 %v2716, %v2700
        %v2733 = vmul.f32 %v2717, %v2701
        %v2734 = vmul.f32 %v2718, %v2702
        %v2735 = vmul.f32 %v2719, %v2703
        %v2736 = vmul.f32 %v2720, %v2704
        %v2737 = vmul.f32 %v2721, %v2705
        %v2738 = vmul.f32 %v2722, %v2706
        %v2739 = vmul.f32 %v2723, %v2707
        %v2740 = vmul.f32 %v2724, %v2708
        %v2741 = vmul.f32 %v2725, %v2709
        %v2742 = vmul.f32 %v2726, %v2710
        %v2743 = vmul.f32 %v2727, %v2711
        %v2744 = vmul.f32 %v2728, %v2712
        %v2745 = vld [vmem:[%s955] sm:$0xf]
        %v2746 = vld [vmem:[%s955 + $0x4] sm:$0xf]
        %v2747 = vld [vmem:[%s955 + $0x8] sm:$0xf]
        %v2748 = vld [vmem:[%s955 + $0xc] sm:$0xf]
        %v2749 = vld [vmem:[%s955 + $0x10] sm:$0xf]
        %v2750 = vld [vmem:[%s955 + $0x14] sm:$0xf]
        %v2751 = vld [vmem:[%s955 + $0x18] sm:$0xf]
        %v2752 = vld [vmem:[%s955 + $0x1c] sm:$0xf]
        %v2753 = vld [vmem:[%s955 + $0x20] sm:$0xf]
        %v2754 = vld [vmem:[%s955 + $0x24] sm:$0xf]
        %v2755 = vld [vmem:[%s955 + $0x28] sm:$0xf]
        %v2756 = vld [vmem:[%s955 + $0x2c] sm:$0xf]
        %v2757 = vld [vmem:[%s955 + $0x30] sm:$0xf]
        %v2758 = vld [vmem:[%s955 + $0x34] sm:$0xf]
        %v2759 = vld [vmem:[%s955 + $0x38] sm:$0xf]
        %v2760 = vld [vmem:[%s955 + $0x3c] sm:$0xf]
        %v2761 = vld [vmem:[%s964] sm:$0xf]
        %v2762 = vld [vmem:[%s964 + $0x4] sm:$0xf]
        %v2763 = vld [vmem:[%s964 + $0x8] sm:$0xf]
        %v2764 = vld [vmem:[%s964 + $0xc] sm:$0xf]
        %v2765 = vld [vmem:[%s964 + $0x10] sm:$0xf]
        %v2766 = vld [vmem:[%s964 + $0x14] sm:$0xf]
        %v2767 = vld [vmem:[%s964 + $0x18] sm:$0xf]
        %v2768 = vld [vmem:[%s964 + $0x1c] sm:$0xf]
        %v2769 = vld [vmem:[%s964 + $0x20] sm:$0xf]
        %v2770 = vld [vmem:[%s964 + $0x24] sm:$0xf]
        %v2771 = vld [vmem:[%s964 + $0x28] sm:$0xf]
        %v2772 = vld [vmem:[%s964 + $0x2c] sm:$0xf]
        %v2773 = vld [vmem:[%s964 + $0x30] sm:$0xf]
        %v2774 = vld [vmem:[%s964 + $0x34] sm:$0xf]
        %v2775 = vld [vmem:[%s964 + $0x38] sm:$0xf]
        %v2776 = vld [vmem:[%s964 + $0x3c] sm:$0xf]
        %v2777 = vld [vmem:[%s1096] sm:$0x1]
        %v2778 = vld [vmem:[%s1099] sm:$0x1]
        %v2779 = vpack.c.bf16 %v2730, %v2729
        %v2780 = vpack.c.bf16 %v2732, %v2731
        %v2781 = vpack.c.bf16 %v2734, %v2733
        %v2782 = vpack.c.bf16 %v2736, %v2735
        %v2783 = vpack.c.bf16 %v2738, %v2737
        %v2784 = vpack.c.bf16 %v2740, %v2739
        %v2785 = vpack.c.bf16 %v2742, %v2741
        %v2786 = vpack.c.bf16 %v2744, %v2743
        %v2788 = vlaneseq
        %v2789 = vshrl.u32 %v2788, 7
        %v2790 = vsub.s32 0, %v2789
        %v2791 = vrot.slane %v2777, %v2790
        %v2809 = vunpack.c.l.b16 %v2745
        %v2810 = vunpack.c.l.b16 %v2746
        %v2811 = vunpack.c.l.b16 %v2747
        %v2812 = vunpack.c.l.b16 %v2748
        %v2813 = vunpack.c.l.b16 %v2749
        %v2814 = vunpack.c.l.b16 %v2750
        %v2815 = vunpack.c.l.b16 %v2751
        %v2816 = vunpack.c.l.b16 %v2752
        %v2817 = vunpack.c.l.b16 %v2753
        %v2818 = vunpack.c.l.b16 %v2754
        %v2819 = vunpack.c.l.b16 %v2755
        %v2820 = vunpack.c.l.b16 %v2756
        %v2821 = vunpack.c.l.b16 %v2757
        %v2822 = vunpack.c.l.b16 %v2758
        %v2823 = vunpack.c.l.b16 %v2759
        %v2824 = vunpack.c.l.b16 %v2760
        %v2825 = vpack.c.b16 %v2810, %v2809
        %v2826 = vpack.c.b16 %v2812, %v2811
        %v2827 = vpack.c.b16 %v2814, %v2813
        %v2828 = vpack.c.b16 %v2816, %v2815
        %v2829 = vpack.c.b16 %v2818, %v2817
        %v2830 = vpack.c.b16 %v2820, %v2819
        %v2831 = vpack.c.b16 %v2822, %v2821
        %v2832 = vpack.c.b16 %v2824, %v2823
        %2841 = vmatprep.subr.bf16.mxu0 0
        %2842 = vmatpush1.bf16.msra.mxu0 %v2832
        %2843 = vmatprep.subr.bf16.mxu0 0
        %2844 = vmatpush1.bf16.msra.mxu0 %v2831
        %2845 = vmatprep.subr.bf16.mxu0 0
        %2846 = vmatpush1.bf16.msra.mxu0 %v2830
        %2847 = vmatprep.subr.bf16.mxu0 0
        %2848 = vmatpush1.bf16.msra.mxu0 %v2829
        %2849 = vmatprep.subr.bf16.mxu0 0
        %2850 = vmatpush1.bf16.msra.mxu0 %v2828
        %2851 = vmatprep.subr.bf16.mxu0 0
        %2852 = vmatpush1.bf16.msra.mxu0 %v2827
        %2853 = vmatprep.subr.bf16.mxu0 0
        %2854 = vmatpush1.bf16.msra.mxu0 %v2826
        %2855 = vmatprep.subr.bf16.mxu0 0
        %2856 = vmatpush1.bf16.msra.mxu0 %v2825
        %2857 = vmatprep.subr.bf16.mxu0 0
        %2858 = vmatpush2.bf16.msra.mxu0 0
        %2859 = vmatprep.subr.bf16.mxu0 0
        %2860 = vmatpush2.bf16.msra.mxu0 0
        %2861 = vmatprep.subr.bf16.mxu0 0
        %2862 = vmatpush2.bf16.msra.mxu0 0
        %2863 = vmatprep.subr.bf16.mxu0 0
        %2864 = vmatpush2.bf16.msra.mxu0 0
        %2865 = vmatprep.subr.bf16.mxu0 0
        %2866 = vmatpush2.bf16.msra.mxu0 0
        %2867 = vmatprep.subr.bf16.mxu0 0
        %2868 = vmatpush2.bf16.msra.mxu0 0
        %2869 = vmatprep.subr.bf16.mxu0 0
        %2870 = vmatpush2.bf16.msra.mxu0 0
        %2871 = vmatprep.subr.bf16.mxu0 0
        %2872 = vmatpush2.bf16.msra.mxu0 0
        %2873 = vmatprep.mubr.bf16.mxu0 0
        %2874 = vmatmul.mubr.bf16.gmra.mxu0 %v2779
        %v2875 = vpop.f32.mrf.mxu0
        %v2876 = vadd.f32 %v2791, %v2875
        %v2877 = vpop.f32.mrf.mxu0
        %v2878 = vpop.f32.mrf.mxu0
        %v2879 = vadd.f32 %v2791, %v2878
        %v2880 = vpop.f32.mrf.mxu0
        %2881 = vmatprep.mubr.bf16.mxu0 0
        %2882 = vmatmul.mubr.bf16.gmra.mxu0 %v2780
        %v2883 = vpop.f32.mrf.mxu0
        %v2884 = vadd.f32 %v2791, %v2883
        %v2885 = vpop.f32.mrf.mxu0
        %v2886 = vpop.f32.mrf.mxu0
        %v2887 = vadd.f32 %v2791, %v2886
        %v2888 = vpop.f32.mrf.mxu0
        %2889 = vmatprep.mubr.bf16.mxu0 0
        %2890 = vmatmul.mubr.bf16.gmra.mxu0 %v2781
        %v2891 = vpop.f32.mrf.mxu0
        %v2892 = vadd.f32 %v2791, %v2891
        %v2893 = vpop.f32.mrf.mxu0
        %v2894 = vpop.f32.mrf.mxu0
        %v2895 = vadd.f32 %v2791, %v2894
        %v2896 = vpop.f32.mrf.mxu0
        %2897 = vmatprep.mubr.bf16.mxu0 0
        %2898 = vmatmul.mubr.bf16.gmra.mxu0 %v2782
        %v2899 = vpop.f32.mrf.mxu0
        %v2900 = vadd.f32 %v2791, %v2899
        %v2901 = vpop.f32.mrf.mxu0
        %v2902 = vpop.f32.mrf.mxu0
        %v2903 = vadd.f32 %v2791, %v2902
        %v2904 = vpop.f32.mrf.mxu0
        %2905 = vmatprep.mubr.bf16.mxu0 0
        %2906 = vmatmul.mubr.bf16.gmra.mxu0 %v2783
        %v2907 = vpop.f32.mrf.mxu0
        %v2908 = vadd.f32 %v2791, %v2907
        %v2909 = vpop.f32.mrf.mxu0
        %v2910 = vpop.f32.mrf.mxu0
        %v2911 = vadd.f32 %v2791, %v2910
        %v2912 = vpop.f32.mrf.mxu0
        %2913 = vmatprep.mubr.bf16.mxu0 0
        %2914 = vmatmul.mubr.bf16.gmra.mxu0 %v2784
        %v2915 = vpop.f32.mrf.mxu0
        %v2916 = vadd.f32 %v2791, %v2915
        %v2917 = vpop.f32.mrf.mxu0
        %v2918 = vpop.f32.mrf.mxu0
        %v2919 = vadd.f32 %v2791, %v2918
        %v2920 = vpop.f32.mrf.mxu0
        %2921 = vmatprep.mubr.bf16.mxu0 0
        %2922 = vmatmul.mubr.bf16.gmra.mxu0 %v2785
        %v2923 = vpop.f32.mrf.mxu0
        %v2924 = vadd.f32 %v2791, %v2923
        %v2925 = vpop.f32.mrf.mxu0
        %v2926 = vpop.f32.mrf.mxu0
        %v2927 = vadd.f32 %v2791, %v2926
        %v2928 = vpop.f32.mrf.mxu0
        %2929 = vmatprep.mubr.bf16.mxu0 0
        %2930 = vmatmul.mubr.bf16.gmra.mxu0 %v2786
        %v2931 = vpop.f32.mrf.mxu0
        %v2932 = vadd.f32 %v2791, %v2931
        %v2933 = vpop.f32.mrf.mxu0
        %v2934 = vpop.f32.mrf.mxu0
        %v2935 = vadd.f32 %v2791, %v2934
        %v2936 = vpop.f32.mrf.mxu0
        %2937 = vdwg.mxu0
        %v2939 = vlaneseq
        %v2940 = vshrl.u32 %v2939, 7
        %v2941 = vsub.s32 0, %v2940
        %v2942 = vrot.slane %v2778, %v2941
        %v2960 = vunpack.c.l.b16 %v2761
        %v2961 = vunpack.c.l.b16 %v2762
        %v2962 = vunpack.c.l.b16 %v2763
        %v2963 = vunpack.c.l.b16 %v2764
        %v2964 = vunpack.c.l.b16 %v2765
        %v2965 = vunpack.c.l.b16 %v2766
        %v2966 = vunpack.c.l.b16 %v2767
        %v2967 = vunpack.c.l.b16 %v2768
        %v2968 = vunpack.c.l.b16 %v2769
        %v2969 = vunpack.c.l.b16 %v2770
        %v2970 = vunpack.c.l.b16 %v2771
        %v2971 = vunpack.c.l.b16 %v2772
        %v2972 = vunpack.c.l.b16 %v2773
        %v2973 = vunpack.c.l.b16 %v2774
        %v2974 = vunpack.c.l.b16 %v2775
        %v2975 = vunpack.c.l.b16 %v2776
        %v2976 = vpack.c.b16 %v2961, %v2960
        %v2977 = vpack.c.b16 %v2963, %v2962
        %v2978 = vpack.c.b16 %v2965, %v2964
        %v2979 = vpack.c.b16 %v2967, %v2966
        %v2980 = vpack.c.b16 %v2969, %v2968
        %v2981 = vpack.c.b16 %v2971, %v2970
        %v2982 = vpack.c.b16 %v2973, %v2972
        %v2983 = vpack.c.b16 %v2975, %v2974
        %2992 = vmatprep.subr.bf16.mxu0 0
        %2993 = vmatpush1.bf16.msra.mxu0 %v2983
        %2994 = vmatprep.subr.bf16.mxu0 0
        %2995 = vmatpush1.bf16.msra.mxu0 %v2982
        %2996 = vmatprep.subr.bf16.mxu0 0
        %2997 = vmatpush1.bf16.msra.mxu0 %v2981
        %2998 = vmatprep.subr.bf16.mxu0 0
        %2999 = vmatpush1.bf16.msra.mxu0 %v2980
        %3000 = vmatprep.subr.bf16.mxu0 0
        %3001 = vmatpush1.bf16.msra.mxu0 %v2979
        %3002 = vmatprep.subr.bf16.mxu0 0
        %3003 = vmatpush1.bf16.msra.mxu0 %v2978
        %3004 = vmatprep.subr.bf16.mxu0 0
        %3005 = vmatpush1.bf16.msra.mxu0 %v2977
        %3006 = vmatprep.subr.bf16.mxu0 0
        %3007 = vmatpush1.bf16.msra.mxu0 %v2976
        %3008 = vmatprep.subr.bf16.mxu0 0
        %3009 = vmatpush2.bf16.msra.mxu0 0
        %3010 = vmatprep.subr.bf16.mxu0 0
        %3011 = vmatpush2.bf16.msra.mxu0 0
        %3012 = vmatprep.subr.bf16.mxu0 0
        %3013 = vmatpush2.bf16.msra.mxu0 0
        %3014 = vmatprep.subr.bf16.mxu0 0
        %3015 = vmatpush2.bf16.msra.mxu0 0
        %3016 = vmatprep.subr.bf16.mxu0 0
        %3017 = vmatpush2.bf16.msra.mxu0 0
        %3018 = vmatprep.subr.bf16.mxu0 0
        %3019 = vmatpush2.bf16.msra.mxu0 0
        %3020 = vmatprep.subr.bf16.mxu0 0
        %3021 = vmatpush2.bf16.msra.mxu0 0
        %3022 = vmatprep.subr.bf16.mxu0 0
        %3023 = vmatpush2.bf16.msra.mxu0 0
        %3024 = vmatprep.mubr.bf16.mxu0 0
        %3025 = vmatmul.mubr.bf16.gmra.mxu0 %v2779
        %v3026 = vpop.f32.mrf.mxu0
        %v3027 = vadd.f32 %v2942, %v3026
        %v3028 = vpop.f32.mrf.mxu0
        %v3029 = vpop.f32.mrf.mxu0
        %v3030 = vadd.f32 %v2942, %v3029
        %v3031 = vpop.f32.mrf.mxu0
        %3032 = vmatprep.mubr.bf16.mxu0 0
        %3033 = vmatmul.mubr.bf16.gmra.mxu0 %v2780
        %v3034 = vpop.f32.mrf.mxu0
        %v3035 = vadd.f32 %v2942, %v3034
        %v3036 = vpop.f32.mrf.mxu0
        %v3037 = vpop.f32.mrf.mxu0
        %v3038 = vadd.f32 %v2942, %v3037
        %v3039 = vpop.f32.mrf.mxu0
        %3040 = vmatprep.mubr.bf16.mxu0 0
        %3041 = vmatmul.mubr.bf16.gmra.mxu0 %v2781
        %v3042 = vpop.f32.mrf.mxu0
        %v3043 = vadd.f32 %v2942, %v3042
        %v3044 = vpop.f32.mrf.mxu0
        %v3045 = vpop.f32.mrf.mxu0
        %v3046 = vadd.f32 %v2942, %v3045
        %v3047 = vpop.f32.mrf.mxu0
        %3048 = vmatprep.mubr.bf16.mxu0 0
        %3049 = vmatmul.mubr.bf16.gmra.mxu0 %v2782
        %v3050 = vpop.f32.mrf.mxu0
        %v3051 = vadd.f32 %v2942, %v3050
        %v3052 = vpop.f32.mrf.mxu0
        %v3053 = vpop.f32.mrf.mxu0
        %v3054 = vadd.f32 %v2942, %v3053
        %v3055 = vpop.f32.mrf.mxu0
        %3056 = vmatprep.mubr.bf16.mxu0 0
        %3057 = vmatmul.mubr.bf16.gmra.mxu0 %v2783
        %v3058 = vpop.f32.mrf.mxu0
        %v3059 = vadd.f32 %v2942, %v3058
        %v3060 = vpop.f32.mrf.mxu0
        %v3061 = vpop.f32.mrf.mxu0
        %v3062 = vadd.f32 %v2942, %v3061
        %v3063 = vpop.f32.mrf.mxu0
        %3064 = vmatprep.mubr.bf16.mxu0 0
        %3065 = vmatmul.mubr.bf16.gmra.mxu0 %v2784
        %v3066 = vpop.f32.mrf.mxu0
        %v3067 = vadd.f32 %v2942, %v3066
        %v3068 = vpop.f32.mrf.mxu0
        %v3069 = vpop.f32.mrf.mxu0
        %v3070 = vadd.f32 %v2942, %v3069
        %v3071 = vpop.f32.mrf.mxu0
        %3072 = vmatprep.mubr.bf16.mxu0 0
        %3073 = vmatmul.mubr.bf16.gmra.mxu0 %v2785
        %v3074 = vpop.f32.mrf.mxu0
        %v3075 = vadd.f32 %v2942, %v3074
        %v3076 = vpop.f32.mrf.mxu0
        %v3077 = vpop.f32.mrf.mxu0
        %v3078 = vadd.f32 %v2942, %v3077
        %v3079 = vpop.f32.mrf.mxu0
        %3080 = vmatprep.mubr.bf16.mxu0 0
        %3081 = vmatmul.mubr.bf16.gmra.mxu0 %v2786
        %v3082 = vpop.f32.mrf.mxu0
        %v3083 = vadd.f32 %v2942, %v3082
        %v3084 = vpop.f32.mrf.mxu0
        %v3085 = vpop.f32.mrf.mxu0
        %v3086 = vadd.f32 %v2942, %v3085
        %v3087 = vpop.f32.mrf.mxu0
        %3088 = vdwg.mxu0
        %v3089 = vxor.u32 %v3027, 2147483648
        %v3090 = vxor.u32 %v3030, 2147483648
        %v3091 = vxor.u32 %v3035, 2147483648
        %v3092 = vxor.u32 %v3038, 2147483648
        %v3093 = vxor.u32 %v3043, 2147483648
        %v3094 = vxor.u32 %v3046, 2147483648
        %v3095 = vxor.u32 %v3051, 2147483648
        %v3096 = vxor.u32 %v3054, 2147483648
        %v3097 = vxor.u32 %v3059, 2147483648
        %v3098 = vxor.u32 %v3062, 2147483648
        %v3099 = vxor.u32 %v3067, 2147483648
        %v3100 = vxor.u32 %v3070, 2147483648
        %v3101 = vxor.u32 %v3075, 2147483648
        %v3102 = vxor.u32 %v3078, 2147483648
        %v3103 = vxor.u32 %v3083, 2147483648
        %v3104 = vxor.u32 %v3086, 2147483648
        %v3105 = vmul.f32 %v3089, 1.442695
        %v3106 = vpow.pop %v3105
        %v3107 = vmul.f32 %v3090, 1.442695
        %v3108 = vpow.pop %v3107
        %v3109 = vmul.f32 %v3091, 1.442695
        %v3110 = vpow.pop %v3109
        %v3111 = vmul.f32 %v3092, 1.442695
        %v3112 = vpow.pop %v3111
        %v3113 = vmul.f32 %v3093, 1.442695
        %v3114 = vpow.pop %v3113
        %v3115 = vmul.f32 %v3094, 1.442695
        %v3116 = vpow.pop %v3115
        %v3117 = vmul.f32 %v3095, 1.442695
        %v3118 = vpow.pop %v3117
        %v3119 = vmul.f32 %v3096, 1.442695
        %v3120 = vpow.pop %v3119
        %v3121 = vmul.f32 %v3097, 1.442695
        %v3122 = vpow.pop %v3121
        %v3123 = vmul.f32 %v3098, 1.442695
        %v3124 = vpow.pop %v3123
        %v3125 = vmul.f32 %v3099, 1.442695
        %v3126 = vpow.pop %v3125
        %v3127 = vmul.f32 %v3100, 1.442695
        %v3128 = vpow.pop %v3127
        %v3129 = vmul.f32 %v3101, 1.442695
        %v3130 = vpow.pop %v3129
        %v3131 = vmul.f32 %v3102, 1.442695
        %v3132 = vpow.pop %v3131
        %v3133 = vmul.f32 %v3103, 1.442695
        %v3134 = vpow.pop %v3133
        %v3135 = vmul.f32 %v3104, 1.442695
        %v3136 = vpow.pop %v3135
        %v3137 = vadd.f32 %v3106, 1.0
        %v3138 = vadd.f32 %v3108, 1.0
        %v3139 = vadd.f32 %v3110, 1.0
        %v3140 = vadd.f32 %v3112, 1.0
        %v3141 = vadd.f32 %v3114, 1.0
        %v3142 = vadd.f32 %v3116, 1.0
        %v3143 = vadd.f32 %v3118, 1.0
        %v3144 = vadd.f32 %v3120, 1.0
        %v3145 = vadd.f32 %v3122, 1.0
        %v3146 = vadd.f32 %v3124, 1.0
        %v3147 = vadd.f32 %v3126, 1.0
        %v3148 = vadd.f32 %v3128, 1.0
        %v3149 = vadd.f32 %v3130, 1.0
        %v3150 = vadd.f32 %v3132, 1.0
        %v3151 = vadd.f32 %v3134, 1.0
        %v3152 = vadd.f32 %v3136, 1.0
        %v3153 = vrcp.pop %v3137
        %v3154 = vmul.f32 1.0, %v3153
        %v3155 = vrcp.pop %v3138
        %v3156 = vmul.f32 1.0, %v3155
        %v3157 = vrcp.pop %v3139
        %v3158 = vmul.f32 1.0, %v3157
        %v3159 = vrcp.pop %v3140
        %v3160 = vmul.f32 1.0, %v3159
        %v3161 = vrcp.pop %v3141
        %v3162 = vmul.f32 1.0, %v3161
        %v3163 = vrcp.pop %v3142
        %v3164 = vmul.f32 1.0, %v3163
        %v3165 = vrcp.pop %v3143
        %v3166 = vmul.f32 1.0, %v3165
        %v3167 = vrcp.pop %v3144
        %v3168 = vmul.f32 1.0, %v3167
        %v3169 = vrcp.pop %v3145
        %v3170 = vmul.f32 1.0, %v3169
        %v3171 = vrcp.pop %v3146
        %v3172 = vmul.f32 1.0, %v3171
        %v3173 = vrcp.pop %v3147
        %v3174 = vmul.f32 1.0, %v3173
        %v3175 = vrcp.pop %v3148
        %v3176 = vmul.f32 1.0, %v3175
        %v3177 = vrcp.pop %v3149
        %v3178 = vmul.f32 1.0, %v3177
        %v3179 = vrcp.pop %v3150
        %v3180 = vmul.f32 1.0, %v3179
        %v3181 = vrcp.pop %v3151
        %v3182 = vmul.f32 1.0, %v3181
        %v3183 = vrcp.pop %v3152
        %v3184 = vmul.f32 1.0, %v3183
        %v3185 = vmul.f32 %v2876, %v3154
        %v3186 = vmul.f32 %v2879, %v3156
        %v3187 = vmul.f32 %v2884, %v3158
        %v3188 = vmul.f32 %v2887, %v3160
        %v3189 = vmul.f32 %v2892, %v3162
        %v3190 = vmul.f32 %v2895, %v3164
        %v3191 = vmul.f32 %v2900, %v3166
        %v3192 = vmul.f32 %v2903, %v3168
        %v3193 = vmul.f32 %v2908, %v3170
        %v3194 = vmul.f32 %v2911, %v3172
        %v3195 = vmul.f32 %v2916, %v3174
        %v3196 = vmul.f32 %v2919, %v3176
        %v3197 = vmul.f32 %v2924, %v3178
        %v3198 = vmul.f32 %v2927, %v3180
        %v3199 = vmul.f32 %v2932, %v3182
        %v3200 = vmul.f32 %v2935, %v3184
        %v3201 = vld [vmem:[%s973] sm:$0xf]
        %v3202 = vld [vmem:[%s973 + $0x4] sm:$0xf]
        %v3203 = vld [vmem:[%s973 + $0x8] sm:$0xf]
        %v3204 = vld [vmem:[%s973 + $0xc] sm:$0xf]
        %v3205 = vld [vmem:[%s973 + $0x10] sm:$0xf]
        %v3206 = vld [vmem:[%s973 + $0x14] sm:$0xf]
        %v3207 = vld [vmem:[%s973 + $0x18] sm:$0xf]
        %v3208 = vld [vmem:[%s973 + $0x1c] sm:$0xf]
        %v3209 = vld [vmem:[%s973 + $0x20] sm:$0xf]
        %v3210 = vld [vmem:[%s973 + $0x24] sm:$0xf]
        %v3211 = vld [vmem:[%s973 + $0x28] sm:$0xf]
        %v3212 = vld [vmem:[%s973 + $0x2c] sm:$0xf]
        %v3213 = vld [vmem:[%s973 + $0x30] sm:$0xf]
        %v3214 = vld [vmem:[%s973 + $0x34] sm:$0xf]
        %v3215 = vld [vmem:[%s973 + $0x38] sm:$0xf]
        %v3216 = vld [vmem:[%s973 + $0x3c] sm:$0xf]
        %v3217 = vld [vmem:[%s982] sm:$0xf]
        %v3218 = vld [vmem:[%s982 + $0x4] sm:$0xf]
        %v3219 = vld [vmem:[%s982 + $0x8] sm:$0xf]
        %v3220 = vld [vmem:[%s982 + $0xc] sm:$0xf]
        %v3221 = vld [vmem:[%s982 + $0x10] sm:$0xf]
        %v3222 = vld [vmem:[%s982 + $0x14] sm:$0xf]
        %v3223 = vld [vmem:[%s982 + $0x18] sm:$0xf]
        %v3224 = vld [vmem:[%s982 + $0x1c] sm:$0xf]
        %v3225 = vld [vmem:[%s982 + $0x20] sm:$0xf]
        %v3226 = vld [vmem:[%s982 + $0x24] sm:$0xf]
        %v3227 = vld [vmem:[%s982 + $0x28] sm:$0xf]
        %v3228 = vld [vmem:[%s982 + $0x2c] sm:$0xf]
        %v3229 = vld [vmem:[%s982 + $0x30] sm:$0xf]
        %v3230 = vld [vmem:[%s982 + $0x34] sm:$0xf]
        %v3231 = vld [vmem:[%s982 + $0x38] sm:$0xf]
        %v3232 = vld [vmem:[%s982 + $0x3c] sm:$0xf]
        %v3233 = vld [vmem:[%s1102] sm:$0x1]
        %v3234 = vld [vmem:[%s1105] sm:$0x1]
        %v3235 = vpack.c.bf16 %v3186, %v3185
        %v3236 = vpack.c.bf16 %v3188, %v3187
        %v3237 = vpack.c.bf16 %v3190, %v3189
        %v3238 = vpack.c.bf16 %v3192, %v3191
        %v3239 = vpack.c.bf16 %v3194, %v3193
        %v3240 = vpack.c.bf16 %v3196, %v3195
        %v3241 = vpack.c.bf16 %v3198, %v3197
        %v3242 = vpack.c.bf16 %v3200, %v3199
        %v3244 = vlaneseq
        %v3245 = vshrl.u32 %v3244, 7
        %v3246 = vsub.s32 0, %v3245
        %v3247 = vrot.slane %v3233, %v3246
        %v3265 = vunpack.c.l.b16 %v3201
        %v3266 = vunpack.c.l.b16 %v3202
        %v3267 = vunpack.c.l.b16 %v3203
        %v3268 = vunpack.c.l.b16 %v3204
        %v3269 = vunpack.c.l.b16 %v3205
        %v3270 = vunpack.c.l.b16 %v3206
        %v3271 = vunpack.c.l.b16 %v3207
        %v3272 = vunpack.c.l.b16 %v3208
        %v3273 = vunpack.c.l.b16 %v3209
        %v3274 = vunpack.c.l.b16 %v3210
        %v3275 = vunpack.c.l.b16 %v3211
        %v3276 = vunpack.c.l.b16 %v3212
        %v3277 = vunpack.c.l.b16 %v3213
        %v3278 = vunpack.c.l.b16 %v3214
        %v3279 = vunpack.c.l.b16 %v3215
        %v3280 = vunpack.c.l.b16 %v3216
        %v3281 = vpack.c.b16 %v3266, %v3265
        %v3282 = vpack.c.b16 %v3268, %v3267
        %v3283 = vpack.c.b16 %v3270, %v3269
        %v3284 = vpack.c.b16 %v3272, %v3271
        %v3285 = vpack.c.b16 %v3274, %v3273
        %v3286 = vpack.c.b16 %v3276, %v3275
        %v3287 = vpack.c.b16 %v3278, %v3277
        %v3288 = vpack.c.b16 %v3280, %v3279
        %3297 = vmatprep.subr.bf16.mxu0 0
        %3298 = vmatpush1.bf16.msra.mxu0 %v3288
        %3299 = vmatprep.subr.bf16.mxu0 0
        %3300 = vmatpush1.bf16.msra.mxu0 %v3287
        %3301 = vmatprep.subr.bf16.mxu0 0
        %3302 = vmatpush1.bf16.msra.mxu0 %v3286
        %3303 = vmatprep.subr.bf16.mxu0 0
        %3304 = vmatpush1.bf16.msra.mxu0 %v3285
        %3305 = vmatprep.subr.bf16.mxu0 0
        %3306 = vmatpush1.bf16.msra.mxu0 %v3284
        %3307 = vmatprep.subr.bf16.mxu0 0
        %3308 = vmatpush1.bf16.msra.mxu0 %v3283
        %3309 = vmatprep.subr.bf16.mxu0 0
        %3310 = vmatpush1.bf16.msra.mxu0 %v3282
        %3311 = vmatprep.subr.bf16.mxu0 0
        %3312 = vmatpush1.bf16.msra.mxu0 %v3281
        %3313 = vmatprep.subr.bf16.mxu0 0
        %3314 = vmatpush2.bf16.msra.mxu0 0
        %3315 = vmatprep.subr.bf16.mxu0 0
        %3316 = vmatpush2.bf16.msra.mxu0 0
        %3317 = vmatprep.subr.bf16.mxu0 0
        %3318 = vmatpush2.bf16.msra.mxu0 0
        %3319 = vmatprep.subr.bf16.mxu0 0
        %3320 = vmatpush2.bf16.msra.mxu0 0
        %3321 = vmatprep.subr.bf16.mxu0 0
        %3322 = vmatpush2.bf16.msra.mxu0 0
        %3323 = vmatprep.subr.bf16.mxu0 0
        %3324 = vmatpush2.bf16.msra.mxu0 0
        %3325 = vmatprep.subr.bf16.mxu0 0
        %3326 = vmatpush2.bf16.msra.mxu0 0
        %3327 = vmatprep.subr.bf16.mxu0 0
        %3328 = vmatpush2.bf16.msra.mxu0 0
        %3329 = vmatprep.mubr.bf16.mxu0 0
        %3330 = vmatmul.mubr.bf16.gmra.mxu0 %v3235
        %v3331 = vpop.f32.mrf.mxu0
        %v3332 = vadd.f32 %v3247, %v3331
        %v3333 = vpop.f32.mrf.mxu0
        %v3334 = vpop.f32.mrf.mxu0
        %v3335 = vadd.f32 %v3247, %v3334
        %v3336 = vpop.f32.mrf.mxu0
        %3337 = vmatprep.mubr.bf16.mxu0 0
        %3338 = vmatmul.mubr.bf16.gmra.mxu0 %v3236
        %v3339 = vpop.f32.mrf.mxu0
        %v3340 = vadd.f32 %v3247, %v3339
        %v3341 = vpop.f32.mrf.mxu0
        %v3342 = vpop.f32.mrf.mxu0
        %v3343 = vadd.f32 %v3247, %v3342
        %v3344 = vpop.f32.mrf.mxu0
        %3345 = vmatprep.mubr.bf16.mxu0 0
        %3346 = vmatmul.mubr.bf16.gmra.mxu0 %v3237
        %v3347 = vpop.f32.mrf.mxu0
        %v3348 = vadd.f32 %v3247, %v3347
        %v3349 = vpop.f32.mrf.mxu0
        %v3350 = vpop.f32.mrf.mxu0
        %v3351 = vadd.f32 %v3247, %v3350
        %v3352 = vpop.f32.mrf.mxu0
        %3353 = vmatprep.mubr.bf16.mxu0 0
        %3354 = vmatmul.mubr.bf16.gmra.mxu0 %v3238
        %v3355 = vpop.f32.mrf.mxu0
        %v3356 = vadd.f32 %v3247, %v3355
        %v3357 = vpop.f32.mrf.mxu0
        %v3358 = vpop.f32.mrf.mxu0
        %v3359 = vadd.f32 %v3247, %v3358
        %v3360 = vpop.f32.mrf.mxu0
        %3361 = vmatprep.mubr.bf16.mxu0 0
        %3362 = vmatmul.mubr.bf16.gmra.mxu0 %v3239
        %v3363 = vpop.f32.mrf.mxu0
        %v3364 = vadd.f32 %v3247, %v3363
        %v3365 = vpop.f32.mrf.mxu0
        %v3366 = vpop.f32.mrf.mxu0
        %v3367 = vadd.f32 %v3247, %v3366
        %v3368 = vpop.f32.mrf.mxu0
        %3369 = vmatprep.mubr.bf16.mxu0 0
        %3370 = vmatmul.mubr.bf16.gmra.mxu0 %v3240
        %v3371 = vpop.f32.mrf.mxu0
        %v3372 = vadd.f32 %v3247, %v3371
        %v3373 = vpop.f32.mrf.mxu0
        %v3374 = vpop.f32.mrf.mxu0
        %v3375 = vadd.f32 %v3247, %v3374
        %v3376 = vpop.f32.mrf.mxu0
        %3377 = vmatprep.mubr.bf16.mxu0 0
        %3378 = vmatmul.mubr.bf16.gmra.mxu0 %v3241
        %v3379 = vpop.f32.mrf.mxu0
        %v3380 = vadd.f32 %v3247, %v3379
        %v3381 = vpop.f32.mrf.mxu0
        %v3382 = vpop.f32.mrf.mxu0
        %v3383 = vadd.f32 %v3247, %v3382
        %v3384 = vpop.f32.mrf.mxu0
        %3385 = vmatprep.mubr.bf16.mxu0 0
        %3386 = vmatmul.mubr.bf16.gmra.mxu0 %v3242
        %v3387 = vpop.f32.mrf.mxu0
        %v3388 = vadd.f32 %v3247, %v3387
        %v3389 = vpop.f32.mrf.mxu0
        %v3390 = vpop.f32.mrf.mxu0
        %v3391 = vadd.f32 %v3247, %v3390
        %v3392 = vpop.f32.mrf.mxu0
        %3393 = vdwg.mxu0
        %v3395 = vlaneseq
        %v3396 = vshrl.u32 %v3395, 7
        %v3397 = vsub.s32 0, %v3396
        %v3398 = vrot.slane %v3234, %v3397
        %v3416 = vunpack.c.l.b16 %v3217
        %v3417 = vunpack.c.l.b16 %v3218
        %v3418 = vunpack.c.l.b16 %v3219
        %v3419 = vunpack.c.l.b16 %v3220
        %v3420 = vunpack.c.l.b16 %v3221
        %v3421 = vunpack.c.l.b16 %v3222
        %v3422 = vunpack.c.l.b16 %v3223
        %v3423 = vunpack.c.l.b16 %v3224
        %v3424 = vunpack.c.l.b16 %v3225
        %v3425 = vunpack.c.l.b16 %v3226
        %v3426 = vunpack.c.l.b16 %v3227
        %v3427 = vunpack.c.l.b16 %v3228
        %v3428 = vunpack.c.l.b16 %v3229
        %v3429 = vunpack.c.l.b16 %v3230
        %v3430 = vunpack.c.l.b16 %v3231
        %v3431 = vunpack.c.l.b16 %v3232
        %v3432 = vpack.c.b16 %v3417, %v3416
        %v3433 = vpack.c.b16 %v3419, %v3418
        %v3434 = vpack.c.b16 %v3421, %v3420
        %v3435 = vpack.c.b16 %v3423, %v3422
        %v3436 = vpack.c.b16 %v3425, %v3424
        %v3437 = vpack.c.b16 %v3427, %v3426
        %v3438 = vpack.c.b16 %v3429, %v3428
        %v3439 = vpack.c.b16 %v3431, %v3430
        %3448 = vmatprep.subr.bf16.mxu0 0
        %3449 = vmatpush1.bf16.msra.mxu0 %v3439
        %3450 = vmatprep.subr.bf16.mxu0 0
        %3451 = vmatpush1.bf16.msra.mxu0 %v3438
        %3452 = vmatprep.subr.bf16.mxu0 0
        %3453 = vmatpush1.bf16.msra.mxu0 %v3437
        %3454 = vmatprep.subr.bf16.mxu0 0
        %3455 = vmatpush1.bf16.msra.mxu0 %v3436
        %3456 = vmatprep.subr.bf16.mxu0 0
        %3457 = vmatpush1.bf16.msra.mxu0 %v3435
        %3458 = vmatprep.subr.bf16.mxu0 0
        %3459 = vmatpush1.bf16.msra.mxu0 %v3434
        %3460 = vmatprep.subr.bf16.mxu0 0
        %3461 = vmatpush1.bf16.msra.mxu0 %v3433
        %3462 = vmatprep.subr.bf16.mxu0 0
        %3463 = vmatpush1.bf16.msra.mxu0 %v3432
        %3464 = vmatprep.subr.bf16.mxu0 0
        %3465 = vmatpush2.bf16.msra.mxu0 0
        %3466 = vmatprep.subr.bf16.mxu0 0
        %3467 = vmatpush2.bf16.msra.mxu0 0
        %3468 = vmatprep.subr.bf16.mxu0 0
        %3469 = vmatpush2.bf16.msra.mxu0 0
        %3470 = vmatprep.subr.bf16.mxu0 0
        %3471 = vmatpush2.bf16.msra.mxu0 0
        %3472 = vmatprep.subr.bf16.mxu0 0
        %3473 = vmatpush2.bf16.msra.mxu0 0
        %3474 = vmatprep.subr.bf16.mxu0 0
        %3475 = vmatpush2.bf16.msra.mxu0 0
        %3476 = vmatprep.subr.bf16.mxu0 0
        %3477 = vmatpush2.bf16.msra.mxu0 0
        %3478 = vmatprep.subr.bf16.mxu0 0
        %3479 = vmatpush2.bf16.msra.mxu0 0
        %3480 = vmatprep.mubr.bf16.mxu0 0
        %3481 = vmatmul.mubr.bf16.gmra.mxu0 %v3235
        %v3482 = vpop.f32.mrf.mxu0
        %v3483 = vadd.f32 %v3398, %v3482
        %v3484 = vpop.f32.mrf.mxu0
        %v3485 = vpop.f32.mrf.mxu0
        %v3486 = vadd.f32 %v3398, %v3485
        %v3487 = vpop.f32.mrf.mxu0
        %3488 = vmatprep.mubr.bf16.mxu0 0
        %3489 = vmatmul.mubr.bf16.gmra.mxu0 %v3236
        %v3490 = vpop.f32.mrf.mxu0
        %v3491 = vadd.f32 %v3398, %v3490
        %v3492 = vpop.f32.mrf.mxu0
        %v3493 = vpop.f32.mrf.mxu0
        %v3494 = vadd.f32 %v3398, %v3493
        %v3495 = vpop.f32.mrf.mxu0
        %3496 = vmatprep.mubr.bf16.mxu0 0
        %3497 = vmatmul.mubr.bf16.gmra.mxu0 %v3237
        %v3498 = vpop.f32.mrf.mxu0
        %v3499 = vadd.f32 %v3398, %v3498
        %v3500 = vpop.f32.mrf.mxu0
        %v3501 = vpop.f32.mrf.mxu0
        %v3502 = vadd.f32 %v3398, %v3501
        %v3503 = vpop.f32.mrf.mxu0
        %3504 = vmatprep.mubr.bf16.mxu0 0
        %3505 = vmatmul.mubr.bf16.gmra.mxu0 %v3238
        %v3506 = vpop.f32.mrf.mxu0
        %v3507 = vadd.f32 %v3398, %v3506
        %v3508 = vpop.f32.mrf.mxu0
        %v3509 = vpop.f32.mrf.mxu0
        %v3510 = vadd.f32 %v3398, %v3509
        %v3511 = vpop.f32.mrf.mxu0
        %3512 = vmatprep.mubr.bf16.mxu0 0
        %3513 = vmatmul.mubr.bf16.gmra.mxu0 %v3239
        %v3514 = vpop.f32.mrf.mxu0
        %v3515 = vadd.f32 %v3398, %v3514
        %v3516 = vpop.f32.mrf.mxu0
        %v3517 = vpop.f32.mrf.mxu0
        %v3518 = vadd.f32 %v3398, %v3517
        %v3519 = vpop.f32.mrf.mxu0
        %3520 = vmatprep.mubr.bf16.mxu0 0
        %3521 = vmatmul.mubr.bf16.gmra.mxu0 %v3240
        %v3522 = vpop.f32.mrf.mxu0
        %v3523 = vadd.f32 %v3398, %v3522
        %v3524 = vpop.f32.mrf.mxu0
        %v3525 = vpop.f32.mrf.mxu0
        %v3526 = vadd.f32 %v3398, %v3525
        %v3527 = vpop.f32.mrf.mxu0
        %3528 = vmatprep.mubr.bf16.mxu0 0
        %3529 = vmatmul.mubr.bf16.gmra.mxu0 %v3241
        %v3530 = vpop.f32.mrf.mxu0
        %v3531 = vadd.f32 %v3398, %v3530
        %v3532 = vpop.f32.mrf.mxu0
        %v3533 = vpop.f32.mrf.mxu0
        %v3534 = vadd.f32 %v3398, %v3533
        %v3535 = vpop.f32.mrf.mxu0
        %3536 = vmatprep.mubr.bf16.mxu0 0
        %3537 = vmatmul.mubr.bf16.gmra.mxu0 %v3242
        %v3538 = vpop.f32.mrf.mxu0
        %v3539 = vadd.f32 %v3398, %v3538
        %v3540 = vpop.f32.mrf.mxu0
        %v3541 = vpop.f32.mrf.mxu0
        %v3542 = vadd.f32 %v3398, %v3541
        %v3543 = vpop.f32.mrf.mxu0
        %3544 = vdwg.mxu0
        %v3545 = vxor.u32 %v3483, 2147483648
        %v3546 = vxor.u32 %v3486, 2147483648
        %v3547 = vxor.u32 %v3491, 2147483648
        %v3548 = vxor.u32 %v3494, 2147483648
        %v3549 = vxor.u32 %v3499, 2147483648
        %v3550 = vxor.u32 %v3502, 2147483648
        %v3551 = vxor.u32 %v3507, 2147483648
        %v3552 = vxor.u32 %v3510, 2147483648
        %v3553 = vxor.u32 %v3515, 2147483648
        %v3554 = vxor.u32 %v3518, 2147483648
        %v3555 = vxor.u32 %v3523, 2147483648
        %v3556 = vxor.u32 %v3526, 2147483648
        %v3557 = vxor.u32 %v3531, 2147483648
        %v3558 = vxor.u32 %v3534, 2147483648
        %v3559 = vxor.u32 %v3539, 2147483648
        %v3560 = vxor.u32 %v3542, 2147483648
        %v3561 = vmul.f32 %v3545, 1.442695
        %v3562 = vpow.pop %v3561
        %v3563 = vmul.f32 %v3546, 1.442695
        %v3564 = vpow.pop %v3563
        %v3565 = vmul.f32 %v3547, 1.442695
        %v3566 = vpow.pop %v3565
        %v3567 = vmul.f32 %v3548, 1.442695
        %v3568 = vpow.pop %v3567
        %v3569 = vmul.f32 %v3549, 1.442695
        %v3570 = vpow.pop %v3569
        %v3571 = vmul.f32 %v3550, 1.442695
        %v3572 = vpow.pop %v3571
        %v3573 = vmul.f32 %v3551, 1.442695
        %v3574 = vpow.pop %v3573
        %v3575 = vmul.f32 %v3552, 1.442695
        %v3576 = vpow.pop %v3575
        %v3577 = vmul.f32 %v3553, 1.442695
        %v3578 = vpow.pop %v3577
        %v3579 = vmul.f32 %v3554, 1.442695
        %v3580 = vpow.pop %v3579
        %v3581 = vmul.f32 %v3555, 1.442695
        %v3582 = vpow.pop %v3581
        %v3583 = vmul.f32 %v3556, 1.442695
        %v3584 = vpow.pop %v3583
        %v3585 = vmul.f32 %v3557, 1.442695
        %v3586 = vpow.pop %v3585
        %v3587 = vmul.f32 %v3558, 1.442695
        %v3588 = vpow.pop %v3587
        %v3589 = vmul.f32 %v3559, 1.442695
        %v3590 = vpow.pop %v3589
        %v3591 = vmul.f32 %v3560, 1.442695
        %v3592 = vpow.pop %v3591
        %v3593 = vadd.f32 %v3562, 1.0
        %v3594 = vadd.f32 %v3564, 1.0
        %v3595 = vadd.f32 %v3566, 1.0
        %v3596 = vadd.f32 %v3568, 1.0
        %v3597 = vadd.f32 %v3570, 1.0
        %v3598 = vadd.f32 %v3572, 1.0
        %v3599 = vadd.f32 %v3574, 1.0
        %v3600 = vadd.f32 %v3576, 1.0
        %v3601 = vadd.f32 %v3578, 1.0
        %v3602 = vadd.f32 %v3580, 1.0
        %v3603 = vadd.f32 %v3582, 1.0
        %v3604 = vadd.f32 %v3584, 1.0
        %v3605 = vadd.f32 %v3586, 1.0
        %v3606 = vadd.f32 %v3588, 1.0
        %v3607 = vadd.f32 %v3590, 1.0
        %v3608 = vadd.f32 %v3592, 1.0
        %v3609 = vrcp.pop %v3593
        %v3610 = vmul.f32 1.0, %v3609
        %v3611 = vrcp.pop %v3594
        %v3612 = vmul.f32 1.0, %v3611
        %v3613 = vrcp.pop %v3595
        %v3614 = vmul.f32 1.0, %v3613
        %v3615 = vrcp.pop %v3596
        %v3616 = vmul.f32 1.0, %v3615
        %v3617 = vrcp.pop %v3597
        %v3618 = vmul.f32 1.0, %v3617
        %v3619 = vrcp.pop %v3598
        %v3620 = vmul.f32 1.0, %v3619
        %v3621 = vrcp.pop %v3599
        %v3622 = vmul.f32 1.0, %v3621
        %v3623 = vrcp.pop %v3600
        %v3624 = vmul.f32 1.0, %v3623
        %v3625 = vrcp.pop %v3601
        %v3626 = vmul.f32 1.0, %v3625
        %v3627 = vrcp.pop %v3602
        %v3628 = vmul.f32 1.0, %v3627
        %v3629 = vrcp.pop %v3603
        %v3630 = vmul.f32 1.0, %v3629
        %v3631 = vrcp.pop %v3604
        %v3632 = vmul.f32 1.0, %v3631
        %v3633 = vrcp.pop %v3605
        %v3634 = vmul.f32 1.0, %v3633
        %v3635 = vrcp.pop %v3606
        %v3636 = vmul.f32 1.0, %v3635
        %v3637 = vrcp.pop %v3607
        %v3638 = vmul.f32 1.0, %v3637
        %v3639 = vrcp.pop %v3608
        %v3640 = vmul.f32 1.0, %v3639
        %v3641 = vmul.f32 %v3332, %v3610
        %v3642 = vmul.f32 %v3335, %v3612
        %v3643 = vmul.f32 %v3340, %v3614
        %v3644 = vmul.f32 %v3343, %v3616
        %v3645 = vmul.f32 %v3348, %v3618
        %v3646 = vmul.f32 %v3351, %v3620
        %v3647 = vmul.f32 %v3356, %v3622
        %v3648 = vmul.f32 %v3359, %v3624
        %v3649 = vmul.f32 %v3364, %v3626
        %v3650 = vmul.f32 %v3367, %v3628
        %v3651 = vmul.f32 %v3372, %v3630
        %v3652 = vmul.f32 %v3375, %v3632
        %v3653 = vmul.f32 %v3380, %v3634
        %v3654 = vmul.f32 %v3383, %v3636
        %v3655 = vmul.f32 %v3388, %v3638
        %v3656 = vmul.f32 %v3391, %v3640
        %v3657 = vld [vmem:[#allocation4] sm:$0xff]
        %v3658 = vld [vmem:[#allocation4 + $0x8] sm:$0xff]
        %v3659 = vld [vmem:[#allocation4 + $0x10] sm:$0xff]
        %v3660 = vld [vmem:[#allocation4 + $0x18] sm:$0xff]
        %v3661 = vld [vmem:[#allocation4 + $0x20] sm:$0xff]
        %v3662 = vld [vmem:[#allocation4 + $0x28] sm:$0xff]
        %v3663 = vld [vmem:[#allocation4 + $0x30] sm:$0xff]
        %v3664 = vld [vmem:[#allocation4 + $0x38] sm:$0xff]
        %v3665 = vld [vmem:[#allocation4 + $0x40] sm:$0xff]
        %v3666 = vld [vmem:[#allocation4 + $0x48] sm:$0xff]
        %v3667 = vld [vmem:[#allocation4 + $0x50] sm:$0xff]
        %v3668 = vld [vmem:[#allocation4 + $0x58] sm:$0xff]
        %v3669 = vld [vmem:[#allocation4 + $0x60] sm:$0xff]
        %v3670 = vld [vmem:[#allocation4 + $0x68] sm:$0xff]
        %v3671 = vld [vmem:[#allocation4 + $0x70] sm:$0xff]
        %v3672 = vld [vmem:[#allocation4 + $0x78] sm:$0xff]
        %v3673 = vadd.f32 %v3657, %v3641
        %v3674 = vadd.f32 %v3658, %v3642
        %v3675 = vadd.f32 %v3659, %v3643
        %v3676 = vadd.f32 %v3660, %v3644
        %v3677 = vadd.f32 %v3661, %v3645
        %v3678 = vadd.f32 %v3662, %v3646
        %v3679 = vadd.f32 %v3663, %v3647
        %v3680 = vadd.f32 %v3664, %v3648
        %v3681 = vadd.f32 %v3665, %v3649
        %v3682 = vadd.f32 %v3666, %v3650
        %v3683 = vadd.f32 %v3667, %v3651
        %v3684 = vadd.f32 %v3668, %v3652
        %v3685 = vadd.f32 %v3669, %v3653
        %v3686 = vadd.f32 %v3670, %v3654
        %v3687 = vadd.f32 %v3671, %v3655
        %v3688 = vadd.f32 %v3672, %v3656
        %3689 = vst [vmem:[#allocation4] sm:$0xff] %v3673
        %3690 = vst [vmem:[#allocation4 + $0x8] sm:$0xff] %v3674
        %3691 = vst [vmem:[#allocation4 + $0x10] sm:$0xff] %v3675
        %3692 = vst [vmem:[#allocation4 + $0x18] sm:$0xff] %v3676
        %3693 = vst [vmem:[#allocation4 + $0x20] sm:$0xff] %v3677
        %3694 = vst [vmem:[#allocation4 + $0x28] sm:$0xff] %v3678
        %3695 = vst [vmem:[#allocation4 + $0x30] sm:$0xff] %v3679
        %3696 = vst [vmem:[#allocation4 + $0x38] sm:$0xff] %v3680
        %3697 = vst [vmem:[#allocation4 + $0x40] sm:$0xff] %v3681
        %3698 = vst [vmem:[#allocation4 + $0x48] sm:$0xff] %v3682
        %3699 = vst [vmem:[#allocation4 + $0x50] sm:$0xff] %v3683
        %3700 = vst [vmem:[#allocation4 + $0x58] sm:$0xff] %v3684
        %3701 = vst [vmem:[#allocation4 + $0x60] sm:$0xff] %v3685
        %3702 = vst [vmem:[#allocation4 + $0x68] sm:$0xff] %v3686
        %3703 = vst [vmem:[#allocation4 + $0x70] sm:$0xff] %v3687
        %3704 = vst [vmem:[#allocation4 + $0x78] sm:$0xff] %v3688
        %v3705 = vld [vmem:[#allocation3] sm:$0xff]
        %v3706 = vld [vmem:[#allocation3 + $0x8] sm:$0xff]
        %v3707 = vld [vmem:[#allocation3 + $0x10] sm:$0xff]
        %v3708 = vld [vmem:[#allocation3 + $0x18] sm:$0xff]
        %v3709 = vld [vmem:[#allocation3 + $0x20] sm:$0xff]
        %v3710 = vld [vmem:[#allocation3 + $0x28] sm:$0xff]
        %v3711 = vld [vmem:[#allocation3 + $0x30] sm:$0xff]
        %v3712 = vld [vmem:[#allocation3 + $0x38] sm:$0xff]
        %v3713 = vld [vmem:[#allocation3 + $0x40] sm:$0xff]
        %v3714 = vld [vmem:[#allocation3 + $0x48] sm:$0xff]
        %v3715 = vld [vmem:[#allocation3 + $0x50] sm:$0xff]
        %v3716 = vld [vmem:[#allocation3 + $0x58] sm:$0xff]
        %v3717 = vld [vmem:[#allocation3 + $0x60] sm:$0xff]
        %v3718 = vld [vmem:[#allocation3 + $0x68] sm:$0xff]
        %v3719 = vld [vmem:[#allocation3 + $0x70] sm:$0xff]
        %v3720 = vld [vmem:[#allocation3 + $0x78] sm:$0xff]
        %v3721 = vsub.f32 1.0, %v2697
        %v3722 = vsub.f32 1.0, %v2698
        %v3723 = vsub.f32 1.0, %v2699
        %v3724 = vsub.f32 1.0, %v2700
        %v3725 = vsub.f32 1.0, %v2701
        %v3726 = vsub.f32 1.0, %v2702
        %v3727 = vsub.f32 1.0, %v2703
        %v3728 = vsub.f32 1.0, %v2704
        %v3729 = vsub.f32 1.0, %v2705
        %v3730 = vsub.f32 1.0, %v2706
        %v3731 = vsub.f32 1.0, %v2707
        %v3732 = vsub.f32 1.0, %v2708
        %v3733 = vsub.f32 1.0, %v2709
        %v3734 = vsub.f32 1.0, %v2710
        %v3735 = vsub.f32 1.0, %v2711
        %v3736 = vsub.f32 1.0, %v2712
        %v3737 = vmul.f32 %v3705, %v3721
        %v3738 = vmul.f32 %v3706, %v3722
        %v3739 = vmul.f32 %v3707, %v3723
        %v3740 = vmul.f32 %v3708, %v3724
        %v3741 = vmul.f32 %v3709, %v3725
        %v3742 = vmul.f32 %v3710, %v3726
        %v3743 = vmul.f32 %v3711, %v3727
        %v3744 = vmul.f32 %v3712, %v3728
        %v3745 = vmul.f32 %v3713, %v3729
        %v3746 = vmul.f32 %v3714, %v3730
        %v3747 = vmul.f32 %v3715, %v3731
        %v3748 = vmul.f32 %v3716, %v3732
        %v3749 = vmul.f32 %v3717, %v3733
        %v3750 = vmul.f32 %v3718, %v3734
        %v3751 = vmul.f32 %v3719, %v3735
        %v3752 = vmul.f32 %v3720, %v3736
        %3753 = vst [vmem:[#allocation3] sm:$0xff] %v3737
        %3754 = vst [vmem:[#allocation3 + $0x8] sm:$0xff] %v3738
        %3755 = vst [vmem:[#allocation3 + $0x10] sm:$0xff] %v3739
        %3756 = vst [vmem:[#allocation3 + $0x18] sm:$0xff] %v3740
        %3757 = vst [vmem:[#allocation3 + $0x20] sm:$0xff] %v3741
        %3758 = vst [vmem:[#allocation3 + $0x28] sm:$0xff] %v3742
        %3759 = vst [vmem:[#allocation3 + $0x30] sm:$0xff] %v3743
        %3760 = vst [vmem:[#allocation3 + $0x38] sm:$0xff] %v3744
        %3761 = vst [vmem:[#allocation3 + $0x40] sm:$0xff] %v3745
        %3762 = vst [vmem:[#allocation3 + $0x48] sm:$0xff] %v3746
        %3763 = vst [vmem:[#allocation3 + $0x50] sm:$0xff] %v3747
        %3764 = vst [vmem:[#allocation3 + $0x58] sm:$0xff] %v3748
        %3765 = vst [vmem:[#allocation3 + $0x60] sm:$0xff] %v3749
        %3766 = vst [vmem:[#allocation3 + $0x68] sm:$0xff] %v3750
        %3767 = vst [vmem:[#allocation3 + $0x70] sm:$0xff] %v3751
        %3768 = vst [vmem:[#allocation3 + $0x78] sm:$0xff] %v3752
        %p3769 = scmp.eq.s32.totalorder %s49, 2
        // Predicated region
        $region177: #{tpu_custom_call.1} parent=111 // pred_check
          %p3770 = pneg %p3769
        $region178: #{tpu_custom_call.1} parent=111 // pred_check_branch
          %3772 = sbr.rel (%p3770) target = $region180
        $region179: #{tpu_custom_call.1} parent=111 // pred_region
          %v3773 = vld [vmem:[#allocation4] sm:$0xff]
          %v3774 = vld [vmem:[#allocation4 + $0x8] sm:$0xff]
          %v3775 = vld [vmem:[#allocation4 + $0x10] sm:$0xff]
          %v3776 = vld [vmem:[#allocation4 + $0x18] sm:$0xff]
          %v3777 = vld [vmem:[#allocation4 + $0x20] sm:$0xff]
          %v3778 = vld [vmem:[#allocation4 + $0x28] sm:$0xff]
          %v3779 = vld [vmem:[#allocation4 + $0x30] sm:$0xff]
          %v3780 = vld [vmem:[#allocation4 + $0x38] sm:$0xff]
          %v3781 = vld [vmem:[#allocation4 + $0x40] sm:$0xff]
          %v3782 = vld [vmem:[#allocation4 + $0x48] sm:$0xff]
          %v3783 = vld [vmem:[#allocation4 + $0x50] sm:$0xff]
          %v3784 = vld [vmem:[#allocation4 + $0x58] sm:$0xff]
          %v3785 = vld [vmem:[#allocation4 + $0x60] sm:$0xff]
          %v3786 = vld [vmem:[#allocation4 + $0x68] sm:$0xff]
          %v3787 = vld [vmem:[#allocation4 + $0x70] sm:$0xff]
          %v3788 = vld [vmem:[#allocation4 + $0x78] sm:$0xff]
          %v3789 = vpack.c.bf16 %v3774, %v3773
          %v3790 = vpack.c.bf16 %v3776, %v3775
          %v3791 = vpack.c.bf16 %v3778, %v3777
          %v3792 = vpack.c.bf16 %v3780, %v3779
          %v3793 = vpack.c.bf16 %v3782, %v3781
          %v3794 = vpack.c.bf16 %v3784, %v3783
          %v3795 = vpack.c.bf16 %v3786, %v3785
          %v3796 = vpack.c.bf16 %v3788, %v3787
          %v3797 = vld [vmem:[#allocation28] sm:$0xf]
          %v3798 = vld [vmem:[#allocation28 + $0x4] sm:$0xf]
          %v3799 = vld [vmem:[#allocation28 + $0x8] sm:$0xf]
          %v3800 = vld [vmem:[#allocation28 + $0xc] sm:$0xf]
          %v3801 = vld [vmem:[#allocation28 + $0x10] sm:$0xf]
          %v3802 = vld [vmem:[#allocation28 + $0x14] sm:$0xf]
          %v3803 = vld [vmem:[#allocation28 + $0x18] sm:$0xf]
          %v3804 = vld [vmem:[#allocation28 + $0x1c] sm:$0xf]
          %v3805 = vld [vmem:[#allocation28 + $0x20] sm:$0xf]
          %v3806 = vld [vmem:[#allocation28 + $0x24] sm:$0xf]
          %v3807 = vld [vmem:[#allocation28 + $0x28] sm:$0xf]
          %v3808 = vld [vmem:[#allocation28 + $0x2c] sm:$0xf]
          %v3809 = vld [vmem:[#allocation28 + $0x30] sm:$0xf]
          %v3810 = vld [vmem:[#allocation28 + $0x34] sm:$0xf]
          %v3811 = vld [vmem:[#allocation28 + $0x38] sm:$0xf]
          %v3812 = vld [vmem:[#allocation28 + $0x3c] sm:$0xf]
          %v3813 = vld [vmem:[%s22] sm:$0x1]
          %v3815 = vlaneseq
          %v3816 = vshrl.u32 %v3815, 7
          %v3817 = vsub.s32 0, %v3816
          %v3818 = vrot.slane %v3813, %v3817
          %v3836 = vunpack.c.l.b16 %v3797
          %v3837 = vunpack.c.l.b16 %v3798
          %v3838 = vunpack.c.l.b16 %v3799
          %v3839 = vunpack.c.l.b16 %v3800
          %v3840 = vunpack.c.l.b16 %v3801
          %v3841 = vunpack.c.l.b16 %v3802
          %v3842 = vunpack.c.l.b16 %v3803
          %v3843 = vunpack.c.l.b16 %v3804
          %v3844 = vunpack.c.l.b16 %v3805
          %v3845 = vunpack.c.l.b16 %v3806
          %v3846 = vunpack.c.l.b16 %v3807
          %v3847 = vunpack.c.l.b16 %v3808
          %v3848 = vunpack.c.l.b16 %v3809
          %v3849 = vunpack.c.l.b16 %v3810
          %v3850 = vunpack.c.l.b16 %v3811
          %v3851 = vunpack.c.l.b16 %v3812
          %v3852 = vpack.c.b16 %v3837, %v3836
          %v3853 = vpack.c.b16 %v3839, %v3838
          %v3854 = vpack.c.b16 %v3841, %v3840
          %v3855 = vpack.c.b16 %v3843, %v3842
          %v3856 = vpack.c.b16 %v3845, %v3844
          %v3857 = vpack.c.b16 %v3847, %v3846
          %v3858 = vpack.c.b16 %v3849, %v3848
          %v3859 = vpack.c.b16 %v3851, %v3850
          %3868 = vmatprep.subr.bf16.mxu0 0
          %3869 = vmatpush1.bf16.msra.mxu0 %v3859
          %3870 = vmatprep.subr.bf16.mxu0 0
          %3871 = vmatpush1.bf16.msra.mxu0 %v3858
          %3872 = vmatprep.subr.bf16.mxu0 0
          %3873 = vmatpush1.bf16.msra.mxu0 %v3857
          %3874 = vmatprep.subr.bf16.mxu0 0
          %3875 = vmatpush1.bf16.msra.mxu0 %v3856
          %3876 = vmatprep.subr.bf16.mxu0 0
          %3877 = vmatpush1.bf16.msra.mxu0 %v3855
          %3878 = vmatprep.subr.bf16.mxu0 0
          %3879 = vmatpush1.bf16.msra.mxu0 %v3854
          %3880 = vmatprep.subr.bf16.mxu0 0
          %3881 = vmatpush1.bf16.msra.mxu0 %v3853
          %3882 = vmatprep.subr.bf16.mxu0 0
          %3883 = vmatpush1.bf16.msra.mxu0 %v3852
          %3884 = vmatprep.subr.bf16.mxu0 0
          %3885 = vmatpush2.bf16.msra.mxu0 0
          %3886 = vmatprep.subr.bf16.mxu0 0
          %3887 = vmatpush2.bf16.msra.mxu0 0
          %3888 = vmatprep.subr.bf16.mxu0 0
          %3889 = vmatpush2.bf16.msra.mxu0 0
          %3890 = vmatprep.subr.bf16.mxu0 0
          %3891 = vmatpush2.bf16.msra.mxu0 0
          %3892 = vmatprep.subr.bf16.mxu0 0
          %3893 = vmatpush2.bf16.msra.mxu0 0
          %3894 = vmatprep.subr.bf16.mxu0 0
          %3895 = vmatpush2.bf16.msra.mxu0 0
          %3896 = vmatprep.subr.bf16.mxu0 0
          %3897 = vmatpush2.bf16.msra.mxu0 0
          %3898 = vmatprep.subr.bf16.mxu0 0
          %3899 = vmatpush2.bf16.msra.mxu0 0
          %3900 = vmatprep.mubr.bf16.mxu0 0
          %3901 = vmatmul.mubr.bf16.gmra.mxu0 %v3789
          %v3902 = vpop.f32.mrf.mxu0
          %v3903 = vadd.f32 %v3818, %v3902
          %v3904 = vpop.f32.mrf.mxu0
          %v3905 = vpop.f32.mrf.mxu0
          %v3906 = vadd.f32 %v3818, %v3905
          %v3907 = vpop.f32.mrf.mxu0
          %3908 = vmatprep.mubr.bf16.mxu0 0
          %3909 = vmatmul.mubr.bf16.gmra.mxu0 %v3790
          %v3910 = vpop.f32.mrf.mxu0
          %v3911 = vadd.f32 %v3818, %v3910
          %v3912 = vpop.f32.mrf.mxu0
          %v3913 = vpop.f32.mrf.mxu0
          %v3914 = vadd.f32 %v3818, %v3913
          %v3915 = vpop.f32.mrf.mxu0
          %3916 = vmatprep.mubr.bf16.mxu0 0
          %3917 = vmatmul.mubr.bf16.gmra.mxu0 %v3791
          %v3918 = vpop.f32.mrf.mxu0
          %v3919 = vadd.f32 %v3818, %v3918
          %v3920 = vpop.f32.mrf.mxu0
          %v3921 = vpop.f32.mrf.mxu0
          %v3922 = vadd.f32 %v3818, %v3921
          %v3923 = vpop.f32.mrf.mxu0
          %3924 = vmatprep.mubr.bf16.mxu0 0
          %3925 = vmatmul.mubr.bf16.gmra.mxu0 %v3792
          %v3926 = vpop.f32.mrf.mxu0
          %v3927 = vadd.f32 %v3818, %v3926
          %v3928 = vpop.f32.mrf.mxu0
          %v3929 = vpop.f32.mrf.mxu0
          %v3930 = vadd.f32 %v3818, %v3929
          %v3931 = vpop.f32.mrf.mxu0
          %3932 = vmatprep.mubr.bf16.mxu0 0
          %3933 = vmatmul.mubr.bf16.gmra.mxu0 %v3793
          %v3934 = vpop.f32.mrf.mxu0
          %v3935 = vadd.f32 %v3818, %v3934
          %v3936 = vpop.f32.mrf.mxu0
          %v3937 = vpop.f32.mrf.mxu0
          %v3938 = vadd.f32 %v3818, %v3937
          %v3939 = vpop.f32.mrf.mxu0
          %3940 = vmatprep.mubr.bf16.mxu0 0
          %3941 = vmatmul.mubr.bf16.gmra.mxu0 %v3794
          %v3942 = vpop.f32.mrf.mxu0
          %v3943 = vadd.f32 %v3818, %v3942
          %v3944 = vpop.f32.mrf.mxu0
          %v3945 = vpop.f32.mrf.mxu0
          %v3946 = vadd.f32 %v3818, %v3945
          %v3947 = vpop.f32.mrf.mxu0
          %3948 = vmatprep.mubr.bf16.mxu0 0
          %3949 = vmatmul.mubr.bf16.gmra.mxu0 %v3795
          %v3950 = vpop.f32.mrf.mxu0
          %v3951 = vadd.f32 %v3818, %v3950
          %v3952 = vpop.f32.mrf.mxu0
          %v3953 = vpop.f32.mrf.mxu0
          %v3954 = vadd.f32 %v3818, %v3953
          %v3955 = vpop.f32.mrf.mxu0
          %3956 = vmatprep.mubr.bf16.mxu0 0
          %3957 = vmatmul.mubr.bf16.gmra.mxu0 %v3796
          %v3958 = vpop.f32.mrf.mxu0
          %v3959 = vadd.f32 %v3818, %v3958
          %v3960 = vpop.f32.mrf.mxu0
          %v3961 = vpop.f32.mrf.mxu0
          %v3962 = vadd.f32 %v3818, %v3961
          %v3963 = vpop.f32.mrf.mxu0
          %3964 = vdwg.mxu0
          %3965 = vmax.xlane.f32.xlu0 %v3903
          %v3966 = vpop.xlane.xlu0 %3965
          %3967 = vmax.xlane.f32.xlu0 %v3906
          %v3968 = vpop.xlane.xlu0 %3967
          %3969 = vmax.xlane.f32.xlu0 %v3911
          %v3970 = vpop.xlane.xlu0 %3969
          %3971 = vmax.xlane.f32.xlu0 %v3914
          %v3972 = vpop.xlane.xlu0 %3971
          %3973 = vmax.xlane.f32.xlu0 %v3919
          %v3974 = vpop.xlane.xlu0 %3973
          %3975 = vmax.xlane.f32.xlu0 %v3922
          %v3976 = vpop.xlane.xlu0 %3975
          %3977 = vmax.xlane.f32.xlu0 %v3927
          %v3978 = vpop.xlane.xlu0 %3977
          %3979 = vmax.xlane.f32.xlu0 %v3930
          %v3980 = vpop.xlane.xlu0 %3979
          %3981 = vmax.xlane.f32.xlu0 %v3935
          %v3982 = vpop.xlane.xlu0 %3981
          %3983 = vmax.xlane.f32.xlu0 %v3938
          %v3984 = vpop.xlane.xlu0 %3983
          %3985 = vmax.xlane.f32.xlu0 %v3943
          %v3986 = vpop.xlane.xlu0 %3985
          %3987 = vmax.xlane.f32.xlu0 %v3946
          %v3988 = vpop.xlane.xlu0 %3987
          %3989 = vmax.xlane.f32.xlu0 %v3951
          %v3990 = vpop.xlane.xlu0 %3989
          %3991 = vmax.xlane.f32.xlu0 %v3954
          %v3992 = vpop.xlane.xlu0 %3991
          %3993 = vmax.xlane.f32.xlu0 %v3959
          %v3994 = vpop.xlane.xlu0 %3993
          %3995 = vmax.xlane.f32.xlu0 %v3962
          %v3996 = vpop.xlane.xlu0 %3995
          %v3997 = vsub.f32 %v3903, %v3966
          %v3998 = vsub.f32 %v3906, %v3968
          %v3999 = vsub.f32 %v3911, %v3970
          %v4000 = vsub.f32 %v3914, %v3972
          %v4001 = vsub.f32 %v3919, %v3974
          %v4002 = vsub.f32 %v3922, %v3976
          %v4003 = vsub.f32 %v3927, %v3978
          %v4004 = vsub.f32 %v3930, %v3980
          %v4005 = vsub.f32 %v3935, %v3982
          %v4006 = vsub.f32 %v3938, %v3984
          %v4007 = vsub.f32 %v3943, %v3986
          %v4008 = vsub.f32 %v3946, %v3988
          %v4009 = vsub.f32 %v3951, %v3990
          %v4010 = vsub.f32 %v3954, %v3992
          %v4011 = vsub.f32 %v3959, %v3994
          %v4012 = vsub.f32 %v3962, %v3996
          %v4013 = vmul.f32 %v3997, 1.442695
          %v4014 = vpow.pop %v4013
          %v4015 = vmul.f32 %v3998, 1.442695
          %v4016 = vpow.pop %v4015
          %v4017 = vmul.f32 %v3999, 1.442695
          %v4018 = vpow.pop %v4017
          %v4019 = vmul.f32 %v4000, 1.442695
          %v4020 = vpow.pop %v4019
          %v4021 = vmul.f32 %v4001, 1.442695
          %v4022 = vpow.pop %v4021
          %v4023 = vmul.f32 %v4002, 1.442695
          %v4024 = vpow.pop %v4023
          %v4025 = vmul.f32 %v4003, 1.442695
          %v4026 = vpow.pop %v4025
          %v4027 = vmul.f32 %v4004, 1.442695
          %v4028 = vpow.pop %v4027
          %v4029 = vmul.f32 %v4005, 1.442695
          %v4030 = vpow.pop %v4029
          %v4031 = vmul.f32 %v4006, 1.442695
          %v4032 = vpow.pop %v4031
          %v4033 = vmul.f32 %v4007, 1.442695
          %v4034 = vpow.pop %v4033
          %v4035 = vmul.f32 %v4008, 1.442695
          %v4036 = vpow.pop %v4035
          %v4037 = vmul.f32 %v4009, 1.442695
          %v4038 = vpow.pop %v4037
          %v4039 = vmul.f32 %v4010, 1.442695
          %v4040 = vpow.pop %v4039
          %v4041 = vmul.f32 %v4011, 1.442695
          %v4042 = vpow.pop %v4041
          %v4043 = vmul.f32 %v4012, 1.442695
          %v4044 = vpow.pop %v4043
          %4045 = vadd.xlane.f32.xlu0 %v4014
          %v4046 = vpop.xlane.xlu0 %4045
          %4047 = vadd.xlane.f32.xlu0 %v4016
          %v4048 = vpop.xlane.xlu0 %4047
          %4049 = vadd.xlane.f32.xlu0 %v4018
          %v4050 = vpop.xlane.xlu0 %4049
          %4051 = vadd.xlane.f32.xlu0 %v4020
          %v4052 = vpop.xlane.xlu0 %4051
          %4053 = vadd.xlane.f32.xlu0 %v4022
          %v4054 = vpop.xlane.xlu0 %4053
          %4055 = vadd.xlane.f32.xlu0 %v4024
          %v4056 = vpop.xlane.xlu0 %4055
          %4057 = vadd.xlane.f32.xlu0 %v4026
          %v4058 = vpop.xlane.xlu0 %4057
          %4059 = vadd.xlane.f32.xlu0 %v4028
          %v4060 = vpop.xlane.xlu0 %4059
          %4061 = vadd.xlane.f32.xlu0 %v4030
          %v4062 = vpop.xlane.xlu0 %4061
          %4063 = vadd.xlane.f32.xlu0 %v4032
          %v4064 = vpop.xlane.xlu0 %4063
          %4065 = vadd.xlane.f32.xlu0 %v4034
          %v4066 = vpop.xlane.xlu0 %4065
          %4067 = vadd.xlane.f32.xlu0 %v4036
          %v4068 = vpop.xlane.xlu0 %4067
          %4069 = vadd.xlane.f32.xlu0 %v4038
          %v4070 = vpop.xlane.xlu0 %4069
          %4071 = vadd.xlane.f32.xlu0 %v4040
          %v4072 = vpop.xlane.xlu0 %4071
          %4073 = vadd.xlane.f32.xlu0 %v4042
          %v4074 = vpop.xlane.xlu0 %4073
          %4075 = vadd.xlane.f32.xlu0 %v4044
          %v4076 = vpop.xlane.xlu0 %4075
          %v4077 = vlog2.pop %v4046
          %v4078 = vmul.f32 %v4077, 0.6931472
          %v4079 = vlog2.pop %v4048
          %v4080 = vmul.f32 %v4079, 0.6931472
          %v4081 = vlog2.pop %v4050
          %v4082 = vmul.f32 %v4081, 0.6931472
          %v4083 = vlog2.pop %v4052
          %v4084 = vmul.f32 %v4083, 0.6931472
          %v4085 = vlog2.pop %v4054
          %v4086 = vmul.f32 %v4085, 0.6931472
          %v4087 = vlog2.pop %v4056
          %v4088 = vmul.f32 %v4087, 0.6931472
          %v4089 = vlog2.pop %v4058
          %v4090 = vmul.f32 %v4089, 0.6931472
          %v4091 = vlog2.pop %v4060
          %v4092 = vmul.f32 %v4091, 0.6931472
          %v4093 = vlog2.pop %v4062
          %v4094 = vmul.f32 %v4093, 0.6931472
          %v4095 = vlog2.pop %v4064
          %v4096 = vmul.f32 %v4095, 0.6931472
          %v4097 = vlog2.pop %v4066
          %v4098 = vmul.f32 %v4097, 0.6931472
          %v4099 = vlog2.pop %v4068
          %v4100 = vmul.f32 %v4099, 0.6931472
          %v4101 = vlog2.pop %v4070
          %v4102 = vmul.f32 %v4101, 0.6931472
          %v4103 = vlog2.pop %v4072
          %v4104 = vmul.f32 %v4103, 0.6931472
          %v4105 = vlog2.pop %v4074
          %v4106 = vmul.f32 %v4105, 0.6931472
          %v4107 = vlog2.pop %v4076
          %v4108 = vmul.f32 %v4107, 0.6931472
          %v4109 = vadd.f32 %v3966, %v4078
          %v4110 = vadd.f32 %v3968, %v4080
          %v4111 = vadd.f32 %v3970, %v4082
          %v4112 = vadd.f32 %v3972, %v4084
          %v4113 = vadd.f32 %v3974, %v4086
          %v4114 = vadd.f32 %v3976, %v4088
          %v4115 = vadd.f32 %v3978, %v4090
          %v4116 = vadd.f32 %v3980, %v4092
          %v4117 = vadd.f32 %v3982, %v4094
          %v4118 = vadd.f32 %v3984, %v4096
          %v4119 = vadd.f32 %v3986, %v4098
          %v4120 = vadd.f32 %v3988, %v4100
          %v4121 = vadd.f32 %v3990, %v4102
          %v4122 = vadd.f32 %v3992, %v4104
          %v4123 = vadd.f32 %v3994, %v4106
          %v4124 = vadd.f32 %v3996, %v4108
          %v4125 = vsub.f32 %v3903, %v4109
          %v4126 = vsub.f32 %v3906, %v4110
          %v4127 = vsub.f32 %v3911, %v4111
          %v4128 = vsub.f32 %v3914, %v4112
          %v4129 = vsub.f32 %v3919, %v4113
          %v4130 = vsub.f32 %v3922, %v4114
          %v4131 = vsub.f32 %v3927, %v4115
          %v4132 = vsub.f32 %v3930, %v4116
          %v4133 = vsub.f32 %v3935, %v4117
          %v4134 = vsub.f32 %v3938, %v4118
          %v4135 = vsub.f32 %v3943, %v4119
          %v4136 = vsub.f32 %v3946, %v4120
          %v4137 = vsub.f32 %v3951, %v4121
          %v4138 = vsub.f32 %v3954, %v4122
          %v4139 = vsub.f32 %v3959, %v4123
          %v4140 = vsub.f32 %v3962, %v4124
          %4141 = vst [vmem:[#allocation29] sm:$0xff] %v4125
          %4142 = vst [vmem:[#allocation29 + $0x8] sm:$0xff] %v4126
          %4143 = vst [vmem:[#allocation29 + $0x10] sm:$0xff] %v4127
          %4144 = vst [vmem:[#allocation29 + $0x18] sm:$0xff] %v4128
          %4145 = vst [vmem:[#allocation29 + $0x20] sm:$0xff] %v4129
          %4146 = vst [vmem:[#allocation29 + $0x28] sm:$0xff] %v4130
          %4147 = vst [vmem:[#allocation29 + $0x30] sm:$0xff] %v4131
          %4148 = vst [vmem:[#allocation29 + $0x38] sm:$0xff] %v4132
          %4149 = vst [vmem:[#allocation29 + $0x40] sm:$0xff] %v4133
          %4150 = vst [vmem:[#allocation29 + $0x48] sm:$0xff] %v4134
          %4151 = vst [vmem:[#allocation29 + $0x50] sm:$0xff] %v4135
          %4152 = vst [vmem:[#allocation29 + $0x58] sm:$0xff] %v4136
          %4153 = vst [vmem:[#allocation29 + $0x60] sm:$0xff] %v4137
          %4154 = vst [vmem:[#allocation29 + $0x68] sm:$0xff] %v4138
          %4155 = vst [vmem:[#allocation29 + $0x70] sm:$0xff] %v4139
          %4156 = vst [vmem:[#allocation29 + $0x78] sm:$0xff] %v4140
        $region180: #{tpu_custom_call.1} parent=111 // pred_fallthru
          _
        // Predicated region
        $region181: #{tpu_custom_call.1} parent=111 // pred_check
          %p4157 = pneg %p605
        $region182: #{tpu_custom_call.1} parent=111 // pred_check_branch
          %4159 = sbr.rel (%p4157) target = $region184
        $region183: #{tpu_custom_call.1} parent=111 // pred_region
          %s4161 = ssub.s32 2048, 2048
          %4162 = vsyncadd [#allocation7], %s4161
          %s4163 = sshll.u32 [#allocation29], 4
          %s4164 = int_to_ptr.vmem [resolvable:$true] %s4163
          %4169 = dma.vmem_to_hbm [thread:$0]  %s4164, 2048, %s23, [#allocation7], 128, 128, 8
        $region184: #{tpu_custom_call.1} parent=111 // pred_fallthru
          _
        // Predicated region
        $region185: #{tpu_custom_call.1} parent=111 // pred_check
          %p4170 = pneg %p605
        $region186: #{tpu_custom_call.1} parent=111 // pred_check_branch
          %4172 = sbr.rel (%p4170) target = $region188
        $region187: #{tpu_custom_call.1} parent=111 // pred_region
          %4173 = dma.done [#allocation7], 2048
        $region188: #{tpu_custom_call.1} parent=111 // pred_fallthru
          _
      $region112: #{tpu_custom_call.1} parent=5 // pred_fallthru
        _
      %p4174 = scmp.le.s32.totalorder 2, %s44
      // Predicated region
      $region189: #{tpu_custom_call.1} parent=5 // pred_check
        %p4175 = pneg %p4174
      $region190: #{tpu_custom_call.1} parent=5 // pred_check_branch
        %4177 = sbr.rel (%p4175) target = $region192
      $region191: #{tpu_custom_call.1} parent=5 // pred_region
        %s4178 = ssub.s32 %s44, 2
      $region192: #{tpu_custom_call.1} parent=5 // pred_fallthru
        _
    $region6: #{tpu_custom_call.1} parent=1 // loop_footer
      %s48 = sadd.s32 1, %s44
    $region7: #{tpu_custom_call.1} parent=1 // loop_footer_branch
      %43 = sbr.rel target = $region3
    $region8: #{tpu_custom_call.1} parent=1 // loop_exit
      _
    %4179 = vsyncpa [#allocation6], 1
    %s4180 = scalar_lea.sflag [#allocation6], 1
    %4181 = vsyncpa %s4180, 1
    %4182 = vsyncpa [#allocation9], 1
    %4183 = vsyncpa [#allocation12], 1
    %4184 = vsyncpa [#allocation15], 1
    %4185 = vsyncpa [#allocation18], 1
    %4186 = vsyncpa [#allocation21], 1
    %s4187 = scalar_lea.sflag [#allocation21], 1
    %4188 = vsyncpa %s4187, 1
    %4189 = vsyncpa [#allocation24], 1
    %s4190 = scalar_lea.sflag [#allocation24], 1
    %4191 = vsyncpa %s4190, 1
    %4192 = vsyncpa [#allocation27], 1
    %s4193 = scalar_lea.sflag [#allocation27], 1
    %4194 = vsyncpa %s4193, 1
    %4195 = vsyncpa [#allocation7], 1
    %s4196 = scalar_lea.sflag [#allocation7], 1
    %4197 = vsyncpa %s4196, 1

</llo_original>
